<compile_context>
chip_gen: v7x
topology: tpu7x:2x2x1
jax: 0.10.0
libtpu: 0.0.40
codegen_flags: <defaults>
</compile_context>

<pallas_src>
import functools
import math

import jax
import jax.numpy as jnp
from jax.experimental import pallas as pl
from jax.experimental.pallas import tpu as pltpu

# --- module hyper-parameters (small, consistent with __init__) --------------
NSAMPLES = 4
NTNF = 136                       # fixed in the module
NLATENT = 32
NHIDDENS = [64, 64]              # small stand-in for default [512, 512]
NIN = NSAMPLES + NTNF + 1        # 141
LEAKY_SLOPE = 0.01               # nn.LeakyReLU default
BN_EPS = 1e-5                    # nn.BatchNorm1d default


def _ceil_to(n, m):
    return ((n + m - 1) // m) * m


# lane-dense padded feature widths (zero padding keeps the math exact)
HP0 = _ceil_to(NHIDDENS[0], 128)   # 128
HP1 = _ceil_to(NHIDDENS[1], 128)   # 128
LPAD = _ceil_to(NLATENT, 128)      # 128
OPAD = _ceil_to(NIN, 128)          # 256

PACKED_ORDER = (
    "ew0d", "ew0t", "ew0a", "eb0", "es0", "et0",
    "ew1", "eb1", "es1", "et1",
    "muw", "mub",
    "dw0", "db0", "ds0", "dt0",
    "dw1", "db1", "ds1", "dt1",
    "ow", "ob",
)


def _leaky_relu(v):
    return jnp.where(v > 0, v, LEAKY_SLOPE * v)


# ------------------------------ the kernel ----------------------------------
def vae_forward_kernel(
    d_ref, t_ref, a_ref, eps_ref,
    ew0d_ref, ew0t_ref, ew0a_ref, eb0_ref, es0_ref, et0_ref,
    ew1_ref, eb1_ref, es1_ref, et1_ref,
    muw_ref, mub_ref,
    dw0_ref, db0_ref, ds0_ref, dt0_ref,
    dw1_ref, db1_ref, ds1_ref, dt1_ref,
    ow_ref, ob_ref,
    rec_ref, mu_ref,
):
    f32 = jnp.float32
    bf16 = jnp.bfloat16

    # ---- encoder layer 0: concat folded into three partial products --------
    h = jnp.dot(d_ref[...].astype(bf16), ew0d_ref[...], preferred_element_type=f32)
    h = h + jnp.dot(t_ref[...].astype(bf16), ew0t_ref[...], preferred_element_type=f32)
    h = h + a_ref[...] * ew0a_ref[...]          # K=1 term: outer product on the VPU
    h = h + eb0_ref[...]
    h = _leaky_relu(h)                          # dropout = identity in eval mode
    h = h * es0_ref[...] + et0_ref[...]         # folded eval-mode BatchNorm1d

    # ---- encoder layer 1 ----------------------------------------------------
    h = jnp.dot(h.astype(bf16), ew1_ref[...], preferred_element_type=f32) + eb1_ref[...]
    h = _leaky_relu(h)
    h = h * es1_ref[...] + et1_ref[...]

    # ---- mu + reparameterize ------------------------------------------------
    mu = jnp.dot(h.astype(bf16), muw_ref[...], preferred_element_type=f32) + mub_ref[...]
    mu_ref[...] = mu                            # lane-dense (tb, 128), cols >=32 are 0
    latent = mu[:, :NLATENT] + eps_ref[...]     # epsilon ~ N(0,1) supplied by caller

    # ---- decoder -------------------------------------------------------------
    h = jnp.dot(latent.astype(bf16), dw0_ref[...], preferred_element_type=f32) + db0_ref[...]
    h = _leaky_relu(h)
    h = h * ds0_ref[...] + dt0_ref[...]

    h = jnp.dot(h.astype(bf16), dw1_ref[...], preferred_element_type=f32) + db1_ref[...]
    h = _leaky_relu(h)
    h = h * ds1_ref[...] + dt1_ref[...]

    # lane-dense (tb, 256) reconstruction; split + softmax happen in the wrapper
    rec_ref[...] = jnp.dot(h.astype(bf16), ow_ref[...], preferred_element_type=f32) + ob_ref[...]


# ------------------------------- wrapper -------------------------------------
def vae_forward(depths, tnf, abundance, eps, packed, *, batch_tile=None):
    """Fused VAE forward.  Returns (depths_out, tnf_out, abundance_out, mu)."""
    B = depths.shape[0]
    tb = min(B, 1024) if batch_tile is None else batch_tile
    assert B % tb == 0 and tb % 8 == 0, "batch tile must divide B and be a multiple of 8"

    weight_args = [packed[k] for k in PACKED_ORDER]

    def batch_spec(nfeat):
        return pl.BlockSpec((tb, nfeat), lambda i: (i, 0))

    def full_spec(w):
        return pl.BlockSpec(w.shape, lambda i: (0, 0))

    in_specs = [batch_spec(NSAMPLES), batch_spec(NTNF), batch_spec(1), batch_spec(NLATENT)]
    in_specs += [full_spec(w) for w in weight_args]
    out_specs = (batch_spec(OPAD), batch_spec(LPAD))
    out_shape = (
        jax.ShapeDtypeStruct((B, OPAD), jnp.float32),
        jax.ShapeDtypeStruct((B, LPAD), jnp.float32),
    )

    flops = 2 * B * (
        NSAMPLES * HP0 + NTNF * HP0 + HP0        # encoder layer 0
        + HP0 * HP1                              # encoder layer 1
        + HP1 * LPAD                             # mu
        + NLATENT * HP1                          # decoder layer 0
        + HP1 * HP0                              # decoder layer 1
        + HP0 * OPAD                             # output layer
    )
    bytes_in = B * 4 * (NSAMPLES + NTNF + 1 + NLATENT)
    bytes_out = B * 4 * (OPAD + LPAD)
    bytes_w = sum(int(w.size) * w.dtype.itemsize for w in weight_args)

    rec_pad, mu_pad = pl.pallas_call(
        vae_forward_kernel,
        grid=(B // tb,),
        in_specs=in_specs,
        out_specs=out_specs,
        out_shape=out_shape,
        compiler_params=pltpu.CompilerParams(dimension_semantics=("parallel",)),
        cost_estimate=pl.CostEstimate(
            flops=flops, transcendentals=0,
            bytes_accessed=bytes_in + bytes_out + bytes_w),
    )(
        depths.astype(jnp.float32), tnf.astype(jnp.float32),
        abundance.astype(jnp.float32), eps.astype(jnp.float32),
        *weight_args,
    )

    # Final slicing + the 4-wide softmax in the wrapper (layout-awkward in-kernel).
    rec = rec_pad[:, :NIN]
    mu = mu_pad[:, :NLATENT]
    depths_out = jax.nn.softmax(rec[:, :NSAMPLES], axis=1)
    tnf_out = rec[:, NSAMPLES:NSAMPLES + NTNF]
    ab_out = rec[:, NSAMPLES + NTNF:NIN]
    return depths_out, tnf_out, ab_out, mu


# --------------------- parameter packing (pad + bf16) ------------------------
def pack_params(p, use_bf16=True):
    """Zero-pads feature dims to lane-dense multiples of 128 and casts matmul
    weights to bf16.  Zero padding keeps the forward math exact."""
    wdt = jnp.bfloat16 if use_bf16 else jnp.float32

    def pad2(w, rows, cols, dtype=None):
        w = jnp.pad(w, ((0, rows - w.shape[0]), (0, cols - w.shape[1])))
        return w.astype(dtype) if dtype is not None else w.astype(jnp.float32)

    packed = {}
    ew0 = p["ew0"]                                         # (NIN, H0)
    packed["ew0d"] = pad2(ew0[:NSAMPLES], NSAMPLES, HP0, wdt)
    packed["ew0t"] = pad2(ew0[NSAMPLES:NSAMPLES + NTNF], NTNF, HP0, wdt)
    packed["ew0a"] = pad2(ew0[NSAMPLES + NTNF:], 1, HP0)   # f32: used on the VPU
    packed["eb0"] = pad2(p["eb0"], 1, HP0)
    packed["es0"] = pad2(p["es0"], 1, HP0)
    packed["et0"] = pad2(p["et0"], 1, HP0)

    packed["ew1"] = pad2(p["ew1"], HP0, HP1, wdt)
    packed["eb1"] = pad2(p["eb1"], 1, HP1)
    packed["es1"] = pad2(p["es1"], 1, HP1)
    packed["et1"] = pad2(p["et1"], 1, HP1)

    packed["muw"] = pad2(p["muw"], HP1, LPAD, wdt)
    packed["mub"] = pad2(p["mub"], 1, LPAD)

    packed["dw0"] = pad2(p["dw0"], NLATENT, HP1, wdt)      # K stays 32 (latent)
    packed["db0"] = pad2(p["db0"], 1, HP1)
    packed["ds0"] = pad2(p["ds0"], 1, HP1)
    packed["dt0"] = pad2(p["dt0"], 1, HP1)

    packed["dw1"] = pad2(p["dw1"], HP1, HP0, wdt)
    packed["db1"] = pad2(p["db1"], 1, HP0)
    packed["ds1"] = pad2(p["ds1"], 1, HP0)
    packed["dt1"] = pad2(p["dt1"], 1, HP0)

    packed["ow"] = pad2(p["ow"], HP0, OPAD, wdt)
    packed["ob"] = pad2(p["ob"], 1, OPAD)
    return packed


# --------------------- deterministic parameter init -------------------------
def init_params(key):
    def linear(k, nin, nout):
        # PyTorch nn.Linear default: U(-1/sqrt(nin), 1/sqrt(nin)).
        bound = 1.0 / math.sqrt(nin)
        kw, kb = jax.random.split(k)
        w = jax.random.uniform(kw, (nin, nout), jnp.float32, -bound, bound)
        b = jax.random.uniform(kb, (1, nout), jnp.float32, -bound, bound)
        return w, b

    def batchnorm(n):
        # PyTorch BatchNorm1d init: weight=1, bias=0, running_mean=0, running_var=1.
        gamma = jnp.ones((1, n), jnp.float32)
        beta = jnp.zeros((1, n), jnp.float32)
        rmean = jnp.zeros((1, n), jnp.float32)
        rvar = jnp.ones((1, n), jnp.float32)
        scale = gamma / jnp.sqrt(rvar + BN_EPS)
        shift = beta - rmean * scale
        return scale, shift

    ks = jax.random.split(key, 7)
    p = {}
    # encoder
    p["ew0"], p["eb0"] = linear(ks[0], NIN, NHIDDENS[0])
    p["es0"], p["et0"] = batchnorm(NHIDDENS[0])
    p["ew1"], p["eb1"] = linear(ks[1], NHIDDENS[0], NHIDDENS[1])
    p["es1"], p["et1"] = batchnorm(NHIDDENS[1])
    # latent
    p["muw"], p["mub"] = linear(ks[2], NHIDDENS[-1], NLATENT)
    # decoder (nhiddens reversed)
    p["dw0"], p["db0"] = linear(ks[3], NLATENT, NHIDDENS[1])
    p["ds0"], p["dt0"] = batchnorm(NHIDDENS[1])
    p["dw1"], p["db1"] = linear(ks[4], NHIDDENS[1], NHIDDENS[0])
    p["ds1"], p["dt1"] = batchnorm(NHIDDENS[0])
    # output layer
    p["ow"], p["ob"] = linear(ks[5], NHIDDENS[0], NIN)
    return p


# ----------------------------- pure-JAX reference ----------------------------
def vae_forward_ref(depths, tnf, abundance, eps, p):
    x = jnp.concatenate([depths, tnf, abundance], axis=1)
    h = _leaky_relu(x @ p["ew0"] + p["eb0"]) * p["es0"] + p["et0"]
    h = _leaky_relu(h @ p["ew1"] + p["eb1"]) * p["es1"] + p["et1"]
    mu = h @ p["muw"] + p["mub"]
    latent = mu + eps
    h = _leaky_relu(latent @ p["dw0"] + p["db0"]) * p["ds0"] + p["dt0"]
    h = _leaky_relu(h @ p["dw1"] + p["db1"]) * p["ds1"] + p["dt1"]
    rec = h @ p["ow"] + p["ob"]
    depths_out = jax.nn.softmax(rec[:, :NSAMPLES], axis=1)
    return depths_out, rec[:, NSAMPLES:NSAMPLES + NTNF], rec[:, NSAMPLES + NTNF:NIN], mu


if __name__ == "__main__":
    key = jax.random.PRNGKey(0)
    kp, kd, kt, ka, ke = jax.random.split(key, 5)

    params = init_params(kp)
    packed = pack_params(params)            # pad + bf16-cast once, outside the hot path

    B, TB = 256, 128                        # 2 "parallel" grid steps -> both v7x TCs busy
    depths = jax.nn.softmax(jax.random.normal(kd, (B, NSAMPLES), jnp.float32), axis=1)
    tnf = jax.random.normal(kt, (B, NTNF), jnp.float32)
    abundance = jax.random.normal(ka, (B, 1), jnp.float32)
    # epsilon of reparameterize() (torch.randn equivalent), drawn deterministically.
    eps = jax.random.normal(ke, (B, NLATENT), jnp.float32)

    fwd = jax.jit(functools.partial(vae_forward, batch_tile=TB))
    depths_out, tnf_out, ab_out, mu = jax.block_until_ready(
        fwd(depths, tnf, abundance, eps, packed)
    )

    assert depths_out.shape == (B, NSAMPLES)
    assert tnf_out.shape == (B, NTNF)
    assert ab_out.shape == (B, 1)
    assert mu.shape == (B, NLATENT)
    # softmax rows must sum to 1 (softmax done in f32 in the wrapper)
    assert bool(jnp.all(jnp.abs(jnp.sum(depths_out, axis=1) - 1.0) < 1e-5))

    # loose tolerance check vs. a pure-JAX f32 reference (bf16 matmul operands)
    ref = vae_forward_ref(depths, tnf, abundance, eps, params)
    for got, want in zip((depths_out, tnf_out, ab_out, mu), ref):
        assert got.shape == want.shape
        err = float(jnp.max(jnp.abs(got - want)))
        tol = 0.1 * (float(jnp.max(jnp.abs(want))) + 1.0)
        assert err <= tol, f"mismatch: max err {err} > tol {tol}"

    print("KERNEL_OK")
</pallas_src>

<mosaic_0001>
module attributes {stable_mosaic.version = 11 : i64} {
  func.func @vae_forward_kernel(%arg0: i32, %arg1: memref<128x4xf32, #tpu.memory_space<vmem>>, %arg2: memref<128x136xf32, #tpu.memory_space<vmem>>, %arg3: memref<128x1xf32, #tpu.memory_space<vmem>>, %arg4: memref<128x32xf32, #tpu.memory_space<vmem>>, %arg5: memref<4x128xbf16, #tpu.memory_space<vmem>>, %arg6: memref<136x128xbf16, #tpu.memory_space<vmem>>, %arg7: memref<1x128xf32, #tpu.memory_space<vmem>>, %arg8: memref<1x128xf32, #tpu.memory_space<vmem>>, %arg9: memref<1x128xf32, #tpu.memory_space<vmem>>, %arg10: memref<1x128xf32, #tpu.memory_space<vmem>>, %arg11: memref<128x128xbf16, #tpu.memory_space<vmem>>, %arg12: memref<1x128xf32, #tpu.memory_space<vmem>>, %arg13: memref<1x128xf32, #tpu.memory_space<vmem>>, %arg14: memref<1x128xf32, #tpu.memory_space<vmem>>, %arg15: memref<128x128xbf16, #tpu.memory_space<vmem>>, %arg16: memref<1x128xf32, #tpu.memory_space<vmem>>, %arg17: memref<32x128xbf16, #tpu.memory_space<vmem>>, %arg18: memref<1x128xf32, #tpu.memory_space<vmem>>, %arg19: memref<1x128xf32, #tpu.memory_space<vmem>>, %arg20: memref<1x128xf32, #tpu.memory_space<vmem>>, %arg21: memref<128x128xbf16, #tpu.memory_space<vmem>>, %arg22: memref<1x128xf32, #tpu.memory_space<vmem>>, %arg23: memref<1x128xf32, #tpu.memory_space<vmem>>, %arg24: memref<1x128xf32, #tpu.memory_space<vmem>>, %arg25: memref<128x256xbf16, #tpu.memory_space<vmem>>, %arg26: memref<1x256xf32, #tpu.memory_space<vmem>>, %arg27: memref<128x256xf32, #tpu.memory_space<vmem>>, %arg28: memref<128x128xf32, #tpu.memory_space<vmem>>) attributes {dimension_semantics = [#tpu.dimension_semantics<parallel>], iteration_bounds = array<i64: 2>, scalar_prefetch = 0 : i64, scratch_operands = 0 : i64, tpu.core_type = #tpu.core_type<tc>, window_params = [{transform_indices = @transform_0, window_bounds = array<i64: 128, 4>}, {transform_indices = @transform_1, window_bounds = array<i64: 128, 136>}, {transform_indices = @transform_2, window_bounds = array<i64: 128, 1>}, {transform_indices = @transform_3, window_bounds = array<i64: 128, 32>}, {pipeline_mode = #tpu.pipeline_mode<synchronous>, transform_indices = @transform_4, window_bounds = array<i64: 4, 128>}, {pipeline_mode = #tpu.pipeline_mode<synchronous>, transform_indices = @transform_5, window_bounds = array<i64: 136, 128>}, {pipeline_mode = #tpu.pipeline_mode<synchronous>, transform_indices = @transform_6, window_bounds = array<i64: 1, 128>}, {pipeline_mode = #tpu.pipeline_mode<synchronous>, transform_indices = @transform_7, window_bounds = array<i64: 1, 128>}, {pipeline_mode = #tpu.pipeline_mode<synchronous>, transform_indices = @transform_8, window_bounds = array<i64: 1, 128>}, {pipeline_mode = #tpu.pipeline_mode<synchronous>, transform_indices = @transform_9, window_bounds = array<i64: 1, 128>}, {pipeline_mode = #tpu.pipeline_mode<synchronous>, transform_indices = @transform_10, window_bounds = array<i64: 128, 128>}, {pipeline_mode = #tpu.pipeline_mode<synchronous>, transform_indices = @transform_11, window_bounds = array<i64: 1, 128>}, {pipeline_mode = #tpu.pipeline_mode<synchronous>, transform_indices = @transform_12, window_bounds = array<i64: 1, 128>}, {pipeline_mode = #tpu.pipeline_mode<synchronous>, transform_indices = @transform_13, window_bounds = array<i64: 1, 128>}, {pipeline_mode = #tpu.pipeline_mode<synchronous>, transform_indices = @transform_14, window_bounds = array<i64: 128, 128>}, {pipeline_mode = #tpu.pipeline_mode<synchronous>, transform_indices = @transform_15, window_bounds = array<i64: 1, 128>}, {pipeline_mode = #tpu.pipeline_mode<synchronous>, transform_indices = @transform_16, window_bounds = array<i64: 32, 128>}, {pipeline_mode = #tpu.pipeline_mode<synchronous>, transform_indices = @transform_17, window_bounds = array<i64: 1, 128>}, {pipeline_mode = #tpu.pipeline_mode<synchronous>, transform_indices = @transform_18, window_bounds = array<i64: 1, 128>}, {pipeline_mode = #tpu.pipeline_mode<synchronous>, transform_indices = @transform_19, window_bounds = array<i64: 1, 128>}, {pipeline_mode = #tpu.pipeline_mode<synchronous>, transform_indices = @transform_20, window_bounds = array<i64: 128, 128>}, {pipeline_mode = #tpu.pipeline_mode<synchronous>, transform_indices = @transform_21, window_bounds = array<i64: 1, 128>}, {pipeline_mode = #tpu.pipeline_mode<synchronous>, transform_indices = @transform_22, window_bounds = array<i64: 1, 128>}, {pipeline_mode = #tpu.pipeline_mode<synchronous>, transform_indices = @transform_23, window_bounds = array<i64: 1, 128>}, {pipeline_mode = #tpu.pipeline_mode<synchronous>, transform_indices = @transform_24, window_bounds = array<i64: 128, 256>}, {pipeline_mode = #tpu.pipeline_mode<synchronous>, transform_indices = @transform_25, window_bounds = array<i64: 1, 256>}, {transform_indices = @transform_26, window_bounds = array<i64: 128, 256>}, {transform_indices = @transform_27, window_bounds = array<i64: 128, 128>}]} {
    %c0 = arith.constant 0 : index
    %c0_0 = arith.constant 0 : index
    %0 = vector.load %arg1[%c0, %c0_0] : memref<128x4xf32, #tpu.memory_space<vmem>>, vector<128x4xf32>
    %1 = arith.truncf %0 : vector<128x4xf32> to vector<128x4xbf16>
    %c0_1 = arith.constant 0 : index
    %c0_2 = arith.constant 0 : index
    %2 = vector.load %arg5[%c0_1, %c0_2] : memref<4x128xbf16, #tpu.memory_space<vmem>>, vector<4x128xbf16>
    %cst = arith.constant dense<0.000000e+00> : vector<128x128xf32>
    %3 = tpu.matmul %1, %2, %cst {dimension_numbers = #tpu.dot_dimension_numbers<[1], [0], [0], [1], [0, 0, 1, 1], [], []>} : vector<128x4xbf16>, vector<4x128xbf16>, vector<128x128xf32> -> vector<128x128xf32>
    %c0_3 = arith.constant 0 : index
    %c0_4 = arith.constant 0 : index
    %4 = vector.load %arg2[%c0_3, %c0_4] : memref<128x136xf32, #tpu.memory_space<vmem>>, vector<128x136xf32>
    %5 = arith.truncf %4 : vector<128x136xf32> to vector<128x136xbf16>
    %c0_5 = arith.constant 0 : index
    %c0_6 = arith.constant 0 : index
    %6 = vector.load %arg6[%c0_5, %c0_6] : memref<136x128xbf16, #tpu.memory_space<vmem>>, vector<136x128xbf16>
    %cst_7 = arith.constant dense<0.000000e+00> : vector<128x128xf32>
    %7 = tpu.matmul %5, %6, %cst_7 {dimension_numbers = #tpu.dot_dimension_numbers<[1], [0], [0], [1], [0, 0, 1, 1], [], []>} : vector<128x136xbf16>, vector<136x128xbf16>, vector<128x128xf32> -> vector<128x128xf32>
    %8 = arith.addf %3, %7 : vector<128x128xf32>
    %c0_8 = arith.constant 0 : index
    %c0_9 = arith.constant 0 : index
    %9 = vector.load %arg3[%c0_8, %c0_9] : memref<128x1xf32, #tpu.memory_space<vmem>>, vector<128x1xf32>
    %c0_10 = arith.constant 0 : index
    %c0_11 = arith.constant 0 : index
    %10 = vector.load %arg7[%c0_10, %c0_11] : memref<1x128xf32, #tpu.memory_space<vmem>>, vector<1x128xf32>
    %11 = vector.broadcast %9 : vector<128x1xf32> to vector<128x128xf32>
    %12 = vector.broadcast %10 : vector<1x128xf32> to vector<128x128xf32>
    %13 = arith.mulf %11, %12 : vector<128x128xf32>
    %14 = arith.addf %8, %13 : vector<128x128xf32>
    %c0_12 = arith.constant 0 : index
    %c0_13 = arith.constant 0 : index
    %15 = vector.load %arg8[%c0_12, %c0_13] : memref<1x128xf32, #tpu.memory_space<vmem>>, vector<1x128xf32>
    %16 = vector.broadcast %15 : vector<1x128xf32> to vector<128x128xf32>
    %17 = arith.addf %14, %16 : vector<128x128xf32>
    %cst_14 = arith.constant 0.000000e+00 : f32
    %18 = vector.broadcast %cst_14 : f32 to vector<128x128xf32>
    %19 = arith.cmpf ogt, %17, %18 : vector<128x128xf32>
    %cst_15 = arith.constant 0.00999999977 : f32
    %20 = vector.broadcast %cst_15 : f32 to vector<128x128xf32>
    %21 = arith.mulf %20, %17 : vector<128x128xf32>
    %22 = arith.select %19, %17, %21 : vector<128x128xi1>, vector<128x128xf32>
    %c0_16 = arith.constant 0 : index
    %c0_17 = arith.constant 0 : index
    %23 = vector.load %arg9[%c0_16, %c0_17] : memref<1x128xf32, #tpu.memory_space<vmem>>, vector<1x128xf32>
    %24 = vector.broadcast %23 : vector<1x128xf32> to vector<128x128xf32>
    %25 = arith.mulf %22, %24 : vector<128x128xf32>
    %c0_18 = arith.constant 0 : index
    %c0_19 = arith.constant 0 : index
    %26 = vector.load %arg10[%c0_18, %c0_19] : memref<1x128xf32, #tpu.memory_space<vmem>>, vector<1x128xf32>
    %27 = vector.broadcast %26 : vector<1x128xf32> to vector<128x128xf32>
    %28 = arith.addf %25, %27 : vector<128x128xf32>
    %29 = arith.truncf %28 : vector<128x128xf32> to vector<128x128xbf16>
    %c0_20 = arith.constant 0 : index
    %c0_21 = arith.constant 0 : index
    %30 = vector.load %arg11[%c0_20, %c0_21] : memref<128x128xbf16, #tpu.memory_space<vmem>>, vector<128x128xbf16>
    %cst_22 = arith.constant dense<0.000000e+00> : vector<128x128xf32>
    %31 = tpu.matmul %29, %30, %cst_22 {dimension_numbers = #tpu.dot_dimension_numbers<[1], [0], [0], [1], [0, 0, 1, 1], [], []>} : vector<128x128xbf16>, vector<128x128xbf16>, vector<128x128xf32> -> vector<128x128xf32>
    %c0_23 = arith.constant 0 : index
    %c0_24 = arith.constant 0 : index
    %32 = vector.load %arg12[%c0_23, %c0_24] : memref<1x128xf32, #tpu.memory_space<vmem>>, vector<1x128xf32>
    %33 = vector.broadcast %32 : vector<1x128xf32> to vector<128x128xf32>
    %34 = arith.addf %31, %33 : vector<128x128xf32>
    %cst_25 = arith.constant 0.000000e+00 : f32
    %35 = vector.broadcast %cst_25 : f32 to vector<128x128xf32>
    %36 = arith.cmpf ogt, %34, %35 : vector<128x128xf32>
    %cst_26 = arith.constant 0.00999999977 : f32
    %37 = vector.broadcast %cst_26 : f32 to vector<128x128xf32>
    %38 = arith.mulf %37, %34 : vector<128x128xf32>
    %39 = arith.select %36, %34, %38 : vector<128x128xi1>, vector<128x128xf32>
    %c0_27 = arith.constant 0 : index
    %c0_28 = arith.constant 0 : index
    %40 = vector.load %arg13[%c0_27, %c0_28] : memref<1x128xf32, #tpu.memory_space<vmem>>, vector<1x128xf32>
    %41 = vector.broadcast %40 : vector<1x128xf32> to vector<128x128xf32>
    %42 = arith.mulf %39, %41 : vector<128x128xf32>
    %c0_29 = arith.constant 0 : index
    %c0_30 = arith.constant 0 : index
    %43 = vector.load %arg14[%c0_29, %c0_30] : memref<1x128xf32, #tpu.memory_space<vmem>>, vector<1x128xf32>
    %44 = vector.broadcast %43 : vector<1x128xf32> to vector<128x128xf32>
    %45 = arith.addf %42, %44 : vector<128x128xf32>
    %46 = arith.truncf %45 : vector<128x128xf32> to vector<128x128xbf16>
    %c0_31 = arith.constant 0 : index
    %c0_32 = arith.constant 0 : index
    %47 = vector.load %arg15[%c0_31, %c0_32] : memref<128x128xbf16, #tpu.memory_space<vmem>>, vector<128x128xbf16>
    %cst_33 = arith.constant dense<0.000000e+00> : vector<128x128xf32>
    %48 = tpu.matmul %46, %47, %cst_33 {dimension_numbers = #tpu.dot_dimension_numbers<[1], [0], [0], [1], [0, 0, 1, 1], [], []>} : vector<128x128xbf16>, vector<128x128xbf16>, vector<128x128xf32> -> vector<128x128xf32>
    %c0_34 = arith.constant 0 : index
    %c0_35 = arith.constant 0 : index
    %49 = vector.load %arg16[%c0_34, %c0_35] : memref<1x128xf32, #tpu.memory_space<vmem>>, vector<1x128xf32>
    %50 = vector.broadcast %49 : vector<1x128xf32> to vector<128x128xf32>
    %51 = arith.addf %48, %50 : vector<128x128xf32>
    %c0_36 = arith.constant 0 : index
    %c0_37 = arith.constant 0 : index
    %52 = vector.load %arg28[%c0_36, %c0_37] : memref<128x128xf32, #tpu.memory_space<vmem>>, vector<128x128xf32>
    tpu.vector_store %arg28[%c0_36, %c0_37], %51 {strides = array<i32>} : memref<128x128xf32, #tpu.memory_space<vmem>>, vector<128x128xf32>,
    %53 = vector.extract_strided_slice %51 {offsets = [0, 0], sizes = [128, 32], strides = [1, 1]} : vector<128x128xf32> to vector<128x32xf32>
    %c0_38 = arith.constant 0 : index
    %c0_39 = arith.constant 0 : index
    %54 = vector.load %arg4[%c0_38, %c0_39] : memref<128x32xf32, #tpu.memory_space<vmem>>, vector<128x32xf32>
    %55 = arith.addf %53, %54 : vector<128x32xf32>
    %56 = arith.truncf %55 : vector<128x32xf32> to vector<128x32xbf16>
    %c0_40 = arith.constant 0 : index
    %c0_41 = arith.constant 0 : index
    %57 = vector.load %arg17[%c0_40, %c0_41] : memref<32x128xbf16, #tpu.memory_space<vmem>>, vector<32x128xbf16>
    %cst_42 = arith.constant dense<0.000000e+00> : vector<128x128xf32>
    %58 = tpu.matmul %56, %57, %cst_42 {dimension_numbers = #tpu.dot_dimension_numbers<[1], [0], [0], [1], [0, 0, 1, 1], [], []>} : vector<128x32xbf16>, vector<32x128xbf16>, vector<128x128xf32> -> vector<128x128xf32>
    %c0_43 = arith.constant 0 : index
    %c0_44 = arith.constant 0 : index
    %59 = vector.load %arg18[%c0_43, %c0_44] : memref<1x128xf32, #tpu.memory_space<vmem>>, vector<1x128xf32>
    %60 = vector.broadcast %59 : vector<1x128xf32> to vector<128x128xf32>
    %61 = arith.addf %58, %60 : vector<128x128xf32>
    %cst_45 = arith.constant 0.000000e+00 : f32
    %62 = vector.broadcast %cst_45 : f32 to vector<128x128xf32>
    %63 = arith.cmpf ogt, %61, %62 : vector<128x128xf32>
    %cst_46 = arith.constant 0.00999999977 : f32
    %64 = vector.broadcast %cst_46 : f32 to vector<128x128xf32>
    %65 = arith.mulf %64, %61 : vector<128x128xf32>
    %66 = arith.select %63, %61, %65 : vector<128x128xi1>, vector<128x128xf32>
    %c0_47 = arith.constant 0 : index
    %c0_48 = arith.constant 0 : index
    %67 = vector.load %arg19[%c0_47, %c0_48] : memref<1x128xf32, #tpu.memory_space<vmem>>, vector<1x128xf32>
    %68 = vector.broadcast %67 : vector<1x128xf32> to vector<128x128xf32>
    %69 = arith.mulf %66, %68 : vector<128x128xf32>
    %c0_49 = arith.constant 0 : index
    %c0_50 = arith.constant 0 : index
    %70 = vector.load %arg20[%c0_49, %c0_50] : memref<1x128xf32, #tpu.memory_space<vmem>>, vector<1x128xf32>
    %71 = vector.broadcast %70 : vector<1x128xf32> to vector<128x128xf32>
    %72 = arith.addf %69, %71 : vector<128x128xf32>
    %73 = arith.truncf %72 : vector<128x128xf32> to vector<128x128xbf16>
    %c0_51 = arith.constant 0 : index
    %c0_52 = arith.constant 0 : index
    %74 = vector.load %arg21[%c0_51, %c0_52] : memref<128x128xbf16, #tpu.memory_space<vmem>>, vector<128x128xbf16>
    %cst_53 = arith.constant dense<0.000000e+00> : vector<128x128xf32>
    %75 = tpu.matmul %73, %74, %cst_53 {dimension_numbers = #tpu.dot_dimension_numbers<[1], [0], [0], [1], [0, 0, 1, 1], [], []>} : vector<128x128xbf16>, vector<128x128xbf16>, vector<128x128xf32> -> vector<128x128xf32>
    %c0_54 = arith.constant 0 : index
    %c0_55 = arith.constant 0 : index
    %76 = vector.load %arg22[%c0_54, %c0_55] : memref<1x128xf32, #tpu.memory_space<vmem>>, vector<1x128xf32>
    %77 = vector.broadcast %76 : vector<1x128xf32> to vector<128x128xf32>
    %78 = arith.addf %75, %77 : vector<128x128xf32>
    %cst_56 = arith.constant 0.000000e+00 : f32
    %79 = vector.broadcast %cst_56 : f32 to vector<128x128xf32>
    %80 = arith.cmpf ogt, %78, %79 : vector<128x128xf32>
    %cst_57 = arith.constant 0.00999999977 : f32
    %81 = vector.broadcast %cst_57 : f32 to vector<128x128xf32>
    %82 = arith.mulf %81, %78 : vector<128x128xf32>
    %83 = arith.select %80, %78, %82 : vector<128x128xi1>, vector<128x128xf32>
    %c0_58 = arith.constant 0 : index
    %c0_59 = arith.constant 0 : index
    %84 = vector.load %arg23[%c0_58, %c0_59] : memref<1x128xf32, #tpu.memory_space<vmem>>, vector<1x128xf32>
    %85 = vector.broadcast %84 : vector<1x128xf32> to vector<128x128xf32>
    %86 = arith.mulf %83, %85 : vector<128x128xf32>
    %c0_60 = arith.constant 0 : index
    %c0_61 = arith.constant 0 : index
    %87 = vector.load %arg24[%c0_60, %c0_61] : memref<1x128xf32, #tpu.memory_space<vmem>>, vector<1x128xf32>
    %88 = vector.broadcast %87 : vector<1x128xf32> to vector<128x128xf32>
    %89 = arith.addf %86, %88 : vector<128x128xf32>
    %90 = arith.truncf %89 : vector<128x128xf32> to vector<128x128xbf16>
    %c0_62 = arith.constant 0 : index
    %c0_63 = arith.constant 0 : index
    %91 = vector.load %arg25[%c0_62, %c0_63] : memref<128x256xbf16, #tpu.memory_space<vmem>>, vector<128x256xbf16>
    %cst_64 = arith.constant dense<0.000000e+00> : vector<128x256xf32>
    %92 = tpu.matmul %90, %91, %cst_64 {dimension_numbers = #tpu.dot_dimension_numbers<[1], [0], [0], [1], [0, 0, 1, 1], [], []>} : vector<128x128xbf16>, vector<128x256xbf16>, vector<128x256xf32> -> vector<128x256xf32>
    %c0_65 = arith.constant 0 : index
    %c0_66 = arith.constant 0 : index
    %93 = vector.load %arg26[%c0_65, %c0_66] : memref<1x256xf32, #tpu.memory_space<vmem>>, vector<1x256xf32>
    %94 = vector.broadcast %93 : vector<1x256xf32> to vector<128x256xf32>
    %95 = arith.addf %92, %94 : vector<128x256xf32>
    %c0_67 = arith.constant 0 : index
    %c0_68 = arith.constant 0 : index
    %96 = vector.load %arg27[%c0_67, %c0_68] : memref<128x256xf32, #tpu.memory_space<vmem>>, vector<128x256xf32>
    tpu.vector_store %arg27[%c0_67, %c0_68], %95 {strides = array<i32>} : memref<128x256xf32, #tpu.memory_space<vmem>>, vector<128x256xf32>,
    return
  }
  func.func @transform_0(%arg0: i32) -> (i32, i32) {
    %c0_i32 = arith.constant 0 : i32
    %c0_i32_0 = arith.constant 0 : i32
    return %arg0, %c0_i32 : i32, i32
  }
  func.func @transform_1(%arg0: i32) -> (i32, i32) {
    %c0_i32 = arith.constant 0 : i32
    %c0_i32_0 = arith.constant 0 : i32
    return %arg0, %c0_i32 : i32, i32
  }
  func.func @transform_2(%arg0: i32) -> (i32, i32) {
    %c0_i32 = arith.constant 0 : i32
    %c0_i32_0 = arith.constant 0 : i32
    return %arg0, %c0_i32 : i32, i32
  }
  func.func @transform_3(%arg0: i32) -> (i32, i32) {
    %c0_i32 = arith.constant 0 : i32
    %c0_i32_0 = arith.constant 0 : i32
    return %arg0, %c0_i32 : i32, i32
  }
  func.func @transform_4(%arg0: i32) -> (i32, i32) {
    %c0_i32 = arith.constant 0 : i32
    %c0_i32_0 = arith.constant 0 : i32
    %c0_i32_1 = arith.constant 0 : i32
    return %c0_i32, %c0_i32_0 : i32, i32
  }
  func.func @transform_5(%arg0: i32) -> (i32, i32) {
    %c0_i32 = arith.constant 0 : i32
    %c0_i32_0 = arith.constant 0 : i32
    %c0_i32_1 = arith.constant 0 : i32
    return %c0_i32, %c0_i32_0 : i32, i32
  }
  func.func @transform_6(%arg0: i32) -> (i32, i32) {
    %c0_i32 = arith.constant 0 : i32
    %c0_i32_0 = arith.constant 0 : i32
    %c0_i32_1 = arith.constant 0 : i32
    return %c0_i32, %c0_i32_0 : i32, i32
  }
  func.func @transform_7(%arg0: i32) -> (i32, i32) {
    %c0_i32 = arith.constant 0 : i32
    %c0_i32_0 = arith.constant 0 : i32
    %c0_i32_1 = arith.constant 0 : i32
    return %c0_i32, %c0_i32_0 : i32, i32
  }
  func.func @transform_8(%arg0: i32) -> (i32, i32) {
    %c0_i32 = arith.constant 0 : i32
    %c0_i32_0 = arith.constant 0 : i32
    %c0_i32_1 = arith.constant 0 : i32
    return %c0_i32, %c0_i32_0 : i32, i32
  }
  func.func @transform_9(%arg0: i32) -> (i32, i32) {
    %c0_i32 = arith.constant 0 : i32
    %c0_i32_0 = arith.constant 0 : i32
    %c0_i32_1 = arith.constant 0 : i32
    return %c0_i32, %c0_i32_0 : i32, i32
  }
  func.func @transform_10(%arg0: i32) -> (i32, i32) {
    %c0_i32 = arith.constant 0 : i32
    %c0_i32_0 = arith.constant 0 : i32
    %c0_i32_1 = arith.constant 0 : i32
    return %c0_i32, %c0_i32_0 : i32, i32
  }
  func.func @transform_11(%arg0: i32) -> (i32, i32) {
    %c0_i32 = arith.constant 0 : i32
    %c0_i32_0 = arith.constant 0 : i32
    %c0_i32_1 = arith.constant 0 : i32
    return %c0_i32, %c0_i32_0 : i32, i32
  }
  func.func @transform_12(%arg0: i32) -> (i32, i32) {
    %c0_i32 = arith.constant 0 : i32
    %c0_i32_0 = arith.constant 0 : i32
    %c0_i32_1 = arith.constant 0 : i32
    return %c0_i32, %c0_i32_0 : i32, i32
  }
  func.func @transform_13(%arg0: i32) -> (i32, i32) {
    %c0_i32 = arith.constant 0 : i32
    %c0_i32_0 = arith.constant 0 : i32
    %c0_i32_1 = arith.constant 0 : i32
    return %c0_i32, %c0_i32_0 : i32, i32
  }
  func.func @transform_14(%arg0: i32) -> (i32, i32) {
    %c0_i32 = arith.constant 0 : i32
    %c0_i32_0 = arith.constant 0 : i32
    %c0_i32_1 = arith.constant 0 : i32
    return %c0_i32, %c0_i32_0 : i32, i32
  }
  func.func @transform_15(%arg0: i32) -> (i32, i32) {
    %c0_i32 = arith.constant 0 : i32
    %c0_i32_0 = arith.constant 0 : i32
    %c0_i32_1 = arith.constant 0 : i32
    return %c0_i32, %c0_i32_0 : i32, i32
  }
  func.func @transform_16(%arg0: i32) -> (i32, i32) {
    %c0_i32 = arith.constant 0 : i32
    %c0_i32_0 = arith.constant 0 : i32
    %c0_i32_1 = arith.constant 0 : i32
    return %c0_i32, %c0_i32_0 : i32, i32
  }
  func.func @transform_17(%arg0: i32) -> (i32, i32) {
    %c0_i32 = arith.constant 0 : i32
    %c0_i32_0 = arith.constant 0 : i32
    %c0_i32_1 = arith.constant 0 : i32
    return %c0_i32, %c0_i32_0 : i32, i32
  }
  func.func @transform_18(%arg0: i32) -> (i32, i32) {
    %c0_i32 = arith.constant 0 : i32
    %c0_i32_0 = arith.constant 0 : i32
    %c0_i32_1 = arith.constant 0 : i32
    return %c0_i32, %c0_i32_0 : i32, i32
  }
  func.func @transform_19(%arg0: i32) -> (i32, i32) {
    %c0_i32 = arith.constant 0 : i32
    %c0_i32_0 = arith.constant 0 : i32
    %c0_i32_1 = arith.constant 0 : i32
    return %c0_i32, %c0_i32_0 : i32, i32
  }
  func.func @transform_20(%arg0: i32) -> (i32, i32) {
    %c0_i32 = arith.constant 0 : i32
    %c0_i32_0 = arith.constant 0 : i32
    %c0_i32_1 = arith.constant 0 : i32
    return %c0_i32, %c0_i32_0 : i32, i32
  }
  func.func @transform_21(%arg0: i32) -> (i32, i32) {
    %c0_i32 = arith.constant 0 : i32
    %c0_i32_0 = arith.constant 0 : i32
    %c0_i32_1 = arith.constant 0 : i32
    return %c0_i32, %c0_i32_0 : i32, i32
  }
  func.func @transform_22(%arg0: i32) -> (i32, i32) {
    %c0_i32 = arith.constant 0 : i32
    %c0_i32_0 = arith.constant 0 : i32
    %c0_i32_1 = arith.constant 0 : i32
    return %c0_i32, %c0_i32_0 : i32, i32
  }
  func.func @transform_23(%arg0: i32) -> (i32, i32) {
    %c0_i32 = arith.constant 0 : i32
    %c0_i32_0 = arith.constant 0 : i32
    %c0_i32_1 = arith.constant 0 : i32
    return %c0_i32, %c0_i32_0 : i32, i32
  }
  func.func @transform_24(%arg0: i32) -> (i32, i32) {
    %c0_i32 = arith.constant 0 : i32
    %c0_i32_0 = arith.constant 0 : i32
    %c0_i32_1 = arith.constant 0 : i32
    return %c0_i32, %c0_i32_0 : i32, i32
  }
  func.func @transform_25(%arg0: i32) -> (i32, i32) {
    %c0_i32 = arith.constant 0 : i32
    %c0_i32_0 = arith.constant 0 : i32
    %c0_i32_1 = arith.constant 0 : i32
    return %c0_i32, %c0_i32_0 : i32, i32
  }
  func.func @transform_26(%arg0: i32) -> (i32, i32) {
    %c0_i32 = arith.constant 0 : i32
    %c0_i32_0 = arith.constant 0 : i32
    return %arg0, %c0_i32 : i32, i32
  }
  func.func @transform_27(%arg0: i32) -> (i32, i32) {
    %c0_i32 = arith.constant 0 : i32
    %c0_i32_0 = arith.constant 0 : i32
    return %arg0, %c0_i32 : i32, i32
  }
}

</mosaic_0001>

<llo_original>
// kernel: vae_forward.1
$region0: #{vae_forward.1}
  #allocation0 [shape = 'u32[]', space=smem, size = 0x4, offset = 0x4, fixed_abs, tag = 'smem constant byte address 0x4 - core index']
  #allocation1 [shape = 'u32[144,128]{1,0:T(1,128)}', space=vmem, size = 0x12000, scoped, tag = 'internal scratch']
  %s0 = inlined_call_operand.vmem [shape: f32[256,4], index: 0, kind: input, shape index: {}]
  %s1 = inlined_call_operand.vmem [shape: f32[256,136], index: 1, kind: input, shape index: {}]
  %s2 = inlined_call_operand.vmem [shape: f32[256,1], index: 2, kind: input, shape index: {}]
  %s3 = inlined_call_operand.vmem [shape: f32[256,32], index: 3, kind: input, shape index: {}]
  %s4 = inlined_call_operand.vmem [shape: bf16[4,128], index: 4, kind: input, shape index: {}]
  %s5 = inlined_call_operand.vmem [shape: bf16[136,128], index: 5, kind: input, shape index: {}]
  %s6 = inlined_call_operand.vmem [shape: f32[1,128], index: 6, kind: input, shape index: {}]
  %s7 = inlined_call_operand.vmem [shape: f32[1,128], index: 7, kind: input, shape index: {}]
  %s8 = inlined_call_operand.vmem [shape: f32[1,128], index: 8, kind: input, shape index: {}]
  %s9 = inlined_call_operand.vmem [shape: f32[1,128], index: 9, kind: input, shape index: {}]
  %s10 = inlined_call_operand.vmem [shape: bf16[128,128], index: 10, kind: input, shape index: {}]
  %s11 = inlined_call_operand.vmem [shape: f32[1,128], index: 11, kind: input, shape index: {}]
  %s12 = inlined_call_operand.vmem [shape: f32[1,128], index: 12, kind: input, shape index: {}]
  %s13 = inlined_call_operand.vmem [shape: f32[1,128], index: 13, kind: input, shape index: {}]
  %s14 = inlined_call_operand.vmem [shape: bf16[128,128], index: 14, kind: input, shape index: {}]
  %s15 = inlined_call_operand.vmem [shape: f32[1,128], index: 15, kind: input, shape index: {}]
  %s16 = inlined_call_operand.vmem [shape: bf16[32,128], index: 16, kind: input, shape index: {}]
  %s17 = inlined_call_operand.vmem [shape: f32[1,128], index: 17, kind: input, shape index: {}]
  %s18 = inlined_call_operand.vmem [shape: f32[1,128], index: 18, kind: input, shape index: {}]
  %s19 = inlined_call_operand.vmem [shape: f32[1,128], index: 19, kind: input, shape index: {}]
  %s20 = inlined_call_operand.vmem [shape: bf16[128,128], index: 20, kind: input, shape index: {}]
  %s21 = inlined_call_operand.vmem [shape: f32[1,128], index: 21, kind: input, shape index: {}]
  %s22 = inlined_call_operand.vmem [shape: f32[1,128], index: 22, kind: input, shape index: {}]
  %s23 = inlined_call_operand.vmem [shape: f32[1,128], index: 23, kind: input, shape index: {}]
  %s24 = inlined_call_operand.vmem [shape: bf16[128,256], index: 24, kind: input, shape index: {}]
  %s25 = inlined_call_operand.vmem [shape: f32[1,256], index: 25, kind: input, shape index: {}]
  %s26 = inlined_call_operand.vmem [shape: f32[256,256], index: 26, kind: output, shape index: {0}]
  %s27 = inlined_call_operand.vmem [shape: f32[256,128], index: 27, kind: output, shape index: {1}]
  %28 = xla_tuple %s26, %s27
  %s29 = sld [smem:[#allocation0]]
  $region145: #{vae_forward.1} parent=0
    _
  %s31 = ssub.s32 1, %s29
  %s32 = scalar_select 0, %s31, %s29
  loop: start=0, step=1, limit=4
  $region2: #{vae_forward.1} parent=0 // loop_pre_header
    _
  $region3: #{vae_forward.1} parent=0 // loop_header
    %s34 = sphi 0, %s38
    %p35 = scmp.ge.s32.totalorder %s34, 4
    %s44 = sphi 0, %s46
    %s47 = sphi 0, %s44
    %s48 = sphi 0, %s47
    %s64 = sphi 0, %s48
    %s70 = sphi 0, %s72
    %s73 = sphi 0, %s70
    %s74 = sphi 0, %s73
    %s90 = sphi 0, %s74
    %s96 = sphi 0, %s98
    %s99 = sphi 0, %s96
    %s100 = sphi 0, %s99
    %s116 = sphi 0, %s100
    %s122 = sphi 0, %s124
    %s125 = sphi 0, %s122
    %s126 = sphi 0, %s125
    %s142 = sphi 0, %s126
    %s146 = sphi 0, %s146
    %s148 = sphi 0, %s146
    %s149 = sphi 0, %s148
    %s163 = sphi 0, %s149
    %s167 = sphi 0, %s167
    %s169 = sphi 0, %s167
    %s170 = sphi 0, %s169
    %s184 = sphi 0, %s170
    %s188 = sphi 0, %s188
    %s190 = sphi 0, %s188
    %s191 = sphi 0, %s190
    %s205 = sphi 0, %s191
    %s209 = sphi 0, %s209
    %s211 = sphi 0, %s209
    %s212 = sphi 0, %s211
    %s226 = sphi 0, %s212
    %s230 = sphi 0, %s230
    %s232 = sphi 0, %s230
    %s233 = sphi 0, %s232
    %s247 = sphi 0, %s233
    %s251 = sphi 0, %s251
    %s253 = sphi 0, %s251
    %s254 = sphi 0, %s253
    %s268 = sphi 0, %s254
    %s272 = sphi 0, %s272
    %s274 = sphi 0, %s272
    %s275 = sphi 0, %s274
    %s289 = sphi 0, %s275
    %s293 = sphi 0, %s293
    %s295 = sphi 0, %s293
    %s296 = sphi 0, %s295
    %s310 = sphi 0, %s296
    %s314 = sphi 0, %s314
    %s316 = sphi 0, %s314
    %s317 = sphi 0, %s316
    %s331 = sphi 0, %s317
    %s335 = sphi 0, %s335
    %s337 = sphi 0, %s335
    %s338 = sphi 0, %s337
    %s352 = sphi 0, %s338
    %s356 = sphi 0, %s356
    %s358 = sphi 0, %s356
    %s359 = sphi 0, %s358
    %s373 = sphi 0, %s359
    %s377 = sphi 0, %s377
    %s379 = sphi 0, %s377
    %s380 = sphi 0, %s379
    %s394 = sphi 0, %s380
    %s398 = sphi 0, %s398
    %s400 = sphi 0, %s398
    %s401 = sphi 0, %s400
    %s415 = sphi 0, %s401
    %s419 = sphi 0, %s419
    %s421 = sphi 0, %s419
    %s422 = sphi 0, %s421
    %s436 = sphi 0, %s422
    %s440 = sphi 0, %s440
    %s442 = sphi 0, %s440
    %s443 = sphi 0, %s442
    %s457 = sphi 0, %s443
    %s461 = sphi 0, %s461
    %s463 = sphi 0, %s461
    %s464 = sphi 0, %s463
    %s478 = sphi 0, %s464
    %s482 = sphi 0, %s482
    %s484 = sphi 0, %s482
    %s485 = sphi 0, %s484
    %s499 = sphi 0, %s485
    %s503 = sphi 0, %s503
    %s505 = sphi 0, %s503
    %s506 = sphi 0, %s505
    %s520 = sphi 0, %s506
    %s524 = sphi 0, %s524
    %s526 = sphi 0, %s524
    %s527 = sphi 0, %s526
    %s541 = sphi 0, %s527
    %s545 = sphi 0, %s545
    %s547 = sphi 0, %s545
    %s548 = sphi 0, %s547
    %s562 = sphi 0, %s548
    %s566 = sphi 0, %s566
    %s568 = sphi 0, %s566
    %s569 = sphi 0, %s568
    %s583 = sphi 0, %s569
    %s587 = sphi 0, %s587
    %s589 = sphi 0, %s587
    %s590 = sphi 0, %s589
    %s604 = sphi 0, %s590
    %s610 = sphi 0, %s612
    %s613 = sphi 0, %s610
    %s614 = sphi 0, %s613
    %s630 = sphi 0, %s614
    %s636 = sphi 0, %s638
    %s639 = sphi 0, %s636
    %s640 = sphi 0, %s639
    %s656 = sphi 0, %s640
  $region4: #{vae_forward.1} parent=0 // loop_header_branch
    %37 = sbr.rel (%p35) target = $region8
  $region5: #{vae_forward.1} parent=0 // loop_body
    %s39 = ssub.s32 %s34, 1
    %s40 = ssub.s32 %s34, 2
    %s41 = sadd.s32 %s34, 1
    %s42 = ssub.s32 %s34, %s41
    %p43 = scmp.eq.s32.totalorder %s42, 0
    %s45 = sadd.s32 %s44, 1
    %s46 = scalar_select %p43, %s44, %s45
    %p49 = pneg %p43
    %p50 = scmp.eq.s32.totalorder %s34, 1
    %p51 = por %p49, %p50
    %p52 = scmp.ne.s32.totalorder %s44, %s47
    %p53 = scmp.eq.s32.totalorder %s34, 0
    %p54 = por %p52, %p53
    %p55 = scmp.ne.s32.totalorder %s44, %s47
    %p56 = scmp.eq.s32.totalorder %s39, 1
    %p57 = por %p55, %p56
    %p58 = scmp.ne.s32.totalorder %s47, %s48
    %p59 = scmp.eq.s32.totalorder %s39, 0
    %p60 = por %p58, %p59
    %p61 = scmp.ne.s32.totalorder %s47, %s48
    %p62 = scmp.eq.s32.totalorder %s40, 1
    %p63 = por %p61, %p62
    %p65 = scmp.ne.s32.totalorder %s48, %s64
    %p66 = scmp.eq.s32.totalorder %s40, 0
    %p67 = por %p65, %p66
    %s68 = ssub.s32 %s34, %s41
    %p69 = scmp.eq.s32.totalorder %s68, 0
    %s71 = sadd.s32 %s70, 1
    %s72 = scalar_select %p69, %s70, %s71
    %p75 = pneg %p69
    %p76 = scmp.eq.s32.totalorder %s34, 1
    %p77 = por %p75, %p76
    %p78 = scmp.ne.s32.totalorder %s70, %s73
    %p79 = scmp.eq.s32.totalorder %s34, 0
    %p80 = por %p78, %p79
    %p81 = scmp.ne.s32.totalorder %s70, %s73
    %p82 = scmp.eq.s32.totalorder %s39, 1
    %p83 = por %p81, %p82
    %p84 = scmp.ne.s32.totalorder %s73, %s74
    %p85 = scmp.eq.s32.totalorder %s39, 0
    %p86 = por %p84, %p85
    %p87 = scmp.ne.s32.totalorder %s73, %s74
    %p88 = scmp.eq.s32.totalorder %s40, 1
    %p89 = por %p87, %p88
    %p91 = scmp.ne.s32.totalorder %s74, %s90
    %p92 = scmp.eq.s32.totalorder %s40, 0
    %p93 = por %p91, %p92
    %s94 = ssub.s32 %s34, %s41
    %p95 = scmp.eq.s32.totalorder %s94, 0
    %s97 = sadd.s32 %s96, 1
    %s98 = scalar_select %p95, %s96, %s97
    %p101 = pneg %p95
    %p102 = scmp.eq.s32.totalorder %s34, 1
    %p103 = por %p101, %p102
    %p104 = scmp.ne.s32.totalorder %s96, %s99
    %p105 = scmp.eq.s32.totalorder %s34, 0
    %p106 = por %p104, %p105
    %p107 = scmp.ne.s32.totalorder %s96, %s99
    %p108 = scmp.eq.s32.totalorder %s39, 1
    %p109 = por %p107, %p108
    %p110 = scmp.ne.s32.totalorder %s99, %s100
    %p111 = scmp.eq.s32.totalorder %s39, 0
    %p112 = por %p110, %p111
    %p113 = scmp.ne.s32.totalorder %s99, %s100
    %p114 = scmp.eq.s32.totalorder %s40, 1
    %p115 = por %p113, %p114
    %p117 = scmp.ne.s32.totalorder %s100, %s116
    %p118 = scmp.eq.s32.totalorder %s40, 0
    %p119 = por %p117, %p118
    %s120 = ssub.s32 %s34, %s41
    %p121 = scmp.eq.s32.totalorder %s120, 0
    %s123 = sadd.s32 %s122, 1
    %s124 = scalar_select %p121, %s122, %s123
    %p127 = pneg %p121
    %p128 = scmp.eq.s32.totalorder %s34, 1
    %p129 = por %p127, %p128
    %p130 = scmp.ne.s32.totalorder %s122, %s125
    %p131 = scmp.eq.s32.totalorder %s34, 0
    %p132 = por %p130, %p131
    %p133 = scmp.ne.s32.totalorder %s122, %s125
    %p134 = scmp.eq.s32.totalorder %s39, 1
    %p135 = por %p133, %p134
    %p136 = scmp.ne.s32.totalorder %s125, %s126
    %p137 = scmp.eq.s32.totalorder %s39, 0
    %p138 = por %p136, %p137
    %p139 = scmp.ne.s32.totalorder %s125, %s126
    %p140 = scmp.eq.s32.totalorder %s40, 1
    %p141 = por %p139, %p140
    %p143 = scmp.ne.s32.totalorder %s126, %s142
    %p144 = scmp.eq.s32.totalorder %s40, 0
    %p145 = por %p143, %p144
    %s147 = sadd.s32 %s146, 1
    %p150 = scmp.eq.s32.totalorder %s34, 1
    %p151 = scmp.ne.s32.totalorder %s146, %s148
    %p152 = scmp.eq.s32.totalorder %s34, 0
    %p153 = por %p151, %p152
    %p154 = scmp.ne.s32.totalorder %s146, %s148
    %p155 = scmp.eq.s32.totalorder %s39, 1
    %p156 = por %p154, %p155
    %p157 = scmp.ne.s32.totalorder %s148, %s149
    %p158 = scmp.eq.s32.totalorder %s39, 0
    %p159 = por %p157, %p158
    %p160 = scmp.ne.s32.totalorder %s148, %s149
    %p161 = scmp.eq.s32.totalorder %s40, 1
    %p162 = por %p160, %p161
    %p164 = scmp.ne.s32.totalorder %s149, %s163
    %p165 = scmp.eq.s32.totalorder %s40, 0
    %p166 = por %p164, %p165
    %s168 = sadd.s32 %s167, 1
    %p171 = scmp.eq.s32.totalorder %s34, 1
    %p172 = scmp.ne.s32.totalorder %s167, %s169
    %p173 = scmp.eq.s32.totalorder %s34, 0
    %p174 = por %p172, %p173
    %p175 = scmp.ne.s32.totalorder %s167, %s169
    %p176 = scmp.eq.s32.totalorder %s39, 1
    %p177 = por %p175, %p176
    %p178 = scmp.ne.s32.totalorder %s169, %s170
    %p179 = scmp.eq.s32.totalorder %s39, 0
    %p180 = por %p178, %p179
    %p181 = scmp.ne.s32.totalorder %s169, %s170
    %p182 = scmp.eq.s32.totalorder %s40, 1
    %p183 = por %p181, %p182
    %p185 = scmp.ne.s32.totalorder %s170, %s184
    %p186 = scmp.eq.s32.totalorder %s40, 0
    %p187 = por %p185, %p186
    %s189 = sadd.s32 %s188, 1
    %p192 = scmp.eq.s32.totalorder %s34, 1
    %p193 = scmp.ne.s32.totalorder %s188, %s190
    %p194 = scmp.eq.s32.totalorder %s34, 0
    %p195 = por %p193, %p194
    %p196 = scmp.ne.s32.totalorder %s188, %s190
    %p197 = scmp.eq.s32.totalorder %s39, 1
    %p198 = por %p196, %p197
    %p199 = scmp.ne.s32.totalorder %s190, %s191
    %p200 = scmp.eq.s32.totalorder %s39, 0
    %p201 = por %p199, %p200
    %p202 = scmp.ne.s32.totalorder %s190, %s191
    %p203 = scmp.eq.s32.totalorder %s40, 1
    %p204 = por %p202, %p203
    %p206 = scmp.ne.s32.totalorder %s191, %s205
    %p207 = scmp.eq.s32.totalorder %s40, 0
    %p208 = por %p206, %p207
    %s210 = sadd.s32 %s209, 1
    %p213 = scmp.eq.s32.totalorder %s34, 1
    %p214 = scmp.ne.s32.totalorder %s209, %s211
    %p215 = scmp.eq.s32.totalorder %s34, 0
    %p216 = por %p214, %p215
    %p217 = scmp.ne.s32.totalorder %s209, %s211
    %p218 = scmp.eq.s32.totalorder %s39, 1
    %p219 = por %p217, %p218
    %p220 = scmp.ne.s32.totalorder %s211, %s212
    %p221 = scmp.eq.s32.totalorder %s39, 0
    %p222 = por %p220, %p221
    %p223 = scmp.ne.s32.totalorder %s211, %s212
    %p224 = scmp.eq.s32.totalorder %s40, 1
    %p225 = por %p223, %p224
    %p227 = scmp.ne.s32.totalorder %s212, %s226
    %p228 = scmp.eq.s32.totalorder %s40, 0
    %p229 = por %p227, %p228
    %s231 = sadd.s32 %s230, 1
    %p234 = scmp.eq.s32.totalorder %s34, 1
    %p235 = scmp.ne.s32.totalorder %s230, %s232
    %p236 = scmp.eq.s32.totalorder %s34, 0
    %p237 = por %p235, %p236
    %p238 = scmp.ne.s32.totalorder %s230, %s232
    %p239 = scmp.eq.s32.totalorder %s39, 1
    %p240 = por %p238, %p239
    %p241 = scmp.ne.s32.totalorder %s232, %s233
    %p242 = scmp.eq.s32.totalorder %s39, 0
    %p243 = por %p241, %p242
    %p244 = scmp.ne.s32.totalorder %s232, %s233
    %p245 = scmp.eq.s32.totalorder %s40, 1
    %p246 = por %p244, %p245
    %p248 = scmp.ne.s32.totalorder %s233, %s247
    %p249 = scmp.eq.s32.totalorder %s40, 0
    %p250 = por %p248, %p249
    %s252 = sadd.s32 %s251, 1
    %p255 = scmp.eq.s32.totalorder %s34, 1
    %p256 = scmp.ne.s32.totalorder %s251, %s253
    %p257 = scmp.eq.s32.totalorder %s34, 0
    %p258 = por %p256, %p257
    %p259 = scmp.ne.s32.totalorder %s251, %s253
    %p260 = scmp.eq.s32.totalorder %s39, 1
    %p261 = por %p259, %p260
    %p262 = scmp.ne.s32.totalorder %s253, %s254
    %p263 = scmp.eq.s32.totalorder %s39, 0
    %p264 = por %p262, %p263
    %p265 = scmp.ne.s32.totalorder %s253, %s254
    %p266 = scmp.eq.s32.totalorder %s40, 1
    %p267 = por %p265, %p266
    %p269 = scmp.ne.s32.totalorder %s254, %s268
    %p270 = scmp.eq.s32.totalorder %s40, 0
    %p271 = por %p269, %p270
    %s273 = sadd.s32 %s272, 1
    %p276 = scmp.eq.s32.totalorder %s34, 1
    %p277 = scmp.ne.s32.totalorder %s272, %s274
    %p278 = scmp.eq.s32.totalorder %s34, 0
    %p279 = por %p277, %p278
    %p280 = scmp.ne.s32.totalorder %s272, %s274
    %p281 = scmp.eq.s32.totalorder %s39, 1
    %p282 = por %p280, %p281
    %p283 = scmp.ne.s32.totalorder %s274, %s275
    %p284 = scmp.eq.s32.totalorder %s39, 0
    %p285 = por %p283, %p284
    %p286 = scmp.ne.s32.totalorder %s274, %s275
    %p287 = scmp.eq.s32.totalorder %s40, 1
    %p288 = por %p286, %p287
    %p290 = scmp.ne.s32.totalorder %s275, %s289
    %p291 = scmp.eq.s32.totalorder %s40, 0
    %p292 = por %p290, %p291
    %s294 = sadd.s32 %s293, 1
    %p297 = scmp.eq.s32.totalorder %s34, 1
    %p298 = scmp.ne.s32.totalorder %s293, %s295
    %p299 = scmp.eq.s32.totalorder %s34, 0
    %p300 = por %p298, %p299
    %p301 = scmp.ne.s32.totalorder %s293, %s295
    %p302 = scmp.eq.s32.totalorder %s39, 1
    %p303 = por %p301, %p302
    %p304 = scmp.ne.s32.totalorder %s295, %s296
    %p305 = scmp.eq.s32.totalorder %s39, 0
    %p306 = por %p304, %p305
    %p307 = scmp.ne.s32.totalorder %s295, %s296
    %p308 = scmp.eq.s32.totalorder %s40, 1
    %p309 = por %p307, %p308
    %p311 = scmp.ne.s32.totalorder %s296, %s310
    %p312 = scmp.eq.s32.totalorder %s40, 0
    %p313 = por %p311, %p312
    %s315 = sadd.s32 %s314, 1
    %p318 = scmp.eq.s32.totalorder %s34, 1
    %p319 = scmp.ne.s32.totalorder %s314, %s316
    %p320 = scmp.eq.s32.totalorder %s34, 0
    %p321 = por %p319, %p320
    %p322 = scmp.ne.s32.totalorder %s314, %s316
    %p323 = scmp.eq.s32.totalorder %s39, 1
    %p324 = por %p322, %p323
    %p325 = scmp.ne.s32.totalorder %s316, %s317
    %p326 = scmp.eq.s32.totalorder %s39, 0
    %p327 = por %p325, %p326
    %p328 = scmp.ne.s32.totalorder %s316, %s317
    %p329 = scmp.eq.s32.totalorder %s40, 1
    %p330 = por %p328, %p329
    %p332 = scmp.ne.s32.totalorder %s317, %s331
    %p333 = scmp.eq.s32.totalorder %s40, 0
    %p334 = por %p332, %p333
    %s336 = sadd.s32 %s335, 1
    %p339 = scmp.eq.s32.totalorder %s34, 1
    %p340 = scmp.ne.s32.totalorder %s335, %s337
    %p341 = scmp.eq.s32.totalorder %s34, 0
    %p342 = por %p340, %p341
    %p343 = scmp.ne.s32.totalorder %s335, %s337
    %p344 = scmp.eq.s32.totalorder %s39, 1
    %p345 = por %p343, %p344
    %p346 = scmp.ne.s32.totalorder %s337, %s338
    %p347 = scmp.eq.s32.totalorder %s39, 0
    %p348 = por %p346, %p347
    %p349 = scmp.ne.s32.totalorder %s337, %s338
    %p350 = scmp.eq.s32.totalorder %s40, 1
    %p351 = por %p349, %p350
    %p353 = scmp.ne.s32.totalorder %s338, %s352
    %p354 = scmp.eq.s32.totalorder %s40, 0
    %p355 = por %p353, %p354
    %s357 = sadd.s32 %s356, 1
    %p360 = scmp.eq.s32.totalorder %s34, 1
    %p361 = scmp.ne.s32.totalorder %s356, %s358
    %p362 = scmp.eq.s32.totalorder %s34, 0
    %p363 = por %p361, %p362
    %p364 = scmp.ne.s32.totalorder %s356, %s358
    %p365 = scmp.eq.s32.totalorder %s39, 1
    %p366 = por %p364, %p365
    %p367 = scmp.ne.s32.totalorder %s358, %s359
    %p368 = scmp.eq.s32.totalorder %s39, 0
    %p369 = por %p367, %p368
    %p370 = scmp.ne.s32.totalorder %s358, %s359
    %p371 = scmp.eq.s32.totalorder %s40, 1
    %p372 = por %p370, %p371
    %p374 = scmp.ne.s32.totalorder %s359, %s373
    %p375 = scmp.eq.s32.totalorder %s40, 0
    %p376 = por %p374, %p375
    %s378 = sadd.s32 %s377, 1
    %p381 = scmp.eq.s32.totalorder %s34, 1
    %p382 = scmp.ne.s32.totalorder %s377, %s379
    %p383 = scmp.eq.s32.totalorder %s34, 0
    %p384 = por %p382, %p383
    %p385 = scmp.ne.s32.totalorder %s377, %s379
    %p386 = scmp.eq.s32.totalorder %s39, 1
    %p387 = por %p385, %p386
    %p388 = scmp.ne.s32.totalorder %s379, %s380
    %p389 = scmp.eq.s32.totalorder %s39, 0
    %p390 = por %p388, %p389
    %p391 = scmp.ne.s32.totalorder %s379, %s380
    %p392 = scmp.eq.s32.totalorder %s40, 1
    %p393 = por %p391, %p392
    %p395 = scmp.ne.s32.totalorder %s380, %s394
    %p396 = scmp.eq.s32.totalorder %s40, 0
    %p397 = por %p395, %p396
    %s399 = sadd.s32 %s398, 1
    %p402 = scmp.eq.s32.totalorder %s34, 1
    %p403 = scmp.ne.s32.totalorder %s398, %s400
    %p404 = scmp.eq.s32.totalorder %s34, 0
    %p405 = por %p403, %p404
    %p406 = scmp.ne.s32.totalorder %s398, %s400
    %p407 = scmp.eq.s32.totalorder %s39, 1
    %p408 = por %p406, %p407
    %p409 = scmp.ne.s32.totalorder %s400, %s401
    %p410 = scmp.eq.s32.totalorder %s39, 0
    %p411 = por %p409, %p410
    %p412 = scmp.ne.s32.totalorder %s400, %s401
    %p413 = scmp.eq.s32.totalorder %s40, 1
    %p414 = por %p412, %p413
    %p416 = scmp.ne.s32.totalorder %s401, %s415
    %p417 = scmp.eq.s32.totalorder %s40, 0
    %p418 = por %p416, %p417
    %s420 = sadd.s32 %s419, 1
    %p423 = scmp.eq.s32.totalorder %s34, 1
    %p424 = scmp.ne.s32.totalorder %s419, %s421
    %p425 = scmp.eq.s32.totalorder %s34, 0
    %p426 = por %p424, %p425
    %p427 = scmp.ne.s32.totalorder %s419, %s421
    %p428 = scmp.eq.s32.totalorder %s39, 1
    %p429 = por %p427, %p428
    %p430 = scmp.ne.s32.totalorder %s421, %s422
    %p431 = scmp.eq.s32.totalorder %s39, 0
    %p432 = por %p430, %p431
    %p433 = scmp.ne.s32.totalorder %s421, %s422
    %p434 = scmp.eq.s32.totalorder %s40, 1
    %p435 = por %p433, %p434
    %p437 = scmp.ne.s32.totalorder %s422, %s436
    %p438 = scmp.eq.s32.totalorder %s40, 0
    %p439 = por %p437, %p438
    %s441 = sadd.s32 %s440, 1
    %p444 = scmp.eq.s32.totalorder %s34, 1
    %p445 = scmp.ne.s32.totalorder %s440, %s442
    %p446 = scmp.eq.s32.totalorder %s34, 0
    %p447 = por %p445, %p446
    %p448 = scmp.ne.s32.totalorder %s440, %s442
    %p449 = scmp.eq.s32.totalorder %s39, 1
    %p450 = por %p448, %p449
    %p451 = scmp.ne.s32.totalorder %s442, %s443
    %p452 = scmp.eq.s32.totalorder %s39, 0
    %p453 = por %p451, %p452
    %p454 = scmp.ne.s32.totalorder %s442, %s443
    %p455 = scmp.eq.s32.totalorder %s40, 1
    %p456 = por %p454, %p455
    %p458 = scmp.ne.s32.totalorder %s443, %s457
    %p459 = scmp.eq.s32.totalorder %s40, 0
    %p460 = por %p458, %p459
    %s462 = sadd.s32 %s461, 1
    %p465 = scmp.eq.s32.totalorder %s34, 1
    %p466 = scmp.ne.s32.totalorder %s461, %s463
    %p467 = scmp.eq.s32.totalorder %s34, 0
    %p468 = por %p466, %p467
    %p469 = scmp.ne.s32.totalorder %s461, %s463
    %p470 = scmp.eq.s32.totalorder %s39, 1
    %p471 = por %p469, %p470
    %p472 = scmp.ne.s32.totalorder %s463, %s464
    %p473 = scmp.eq.s32.totalorder %s39, 0
    %p474 = por %p472, %p473
    %p475 = scmp.ne.s32.totalorder %s463, %s464
    %p476 = scmp.eq.s32.totalorder %s40, 1
    %p477 = por %p475, %p476
    %p479 = scmp.ne.s32.totalorder %s464, %s478
    %p480 = scmp.eq.s32.totalorder %s40, 0
    %p481 = por %p479, %p480
    %s483 = sadd.s32 %s482, 1
    %p486 = scmp.eq.s32.totalorder %s34, 1
    %p487 = scmp.ne.s32.totalorder %s482, %s484
    %p488 = scmp.eq.s32.totalorder %s34, 0
    %p489 = por %p487, %p488
    %p490 = scmp.ne.s32.totalorder %s482, %s484
    %p491 = scmp.eq.s32.totalorder %s39, 1
    %p492 = por %p490, %p491
    %p493 = scmp.ne.s32.totalorder %s484, %s485
    %p494 = scmp.eq.s32.totalorder %s39, 0
    %p495 = por %p493, %p494
    %p496 = scmp.ne.s32.totalorder %s484, %s485
    %p497 = scmp.eq.s32.totalorder %s40, 1
    %p498 = por %p496, %p497
    %p500 = scmp.ne.s32.totalorder %s485, %s499
    %p501 = scmp.eq.s32.totalorder %s40, 0
    %p502 = por %p500, %p501
    %s504 = sadd.s32 %s503, 1
    %p507 = scmp.eq.s32.totalorder %s34, 1
    %p508 = scmp.ne.s32.totalorder %s503, %s505
    %p509 = scmp.eq.s32.totalorder %s34, 0
    %p510 = por %p508, %p509
    %p511 = scmp.ne.s32.totalorder %s503, %s505
    %p512 = scmp.eq.s32.totalorder %s39, 1
    %p513 = por %p511, %p512
    %p514 = scmp.ne.s32.totalorder %s505, %s506
    %p515 = scmp.eq.s32.totalorder %s39, 0
    %p516 = por %p514, %p515
    %p517 = scmp.ne.s32.totalorder %s505, %s506
    %p518 = scmp.eq.s32.totalorder %s40, 1
    %p519 = por %p517, %p518
    %p521 = scmp.ne.s32.totalorder %s506, %s520
    %p522 = scmp.eq.s32.totalorder %s40, 0
    %p523 = por %p521, %p522
    %s525 = sadd.s32 %s524, 1
    %p528 = scmp.eq.s32.totalorder %s34, 1
    %p529 = scmp.ne.s32.totalorder %s524, %s526
    %p530 = scmp.eq.s32.totalorder %s34, 0
    %p531 = por %p529, %p530
    %p532 = scmp.ne.s32.totalorder %s524, %s526
    %p533 = scmp.eq.s32.totalorder %s39, 1
    %p534 = por %p532, %p533
    %p535 = scmp.ne.s32.totalorder %s526, %s527
    %p536 = scmp.eq.s32.totalorder %s39, 0
    %p537 = por %p535, %p536
    %p538 = scmp.ne.s32.totalorder %s526, %s527
    %p539 = scmp.eq.s32.totalorder %s40, 1
    %p540 = por %p538, %p539
    %p542 = scmp.ne.s32.totalorder %s527, %s541
    %p543 = scmp.eq.s32.totalorder %s40, 0
    %p544 = por %p542, %p543
    %s546 = sadd.s32 %s545, 1
    %p549 = scmp.eq.s32.totalorder %s34, 1
    %p550 = scmp.ne.s32.totalorder %s545, %s547
    %p551 = scmp.eq.s32.totalorder %s34, 0
    %p552 = por %p550, %p551
    %p553 = scmp.ne.s32.totalorder %s545, %s547
    %p554 = scmp.eq.s32.totalorder %s39, 1
    %p555 = por %p553, %p554
    %p556 = scmp.ne.s32.totalorder %s547, %s548
    %p557 = scmp.eq.s32.totalorder %s39, 0
    %p558 = por %p556, %p557
    %p559 = scmp.ne.s32.totalorder %s547, %s548
    %p560 = scmp.eq.s32.totalorder %s40, 1
    %p561 = por %p559, %p560
    %p563 = scmp.ne.s32.totalorder %s548, %s562
    %p564 = scmp.eq.s32.totalorder %s40, 0
    %p565 = por %p563, %p564
    %s567 = sadd.s32 %s566, 1
    %p570 = scmp.eq.s32.totalorder %s34, 1
    %p571 = scmp.ne.s32.totalorder %s566, %s568
    %p572 = scmp.eq.s32.totalorder %s34, 0
    %p573 = por %p571, %p572
    %p574 = scmp.ne.s32.totalorder %s566, %s568
    %p575 = scmp.eq.s32.totalorder %s39, 1
    %p576 = por %p574, %p575
    %p577 = scmp.ne.s32.totalorder %s568, %s569
    %p578 = scmp.eq.s32.totalorder %s39, 0
    %p579 = por %p577, %p578
    %p580 = scmp.ne.s32.totalorder %s568, %s569
    %p581 = scmp.eq.s32.totalorder %s40, 1
    %p582 = por %p580, %p581
    %p584 = scmp.ne.s32.totalorder %s569, %s583
    %p585 = scmp.eq.s32.totalorder %s40, 0
    %p586 = por %p584, %p585
    %s588 = sadd.s32 %s587, 1
    %p591 = scmp.eq.s32.totalorder %s34, 1
    %p592 = scmp.ne.s32.totalorder %s587, %s589
    %p593 = scmp.eq.s32.totalorder %s34, 0
    %p594 = por %p592, %p593
    %p595 = scmp.ne.s32.totalorder %s587, %s589
    %p596 = scmp.eq.s32.totalorder %s39, 1
    %p597 = por %p595, %p596
    %p598 = scmp.ne.s32.totalorder %s589, %s590
    %p599 = scmp.eq.s32.totalorder %s39, 0
    %p600 = por %p598, %p599
    %p601 = scmp.ne.s32.totalorder %s589, %s590
    %p602 = scmp.eq.s32.totalorder %s40, 1
    %p603 = por %p601, %p602
    %p605 = scmp.ne.s32.totalorder %s590, %s604
    %p606 = scmp.eq.s32.totalorder %s40, 0
    %p607 = por %p605, %p606
    %s608 = ssub.s32 %s34, %s41
    %p609 = scmp.eq.s32.totalorder %s608, 0
    %s611 = sadd.s32 %s610, 1
    %s612 = scalar_select %p609, %s610, %s611
    %p615 = pneg %p609
    %p616 = scmp.eq.s32.totalorder %s34, 1
    %p617 = por %p615, %p616
    %p618 = scmp.ne.s32.totalorder %s610, %s613
    %p619 = scmp.eq.s32.totalorder %s34, 0
    %p620 = por %p618, %p619
    %p621 = scmp.ne.s32.totalorder %s610, %s613
    %p622 = scmp.eq.s32.totalorder %s39, 1
    %p623 = por %p621, %p622
    %p624 = scmp.ne.s32.totalorder %s613, %s614
    %p625 = scmp.eq.s32.totalorder %s39, 0
    %p626 = por %p624, %p625
    %p627 = scmp.ne.s32.totalorder %s613, %s614
    %p628 = scmp.eq.s32.totalorder %s40, 1
    %p629 = por %p627, %p628
    %p631 = scmp.ne.s32.totalorder %s614, %s630
    %p632 = scmp.eq.s32.totalorder %s40, 0
    %p633 = por %p631, %p632
    %s634 = ssub.s32 %s34, %s41
    %p635 = scmp.eq.s32.totalorder %s634, 0
    %s637 = sadd.s32 %s636, 1
    %s638 = scalar_select %p635, %s636, %s637
    %p641 = pneg %p635
    %p642 = scmp.eq.s32.totalorder %s34, 1
    %p643 = por %p641, %p642
    %p644 = scmp.ne.s32.totalorder %s636, %s639
    %p645 = scmp.eq.s32.totalorder %s34, 0
    %p646 = por %p644, %p645
    %p647 = scmp.ne.s32.totalorder %s636, %s639
    %p648 = scmp.eq.s32.totalorder %s39, 1
    %p649 = por %p647, %p648
    %p650 = scmp.ne.s32.totalorder %s639, %s640
    %p651 = scmp.eq.s32.totalorder %s39, 0
    %p652 = por %p650, %p651
    %p653 = scmp.ne.s32.totalorder %s639, %s640
    %p654 = scmp.eq.s32.totalorder %s40, 1
    %p655 = por %p653, %p654
    %p657 = scmp.ne.s32.totalorder %s640, %s656
    %p658 = scmp.eq.s32.totalorder %s40, 0
    %p659 = por %p657, %p658
    %p660 = scmp.le.s32.totalorder 1, %s34
    %p661 = scmp.lt.s32.totalorder %s34, 3
    %p662 = pnand %p660, %p661
    %p663 = pneg %p662
    // Predicated region
    $region9: #{vae_forward.1} parent=5 // pred_check
      _
    $region10: #{vae_forward.1} parent=5 // pred_check_branch
      %665 = sbr.rel (%p662) target = $region12
    $region11: #{vae_forward.1} parent=5 // pred_region
      %s666 = ssub.s32 %s34, 1
      // Predicated region
      $region13: #{vae_forward.1} parent=11 // pred_check
        %p667 = pneg %p159
      $region14: #{vae_forward.1} parent=11 // pred_check_branch
        %669 = sbr.rel (%p667) target = $region16
      $region15: #{vae_forward.1} parent=11 // pred_region
        _
      $region16: #{vae_forward.1} parent=11 // pred_fallthru
        _
      // Predicated region
      $region17: #{vae_forward.1} parent=11 // pred_check
        %p670 = pneg %p180
      $region18: #{vae_forward.1} parent=11 // pred_check_branch
        %672 = sbr.rel (%p670) target = $region20
      $region19: #{vae_forward.1} parent=11 // pred_region
        _
      $region20: #{vae_forward.1} parent=11 // pred_fallthru
        _
      // Predicated region
      $region21: #{vae_forward.1} parent=11 // pred_check
        %p673 = pneg %p201
      $region22: #{vae_forward.1} parent=11 // pred_check_branch
        %675 = sbr.rel (%p673) target = $region24
      $region23: #{vae_forward.1} parent=11 // pred_region
        _
      $region24: #{vae_forward.1} parent=11 // pred_fallthru
        _
      // Predicated region
      $region25: #{vae_forward.1} parent=11 // pred_check
        %p676 = pneg %p222
      $region26: #{vae_forward.1} parent=11 // pred_check_branch
        %678 = sbr.rel (%p676) target = $region28
      $region27: #{vae_forward.1} parent=11 // pred_region
        _
      $region28: #{vae_forward.1} parent=11 // pred_fallthru
        _
      // Predicated region
      $region29: #{vae_forward.1} parent=11 // pred_check
        %p679 = pneg %p243
      $region30: #{vae_forward.1} parent=11 // pred_check_branch
        %681 = sbr.rel (%p679) target = $region32
      $region31: #{vae_forward.1} parent=11 // pred_region
        _
      $region32: #{vae_forward.1} parent=11 // pred_fallthru
        _
      // Predicated region
      $region33: #{vae_forward.1} parent=11 // pred_check
        %p682 = pneg %p264
      $region34: #{vae_forward.1} parent=11 // pred_check_branch
        %684 = sbr.rel (%p682) target = $region36
      $region35: #{vae_forward.1} parent=11 // pred_region
        _
      $region36: #{vae_forward.1} parent=11 // pred_fallthru
        _
      // Predicated region
      $region37: #{vae_forward.1} parent=11 // pred_check
        %p685 = pneg %p285
      $region38: #{vae_forward.1} parent=11 // pred_check_branch
        %687 = sbr.rel (%p685) target = $region40
      $region39: #{vae_forward.1} parent=11 // pred_region
        _
      $region40: #{vae_forward.1} parent=11 // pred_fallthru
        _
      // Predicated region
      $region41: #{vae_forward.1} parent=11 // pred_check
        %p688 = pneg %p306
      $region42: #{vae_forward.1} parent=11 // pred_check_branch
        %690 = sbr.rel (%p688) target = $region44
      $region43: #{vae_forward.1} parent=11 // pred_region
        _
      $region44: #{vae_forward.1} parent=11 // pred_fallthru
        _
      // Predicated region
      $region45: #{vae_forward.1} parent=11 // pred_check
        %p691 = pneg %p327
      $region46: #{vae_forward.1} parent=11 // pred_check_branch
        %693 = sbr.rel (%p691) target = $region48
      $region47: #{vae_forward.1} parent=11 // pred_region
        _
      $region48: #{vae_forward.1} parent=11 // pred_fallthru
        _
      // Predicated region
      $region49: #{vae_forward.1} parent=11 // pred_check
        %p694 = pneg %p348
      $region50: #{vae_forward.1} parent=11 // pred_check_branch
        %696 = sbr.rel (%p694) target = $region52
      $region51: #{vae_forward.1} parent=11 // pred_region
        _
      $region52: #{vae_forward.1} parent=11 // pred_fallthru
        _
      // Predicated region
      $region53: #{vae_forward.1} parent=11 // pred_check
        %p697 = pneg %p369
      $region54: #{vae_forward.1} parent=11 // pred_check_branch
        %699 = sbr.rel (%p697) target = $region56
      $region55: #{vae_forward.1} parent=11 // pred_region
        _
      $region56: #{vae_forward.1} parent=11 // pred_fallthru
        _
      // Predicated region
      $region57: #{vae_forward.1} parent=11 // pred_check
        %p700 = pneg %p390
      $region58: #{vae_forward.1} parent=11 // pred_check_branch
        %702 = sbr.rel (%p700) target = $region60
      $region59: #{vae_forward.1} parent=11 // pred_region
        _
      $region60: #{vae_forward.1} parent=11 // pred_fallthru
        _
      // Predicated region
      $region61: #{vae_forward.1} parent=11 // pred_check
        %p703 = pneg %p411
      $region62: #{vae_forward.1} parent=11 // pred_check_branch
        %705 = sbr.rel (%p703) target = $region64
      $region63: #{vae_forward.1} parent=11 // pred_region
        _
      $region64: #{vae_forward.1} parent=11 // pred_fallthru
        _
      // Predicated region
      $region65: #{vae_forward.1} parent=11 // pred_check
        %p706 = pneg %p432
      $region66: #{vae_forward.1} parent=11 // pred_check_branch
        %708 = sbr.rel (%p706) target = $region68
      $region67: #{vae_forward.1} parent=11 // pred_region
        _
      $region68: #{vae_forward.1} parent=11 // pred_fallthru
        _
      // Predicated region
      $region69: #{vae_forward.1} parent=11 // pred_check
        %p709 = pneg %p453
      $region70: #{vae_forward.1} parent=11 // pred_check_branch
        %711 = sbr.rel (%p709) target = $region72
      $region71: #{vae_forward.1} parent=11 // pred_region
        _
      $region72: #{vae_forward.1} parent=11 // pred_fallthru
        _
      // Predicated region
      $region73: #{vae_forward.1} parent=11 // pred_check
        %p712 = pneg %p474
      $region74: #{vae_forward.1} parent=11 // pred_check_branch
        %714 = sbr.rel (%p712) target = $region76
      $region75: #{vae_forward.1} parent=11 // pred_region
        _
      $region76: #{vae_forward.1} parent=11 // pred_fallthru
        _
      // Predicated region
      $region77: #{vae_forward.1} parent=11 // pred_check
        %p715 = pneg %p495
      $region78: #{vae_forward.1} parent=11 // pred_check_branch
        %717 = sbr.rel (%p715) target = $region80
      $region79: #{vae_forward.1} parent=11 // pred_region
        _
      $region80: #{vae_forward.1} parent=11 // pred_fallthru
        _
      // Predicated region
      $region81: #{vae_forward.1} parent=11 // pred_check
        %p718 = pneg %p516
      $region82: #{vae_forward.1} parent=11 // pred_check_branch
        %720 = sbr.rel (%p718) target = $region84
      $region83: #{vae_forward.1} parent=11 // pred_region
        _
      $region84: #{vae_forward.1} parent=11 // pred_fallthru
        _
      // Predicated region
      $region85: #{vae_forward.1} parent=11 // pred_check
        %p721 = pneg %p537
      $region86: #{vae_forward.1} parent=11 // pred_check_branch
        %723 = sbr.rel (%p721) target = $region88
      $region87: #{vae_forward.1} parent=11 // pred_region
        _
      $region88: #{vae_forward.1} parent=11 // pred_fallthru
        _
      // Predicated region
      $region89: #{vae_forward.1} parent=11 // pred_check
        %p724 = pneg %p558
      $region90: #{vae_forward.1} parent=11 // pred_check_branch
        %726 = sbr.rel (%p724) target = $region92
      $region91: #{vae_forward.1} parent=11 // pred_region
        _
      $region92: #{vae_forward.1} parent=11 // pred_fallthru
        _
      // Predicated region
      $region93: #{vae_forward.1} parent=11 // pred_check
        %p727 = pneg %p579
      $region94: #{vae_forward.1} parent=11 // pred_check_branch
        %729 = sbr.rel (%p727) target = $region96
      $region95: #{vae_forward.1} parent=11 // pred_region
        _
      $region96: #{vae_forward.1} parent=11 // pred_fallthru
        _
      // Predicated region
      $region97: #{vae_forward.1} parent=11 // pred_check
        %p730 = pneg %p600
      $region98: #{vae_forward.1} parent=11 // pred_check_branch
        %732 = sbr.rel (%p730) target = $region100
      $region99: #{vae_forward.1} parent=11 // pred_region
        _
      $region100: #{vae_forward.1} parent=11 // pred_fallthru
        _
    $region12: #{vae_forward.1} parent=5 // pred_fallthru
      _
    %p733 = scmp.lt.s32.totalorder %s34, 2
    // Predicated region
    $region101: #{vae_forward.1} parent=5 // pred_check
      %p734 = pneg %p733
    $region102: #{vae_forward.1} parent=5 // pred_check_branch
      %736 = sbr.rel (%p734) target = $region104
    $region103: #{vae_forward.1} parent=5 // pred_region
      // Predicated region
      $region105: #{vae_forward.1} parent=103 // pred_check
        %p737 = pneg %p54
      $region106: #{vae_forward.1} parent=103 // pred_check_branch
        %739 = sbr.rel (%p737) target = $region108
      $region107: #{vae_forward.1} parent=103 // pred_region
        %s740 = smul.u32 16, %s34
        %p741 = scmp.lt.s32.totalorder %s740, 31
        %s742 = scalar_select %p741, %s740, 31
        %s743 = smul.addr %s742, 8
        %s744 = scalar_lea.vmem %s0, %s743
        %s745 = smul.u32 16, %s34
      $region108: #{vae_forward.1} parent=103 // pred_fallthru
        _
      // Predicated region
      $region109: #{vae_forward.1} parent=103 // pred_check
        %p746 = pneg %p80
      $region110: #{vae_forward.1} parent=103 // pred_check_branch
        %748 = sbr.rel (%p746) target = $region112
      $region111: #{vae_forward.1} parent=103 // pred_region
        %s749 = smul.u32 16, %s34
        %p750 = scmp.lt.s32.totalorder %s749, 31
        %s751 = scalar_select %p750, %s749, 31
        %s752 = smul.addr %s751, 2
        %s753 = smul.addr %s752, 8
        %s754 = scalar_lea.vmem %s1, %s753
        %s755 = smul.u32 16, %s34
      $region112: #{vae_forward.1} parent=103 // pred_fallthru
        _
      // Predicated region
      $region113: #{vae_forward.1} parent=103 // pred_check
        %p756 = pneg %p106
      $region114: #{vae_forward.1} parent=103 // pred_check_branch
        %758 = sbr.rel (%p756) target = $region116
      $region115: #{vae_forward.1} parent=103 // pred_region
        %s759 = smul.u32 16, %s34
        %p760 = scmp.lt.s32.totalorder %s759, 31
        %s761 = scalar_select %p760, %s759, 31
        %s762 = smul.addr %s761, 8
        %s763 = scalar_lea.vmem %s2, %s762
        %s764 = smul.u32 16, %s34
      $region116: #{vae_forward.1} parent=103 // pred_fallthru
        _
      // Predicated region
      $region117: #{vae_forward.1} parent=103 // pred_check
        %p765 = pneg %p132
      $region118: #{vae_forward.1} parent=103 // pred_check_branch
        %767 = sbr.rel (%p765) target = $region120
      $region119: #{vae_forward.1} parent=103 // pred_region
        %s768 = smul.u32 16, %s34
        %p769 = scmp.lt.s32.totalorder %s768, 31
        %s770 = scalar_select %p769, %s768, 31
        %s771 = smul.addr %s770, 8
        %s772 = scalar_lea.vmem %s3, %s771
        %s773 = smul.u32 16, %s34
      $region120: #{vae_forward.1} parent=103 // pred_fallthru
        _
    $region104: #{vae_forward.1} parent=5 // pred_fallthru
      _
    %p774 = scmp.le.s32.totalorder 1, %s34
    %p775 = scmp.lt.s32.totalorder %s34, 3
    %p776 = pnand %p774, %p775
    %p777 = pneg %p776
    // Predicated region
    $region121: #{vae_forward.1} parent=5 // pred_check
      _
    $region122: #{vae_forward.1} parent=5 // pred_check_branch
      %779 = sbr.rel (%p776) target = $region124
    $region123: #{vae_forward.1} parent=5 // pred_region
      %s780 = ssub.s32 %s34, 1
      %s781 = smul.u32 16, %s39
      %p782 = scmp.lt.s32.totalorder %s781, 31
      %s783 = scalar_select %p782, %s781, 31
      %s784 = smul.addr %s783, 8
      %s785 = scalar_lea.vmem %s0, %s784
      %p786 = pneg %p60
      %p787 = pneg %p57
      %s788 = smul.u32 16, %s39
      %p789 = scmp.lt.s32.totalorder %s788, 31
      %s790 = scalar_select %p789, %s788, 31
      %s791 = smul.addr %s790, 2
      %s792 = smul.addr %s791, 8
      %s793 = scalar_lea.vmem %s1, %s792
      %p794 = pneg %p86
      %p795 = pneg %p83
      %s796 = smul.u32 16, %s39
      %p797 = scmp.lt.s32.totalorder %s796, 31
      %s798 = scalar_select %p797, %s796, 31
      %s799 = smul.addr %s798, 8
      %s800 = scalar_lea.vmem %s2, %s799
      %p801 = pneg %p112
      %p802 = pneg %p109
      %s803 = smul.u32 16, %s39
      %p804 = scmp.lt.s32.totalorder %s803, 31
      %s805 = scalar_select %p804, %s803, 31
      %s806 = smul.addr %s805, 8
      %s807 = scalar_lea.vmem %s3, %s806
      %p808 = pneg %p138
      %p809 = pneg %p135
      %p810 = pneg %p159
      %p811 = pneg %p156
      %p812 = pneg %p180
      %p813 = pneg %p177
      %p814 = pneg %p201
      %p815 = pneg %p198
      %p816 = pneg %p222
      %p817 = pneg %p219
      %p818 = pneg %p243
      %p819 = pneg %p240
      %p820 = pneg %p264
      %p821 = pneg %p261
      %p822 = pneg %p285
      %p823 = pneg %p282
      %p824 = pneg %p306
      %p825 = pneg %p303
      %p826 = pneg %p327
      %p827 = pneg %p324
      %p828 = pneg %p348
      %p829 = pneg %p345
      %p830 = pneg %p369
      %p831 = pneg %p366
      %p832 = pneg %p390
      %p833 = pneg %p387
      %p834 = pneg %p411
      %p835 = pneg %p408
      %p836 = pneg %p432
      %p837 = pneg %p429
      %p838 = pneg %p453
      %p839 = pneg %p450
      %p840 = pneg %p474
      %p841 = pneg %p471
      %p842 = pneg %p495
      %p843 = pneg %p492
      %p844 = pneg %p516
      %p845 = pneg %p513
      %p846 = pneg %p537
      %p847 = pneg %p534
      %p848 = pneg %p558
      %p849 = pneg %p555
      %p850 = pneg %p579
      %p851 = pneg %p576
      %p852 = pneg %p600
      %p853 = pneg %p597
      %p854 = pneg %p626
      %p855 = pneg %p623
      %s856 = smul.u32 16, %s39
      %p857 = scmp.lt.s32.totalorder %s856, 31
      %s858 = scalar_select %p857, %s856, 31
      %s859 = smul.addr %s858, 2
      %s860 = smul.addr %s859, 8
      %s861 = scalar_lea.vmem %s26, %s860
      %p862 = pneg %p652
      %p863 = pneg %p649
      %s864 = smul.u32 16, %s39
      %p865 = scmp.lt.s32.totalorder %s864, 31
      %s866 = scalar_select %p865, %s864, 31
      %s867 = smul.addr %s866, 8
      %s868 = scalar_lea.vmem %s27, %s867
      %s869 = smul.u32 16, %s39
      %p870 = scmp.lt.s32.totalorder %s869, 31
      %s871 = scalar_select %p870, %s869, 31
      %s872 = smul.addr %s871, 8
      %s873 = scalar_lea.vmem %s0, %s872
      %s874 = smul.u32 16, %s39
      %s875 = smul.u32 16, %s39
      %p876 = scmp.lt.s32.totalorder %s875, 31
      %s877 = scalar_select %p876, %s875, 31
      %s878 = smul.addr %s877, 2
      %s879 = smul.addr %s878, 8
      %s880 = scalar_lea.vmem %s1, %s879
      %s881 = smul.u32 16, %s39
      %s882 = smul.u32 16, %s39
      %p883 = scmp.lt.s32.totalorder %s882, 31
      %s884 = scalar_select %p883, %s882, 31
      %s885 = smul.addr %s884, 8
      %s886 = scalar_lea.vmem %s2, %s885
      %s887 = smul.u32 16, %s39
      %s888 = smul.u32 16, %s39
      %p889 = scmp.lt.s32.totalorder %s888, 31
      %s890 = scalar_select %p889, %s888, 31
      %s891 = smul.addr %s890, 8
      %s892 = scalar_lea.vmem %s3, %s891
      %s893 = smul.u32 16, %s39
      %s894 = smul.u32 16, %s39
      %p895 = scmp.lt.s32.totalorder %s894, 31
      %s896 = scalar_select %p895, %s894, 31
      %s897 = smul.addr %s896, 2
      %s898 = smul.addr %s897, 8
      %s899 = scalar_lea.vmem %s26, %s898
      %s900 = smul.u32 16, %s39
      %s901 = smul.u32 16, %s39
      %p902 = scmp.lt.s32.totalorder %s901, 31
      %s903 = scalar_select %p902, %s901, 31
      %s904 = smul.addr %s903, 8
      %s905 = scalar_lea.vmem %s27, %s904
      %s906 = smul.u32 16, %s39
      %v908 = vld [vmem:[%s873] sm:$0xff]
      %v909 = vld [vmem:[%s873 + $0x8] sm:$0xff]
      %v910 = vld [vmem:[%s873 + $0x10] sm:$0xff]
      %v911 = vld [vmem:[%s873 + $0x18] sm:$0xff]
      %v912 = vld [vmem:[%s873 + $0x20] sm:$0xff]
      %v913 = vld [vmem:[%s873 + $0x28] sm:$0xff]
      %v914 = vld [vmem:[%s873 + $0x30] sm:$0xff]
      %v915 = vld [vmem:[%s873 + $0x38] sm:$0xff]
      %v916 = vld [vmem:[%s873 + $0x40] sm:$0xff]
      %v917 = vld [vmem:[%s873 + $0x48] sm:$0xff]
      %v918 = vld [vmem:[%s873 + $0x50] sm:$0xff]
      %v919 = vld [vmem:[%s873 + $0x58] sm:$0xff]
      %v920 = vld [vmem:[%s873 + $0x60] sm:$0xff]
      %v921 = vld [vmem:[%s873 + $0x68] sm:$0xff]
      %v922 = vld [vmem:[%s873 + $0x70] sm:$0xff]
      %v923 = vld [vmem:[%s873 + $0x78] sm:$0xff]
      %v924 = vpack.c.bf16 %v909, %v908
      %v925 = vpack.c.bf16 %v911, %v910
      %v926 = vpack.c.bf16 %v913, %v912
      %v927 = vpack.c.bf16 %v915, %v914
      %v928 = vpack.c.bf16 %v917, %v916
      %v929 = vpack.c.bf16 %v919, %v918
      %v930 = vpack.c.bf16 %v921, %v920
      %v931 = vpack.c.bf16 %v923, %v922
      %v932 = vld [vmem:[%s4] sm:$0x3]
      %v933 = vld [vmem:[%s880] sm:$0xff]
      %v934 = vld [vmem:[%s880 + $0x8] sm:$0xff]
      %v935 = vld [vmem:[%s880 + $0x10] sm:$0xff]
      %v936 = vld [vmem:[%s880 + $0x18] sm:$0xff]
      %v937 = vld [vmem:[%s880 + $0x20] sm:$0xff]
      %v938 = vld [vmem:[%s880 + $0x28] sm:$0xff]
      %v939 = vld [vmem:[%s880 + $0x30] sm:$0xff]
      %v940 = vld [vmem:[%s880 + $0x38] sm:$0xff]
      %v941 = vld [vmem:[%s880 + $0x40] sm:$0xff]
      %v942 = vld [vmem:[%s880 + $0x48] sm:$0xff]
      %v943 = vld [vmem:[%s880 + $0x50] sm:$0xff]
      %v944 = vld [vmem:[%s880 + $0x58] sm:$0xff]
      %v945 = vld [vmem:[%s880 + $0x60] sm:$0xff]
      %v946 = vld [vmem:[%s880 + $0x68] sm:$0xff]
      %v947 = vld [vmem:[%s880 + $0x70] sm:$0xff]
      %v948 = vld [vmem:[%s880 + $0x78] sm:$0xff]
      %v949 = vld [vmem:[%s880 + $0x80] sm:$0xff]
      %v950 = vld [vmem:[%s880 + $0x88] sm:$0xff]
      %v951 = vld [vmem:[%s880 + $0x90] sm:$0xff]
      %v952 = vld [vmem:[%s880 + $0x98] sm:$0xff]
      %v953 = vld [vmem:[%s880 + $0xa0] sm:$0xff]
      %v954 = vld [vmem:[%s880 + $0xa8] sm:$0xff]
      %v955 = vld [vmem:[%s880 + $0xb0] sm:$0xff]
      %v956 = vld [vmem:[%s880 + $0xb8] sm:$0xff]
      %v957 = vld [vmem:[%s880 + $0xc0] sm:$0xff]
      %v958 = vld [vmem:[%s880 + $0xc8] sm:$0xff]
      %v959 = vld [vmem:[%s880 + $0xd0] sm:$0xff]
      %v960 = vld [vmem:[%s880 + $0xd8] sm:$0xff]
      %v961 = vld [vmem:[%s880 + $0xe0] sm:$0xff]
      %v962 = vld [vmem:[%s880 + $0xe8] sm:$0xff]
      %v963 = vld [vmem:[%s880 + $0xf0] sm:$0xff]
      %v964 = vld [vmem:[%s880 + $0xf8] sm:$0xff]
      %v965 = vpack.c.bf16 %v935, %v933
      %v966 = vpack.c.bf16 %v936, %v934
      %v967 = vpack.c.bf16 %v939, %v937
      %v968 = vpack.c.bf16 %v940, %v938
      %v969 = vpack.c.bf16 %v943, %v941
      %v970 = vpack.c.bf16 %v944, %v942
      %v971 = vpack.c.bf16 %v947, %v945
      %v972 = vpack.c.bf16 %v948, %v946
      %v973 = vpack.c.bf16 %v951, %v949
      %v974 = vpack.c.bf16 %v952, %v950
      %v975 = vpack.c.bf16 %v955, %v953
      %v976 = vpack.c.bf16 %v956, %v954
      %v977 = vpack.c.bf16 %v959, %v957
      %v978 = vpack.c.bf16 %v960, %v958
      %v979 = vpack.c.bf16 %v963, %v961
      %v980 = vpack.c.bf16 %v964, %v962
      %v981 = vld [vmem:[%s5] sm:$0xf]
      %v982 = vld [vmem:[%s5 + $0x4] sm:$0xf]
      %v983 = vld [vmem:[%s5 + $0x8] sm:$0xf]
      %v984 = vld [vmem:[%s5 + $0xc] sm:$0xf]
      %v985 = vld [vmem:[%s5 + $0x10] sm:$0xf]
      %v986 = vld [vmem:[%s5 + $0x14] sm:$0xf]
      %v987 = vld [vmem:[%s5 + $0x18] sm:$0xf]
      %v988 = vld [vmem:[%s5 + $0x1c] sm:$0xf]
      %v989 = vld [vmem:[%s5 + $0x20] sm:$0xf]
      %v990 = vld [vmem:[%s5 + $0x24] sm:$0xf]
      %v991 = vld [vmem:[%s5 + $0x28] sm:$0xf]
      %v992 = vld [vmem:[%s5 + $0x2c] sm:$0xf]
      %v993 = vld [vmem:[%s5 + $0x30] sm:$0xf]
      %v994 = vld [vmem:[%s5 + $0x34] sm:$0xf]
      %v995 = vld [vmem:[%s5 + $0x38] sm:$0xf]
      %v996 = vld [vmem:[%s5 + $0x3c] sm:$0xf]
      %v997 = vld [vmem:[%s5 + $0x40] sm:$0xf]
      %v1015 = vunpack.c.l.b16 %v981
      %v1016 = vunpack.c.l.b16 %v982
      %v1017 = vunpack.c.l.b16 %v983
      %v1018 = vunpack.c.l.b16 %v984
      %v1019 = vunpack.c.l.b16 %v985
      %v1020 = vunpack.c.l.b16 %v986
      %v1021 = vunpack.c.l.b16 %v987
      %v1022 = vunpack.c.l.b16 %v988
      %v1023 = vunpack.c.l.b16 %v989
      %v1024 = vunpack.c.l.b16 %v990
      %v1025 = vunpack.c.l.b16 %v991
      %v1026 = vunpack.c.l.b16 %v992
      %v1027 = vunpack.c.l.b16 %v993
      %v1028 = vunpack.c.l.b16 %v994
      %v1029 = vunpack.c.l.b16 %v995
      %v1030 = vunpack.c.l.b16 %v996
      %v1031 = vunpack.c.l.b16 %v997
      %v1032 = vpack.c.b16 %v1016, %v1015
      %v1033 = vpack.c.b16 %v1018, %v1017
      %v1034 = vpack.c.b16 %v1020, %v1019
      %v1035 = vpack.c.b16 %v1022, %v1021
      %v1036 = vpack.c.b16 %v1024, %v1023
      %v1037 = vpack.c.b16 %v1026, %v1025
      %v1038 = vpack.c.b16 %v1028, %v1027
      %v1039 = vpack.c.b16 %v1030, %v1029
      %v1040 = vpack.c.b16 %v1031, %v1031
      %vm1049 = vcmask 64512
      %v1051 = vsel %vm1049, %v966, 0
      %v1054 = vsel %vm1049, %v968, 0
      %v1057 = vsel %vm1049, %v970, 0
      %v1060 = vsel %vm1049, %v972, 0
      %v1063 = vsel %vm1049, %v974, 0
      %v1066 = vsel %vm1049, %v976, 0
      %v1069 = vsel %vm1049, %v978, 0
      %v1072 = vsel %vm1049, %v980, 0
      %vm1074 = vcmask 1043456
      %v1076 = vsel %vm1074, %v1040, 0
      %1078 = vmatprep.subr.bf16.mxu0 0
      %1079 = vmatpush1.bf16.msra.mxu0 %v1032
      %1080 = vmatprep.subr.bf16.mxu0 0
      %1081 = vmatpush1.bf16.msra.mxu0 %v1033
      %1082 = vmatprep.subr.bf16.mxu0 0
      %1083 = vmatpush1.bf16.msra.mxu0 %v1034
      %1084 = vmatprep.subr.bf16.mxu0 0
      %1085 = vmatpush1.bf16.msra.mxu0 %v1035
      %1086 = vmatprep.subr.bf16.mxu0 0
      %1087 = vmatpush1.bf16.msra.mxu0 %v1036
      %1088 = vmatprep.subr.bf16.mxu0 0
      %1089 = vmatpush1.bf16.msra.mxu0 %v1037
      %1090 = vmatprep.subr.bf16.mxu0 0
      %1091 = vmatpush1.bf16.msra.mxu0 %v1038
      %1092 = vmatprep.subr.bf16.mxu0 0
      %1093 = vmatpush1.bf16.msra.mxu0 %v1039
      %1094 = vmatprep.subr.bf16.mxu0 0
      %1095 = vmatpush1.bf16.msra.mxu0 %v1076
      %1096 = vmatprep.subr.bf16.mxu0 0
      %1097 = vmatpush1.bf16.msra.mxu0 0
      %1098 = vmatprep.subr.bf16.mxu0 0
      %1099 = vmatpush1.bf16.msra.mxu0 0
      %1100 = vmatprep.subr.bf16.mxu0 0
      %1101 = vmatpush1.bf16.msra.mxu0 0
      %1102 = vmatprep.subr.bf16.mxu0 0
      %1103 = vmatpush1.bf16.msra.mxu0 0
      %1104 = vmatprep.subr.bf16.mxu0 0
      %1105 = vmatpush1.bf16.msra.mxu0 0
      %1106 = vmatprep.subr.bf16.mxu0 0
      %1107 = vmatpush1.bf16.msra.mxu0 0
      %1108 = vmatprep.subr.bf16.mxu0 0
      %1109 = vmatpush1.bf16.msra.mxu0 0
      %1110 = vmatprep.mubr.bf16.mxu0 %v1051
      %1111 = vmatmul.mubr.bf16.gmra.mrb[0].mxu0 %v965
      %v1112 = vpop.f32.mrb[0].mxu0
      %v1113 = vadd.f32 0.0, %v1112
      %v1114 = vpop.f32.mrb[0].mxu0
      %v1115 = vpop.f32.mrb[0].mxu0
      %v1116 = vadd.f32 0.0, %v1115
      %v1117 = vpop.f32.mrb[0].mxu0
      %1118 = vmatprep.mubr.bf16.mxu0 %v1054
      %1119 = vmatmul.mubr.bf16.gmra.mrb[0].mxu0 %v967
      %v1120 = vpop.f32.mrb[0].mxu0
      %v1121 = vadd.f32 0.0, %v1120
      %v1122 = vpop.f32.mrb[0].mxu0
      %v1123 = vpop.f32.mrb[0].mxu0
      %v1124 = vadd.f32 0.0, %v1123
      %v1125 = vpop.f32.mrb[0].mxu0
      %1126 = vmatprep.mubr.bf16.mxu0 %v1057
      %1127 = vmatmul.mubr.bf16.gmra.mrb[0].mxu0 %v969
      %v1128 = vpop.f32.mrb[0].mxu0
      %v1129 = vadd.f32 0.0, %v1128
      %v1130 = vpop.f32.mrb[0].mxu0
      %v1131 = vpop.f32.mrb[0].mxu0
      %v1132 = vadd.f32 0.0, %v1131
      %v1133 = vpop.f32.mrb[0].mxu0
      %1134 = vmatprep.mubr.bf16.mxu0 %v1060
      %1135 = vmatmul.mubr.bf16.gmra.mrb[0].mxu0 %v971
      %v1136 = vpop.f32.mrb[0].mxu0
      %v1137 = vadd.f32 0.0, %v1136
      %v1138 = vpop.f32.mrb[0].mxu0
      %v1139 = vpop.f32.mrb[0].mxu0
      %v1140 = vadd.f32 0.0, %v1139
      %v1141 = vpop.f32.mrb[0].mxu0
      %1142 = vmatprep.mubr.bf16.mxu0 %v1063
      %1143 = vmatmul.mubr.bf16.gmra.mrb[0].mxu0 %v973
      %v1144 = vpop.f32.mrb[0].mxu0
      %v1145 = vadd.f32 0.0, %v1144
      %v1146 = vpop.f32.mrb[0].mxu0
      %v1147 = vpop.f32.mrb[0].mxu0
      %v1148 = vadd.f32 0.0, %v1147
      %v1149 = vpop.f32.mrb[0].mxu0
      %1150 = vmatprep.mubr.bf16.mxu0 %v1066
      %1151 = vmatmul.mubr.bf16.gmra.mrb[0].mxu0 %v975
      %v1152 = vpop.f32.mrb[0].mxu0
      %v1153 = vadd.f32 0.0, %v1152
      %v1154 = vpop.f32.mrb[0].mxu0
      %v1155 = vpop.f32.mrb[0].mxu0
      %v1156 = vadd.f32 0.0, %v1155
      %v1157 = vpop.f32.mrb[0].mxu0
      %1158 = vmatprep.mubr.bf16.mxu0 %v1069
      %1159 = vmatmul.mubr.bf16.gmra.mrb[0].mxu0 %v977
      %v1160 = vpop.f32.mrb[0].mxu0
      %v1161 = vadd.f32 0.0, %v1160
      %v1162 = vpop.f32.mrb[0].mxu0
      %v1163 = vpop.f32.mrb[0].mxu0
      %v1164 = vadd.f32 0.0, %v1163
      %v1165 = vpop.f32.mrb[0].mxu0
      %1166 = vmatprep.mubr.bf16.mxu0 %v1072
      %1167 = vmatmul.mubr.bf16.gmra.mrb[0].mxu0 %v979
      %v1168 = vpop.f32.mrb[0].mxu0
      %v1169 = vadd.f32 0.0, %v1168
      %v1170 = vpop.f32.mrb[0].mxu0
      %v1171 = vpop.f32.mrb[0].mxu0
      %v1172 = vadd.f32 0.0, %v1171
      %v1173 = vpop.f32.mrb[0].mxu0
      %1174 = vdwg.mxu0
      %vm1175 = vcmask 31744
      %v1177 = vsel %vm1175, %v924, 0
      %v1180 = vsel %vm1175, %v925, 0
      %v1183 = vsel %vm1175, %v926, 0
      %v1186 = vsel %vm1175, %v927, 0
      %v1189 = vsel %vm1175, %v928, 0
      %v1192 = vsel %vm1175, %v929, 0
      %v1195 = vsel %vm1175, %v930, 0
      %v1198 = vsel %vm1175, %v931, 0
      %vm1200 = vcmask 1041408
      %v1202 = vsel %vm1200, %v932, 0
      %1204 = vmatprep.subr.bf16.mxu0 0
      %1205 = vmatpush1.bf16.msra.mxu0 %v1202
      %1206 = vmatprep.subr.bf16.mxu0 0
      %1207 = vmatpush1.bf16.msra.mxu0 0
      %1208 = vmatprep.subr.bf16.mxu0 0
      %1209 = vmatpush1.bf16.msra.mxu0 0
      %1210 = vmatprep.subr.bf16.mxu0 0
      %1211 = vmatpush1.bf16.msra.mxu0 0
      %1212 = vmatprep.subr.bf16.mxu0 0
      %1213 = vmatpush1.bf16.msra.mxu0 0
      %1214 = vmatprep.subr.bf16.mxu0 0
      %1215 = vmatpush1.bf16.msra.mxu0 0
      %1216 = vmatprep.subr.bf16.mxu0 0
      %1217 = vmatpush1.bf16.msra.mxu0 0
      %1218 = vmatprep.subr.bf16.mxu0 0
      %1219 = vmatpush1.bf16.msra.mxu0 0
      %1220 = vmatprep.subr.bf16.mxu0 0
      %1221 = vmatpush1.bf16.msra.mxu0 0
      %1222 = vmatprep.subr.bf16.mxu0 0
      %1223 = vmatpush1.bf16.msra.mxu0 0
      %1224 = vmatprep.subr.bf16.mxu0 0
      %1225 = vmatpush1.bf16.msra.mxu0 0
      %1226 = vmatprep.subr.bf16.mxu0 0
      %1227 = vmatpush1.bf16.msra.mxu0 0
      %1228 = vmatprep.subr.bf16.mxu0 0
      %1229 = vmatpush1.bf16.msra.mxu0 0
      %1230 = vmatprep.subr.bf16.mxu0 0
      %1231 = vmatpush1.bf16.msra.mxu0 0
      %1232 = vmatprep.subr.bf16.mxu0 0
      %1233 = vmatpush1.bf16.msra.mxu0 0
      %1234 = vmatprep.subr.bf16.mxu0 0
      %1235 = vmatpush1.bf16.msra.mxu0 0
      %1236 = vmatprep.mubr.bf16.mxu0 0
      %1237 = vmatmul.mubr.bf16.gmra.mrb[0].mxu0 %v1177
      %v1238 = vpop.f32.mrb[0].mxu0
      %v1239 = vadd.f32 %v1113, %v1238
      %v1240 = vpop.f32.mrb[0].mxu0
      %v1241 = vpop.f32.mrb[0].mxu0
      %v1242 = vadd.f32 %v1116, %v1241
      %v1243 = vpop.f32.mrb[0].mxu0
      %1244 = vmatprep.mubr.bf16.mxu0 0
      %1245 = vmatmul.mubr.bf16.gmra.mrb[0].mxu0 %v1180
      %v1246 = vpop.f32.mrb[0].mxu0
      %v1247 = vadd.f32 %v1121, %v1246
      %v1248 = vpop.f32.mrb[0].mxu0
      %v1249 = vpop.f32.mrb[0].mxu0
      %v1250 = vadd.f32 %v1124, %v1249
      %v1251 = vpop.f32.mrb[0].mxu0
      %1252 = vmatprep.mubr.bf16.mxu0 0
      %1253 = vmatmul.mubr.bf16.gmra.mrb[0].mxu0 %v1183
      %v1254 = vpop.f32.mrb[0].mxu0
      %v1255 = vadd.f32 %v1129, %v1254
      %v1256 = vpop.f32.mrb[0].mxu0
      %v1257 = vpop.f32.mrb[0].mxu0
      %v1258 = vadd.f32 %v1132, %v1257
      %v1259 = vpop.f32.mrb[0].mxu0
      %1260 = vmatprep.mubr.bf16.mxu0 0
      %1261 = vmatmul.mubr.bf16.gmra.mrb[0].mxu0 %v1186
      %v1262 = vpop.f32.mrb[0].mxu0
      %v1263 = vadd.f32 %v1137, %v1262
      %v1264 = vpop.f32.mrb[0].mxu0
      %v1265 = vpop.f32.mrb[0].mxu0
      %v1266 = vadd.f32 %v1140, %v1265
      %v1267 = vpop.f32.mrb[0].mxu0
      %1268 = vmatprep.mubr.bf16.mxu0 0
      %1269 = vmatmul.mubr.bf16.gmra.mrb[0].mxu0 %v1189
      %v1270 = vpop.f32.mrb[0].mxu0
      %v1271 = vadd.f32 %v1145, %v1270
      %v1272 = vpop.f32.mrb[0].mxu0
      %v1273 = vpop.f32.mrb[0].mxu0
      %v1274 = vadd.f32 %v1148, %v1273
      %v1275 = vpop.f32.mrb[0].mxu0
      %1276 = vmatprep.mubr.bf16.mxu0 0
      %1277 = vmatmul.mubr.bf16.gmra.mrb[0].mxu0 %v1192
      %v1278 = vpop.f32.mrb[0].mxu0
      %v1279 = vadd.f32 %v1153, %v1278
      %v1280 = vpop.f32.mrb[0].mxu0
      %v1281 = vpop.f32.mrb[0].mxu0
      %v1282 = vadd.f32 %v1156, %v1281
      %v1283 = vpop.f32.mrb[0].mxu0
      %1284 = vmatprep.mubr.bf16.mxu0 0
      %1285 = vmatmul.mubr.bf16.gmra.mrb[0].mxu0 %v1195
      %v1286 = vpop.f32.mrb[0].mxu0
      %v1287 = vadd.f32 %v1161, %v1286
      %v1288 = vpop.f32.mrb[0].mxu0
      %v1289 = vpop.f32.mrb[0].mxu0
      %v1290 = vadd.f32 %v1164, %v1289
      %v1291 = vpop.f32.mrb[0].mxu0
      %1292 = vmatprep.mubr.bf16.mxu0 0
      %1293 = vmatmul.mubr.bf16.gmra.mrb[0].mxu0 %v1198
      %v1294 = vpop.f32.mrb[0].mxu0
      %v1295 = vadd.f32 %v1169, %v1294
      %v1296 = vpop.f32.mrb[0].mxu0
      %v1297 = vpop.f32.mrb[0].mxu0
      %v1298 = vadd.f32 %v1172, %v1297
      %v1299 = vpop.f32.mrb[0].mxu0
      %1300 = vdwg.mxu0
      %v1301 = vld [vmem:[%s886] sm:$0xff]
      %v1302 = vld [vmem:[%s886 + $0x8] sm:$0xff]
      %v1303 = vld [vmem:[%s886 + $0x10] sm:$0xff]
      %v1304 = vld [vmem:[%s886 + $0x18] sm:$0xff]
      %v1305 = vld [vmem:[%s886 + $0x20] sm:$0xff]
      %v1306 = vld [vmem:[%s886 + $0x28] sm:$0xff]
      %v1307 = vld [vmem:[%s886 + $0x30] sm:$0xff]
      %v1308 = vld [vmem:[%s886 + $0x38] sm:$0xff]
      %v1309 = vld [vmem:[%s886 + $0x40] sm:$0xff]
      %v1310 = vld [vmem:[%s886 + $0x48] sm:$0xff]
      %v1311 = vld [vmem:[%s886 + $0x50] sm:$0xff]
      %v1312 = vld [vmem:[%s886 + $0x58] sm:$0xff]
      %v1313 = vld [vmem:[%s886 + $0x60] sm:$0xff]
      %v1314 = vld [vmem:[%s886 + $0x68] sm:$0xff]
      %v1315 = vld [vmem:[%s886 + $0x70] sm:$0xff]
      %v1316 = vld [vmem:[%s886 + $0x78] sm:$0xff]
      %v1317 = vld [vmem:[%s6] sm:$0x1]
      %1319 = vset.pattern.permute.xlu0 0
      %1320 = vperm.xlu0 %1319, %v1301
      %v1321 = vpop.permute.xlu0 %1320
      %1324 = vset.pattern.permute.xlu0 0
      %1325 = vperm.xlu0 %1324, %v1302
      %v1326 = vpop.permute.xlu0 %1325
      %1329 = vset.pattern.permute.xlu0 0
      %1330 = vperm.xlu0 %1329, %v1303
      %v1331 = vpop.permute.xlu0 %1330
      %1334 = vset.pattern.permute.xlu0 0
      %1335 = vperm.xlu0 %1334, %v1304
      %v1336 = vpop.permute.xlu0 %1335
      %1339 = vset.pattern.permute.xlu0 0
      %1340 = vperm.xlu0 %1339, %v1305
      %v1341 = vpop.permute.xlu0 %1340
      %1344 = vset.pattern.permute.xlu0 0
      %1345 = vperm.xlu0 %1344, %v1306
      %v1346 = vpop.permute.xlu0 %1345
      %1349 = vset.pattern.permute.xlu0 0
      %1350 = vperm.xlu0 %1349, %v1307
      %v1351 = vpop.permute.xlu0 %1350
      %1354 = vset.pattern.permute.xlu0 0
      %1355 = vperm.xlu0 %1354, %v1308
      %v1356 = vpop.permute.xlu0 %1355
      %1359 = vset.pattern.permute.xlu0 0
      %1360 = vperm.xlu0 %1359, %v1309
      %v1361 = vpop.permute.xlu0 %1360
      %1364 = vset.pattern.permute.xlu0 0
      %1365 = vperm.xlu0 %1364, %v1310
      %v1366 = vpop.permute.xlu0 %1365
      %1369 = vset.pattern.permute.xlu0 0
      %1370 = vperm.xlu0 %1369, %v1311
      %v1371 = vpop.permute.xlu0 %1370
      %1374 = vset.pattern.permute.xlu0 0
      %1375 = vperm.xlu0 %1374, %v1312
      %v1376 = vpop.permute.xlu0 %1375
      %1379 = vset.pattern.permute.xlu0 0
      %1380 = vperm.xlu0 %1379, %v1313
      %v1381 = vpop.permute.xlu0 %1380
      %1384 = vset.pattern.permute.xlu0 0
      %1385 = vperm.xlu0 %1384, %v1314
      %v1386 = vpop.permute.xlu0 %1385
      %1389 = vset.pattern.permute.xlu0 0
      %1390 = vperm.xlu0 %1389, %v1315
      %v1391 = vpop.permute.xlu0 %1390
      %1394 = vset.pattern.permute.xlu0 0
      %1395 = vperm.xlu0 %1394, %v1316
      %v1396 = vpop.permute.xlu0 %1395
      %v1399 = vlaneseq
      %v1400 = vshrl.u32 %v1399, 7
      %v1401 = vsub.s32 0, %v1400
      %v1402 = vrot.slane %v1317, %v1401
      %v1404 = vmul.f32 %v1321, %v1402
      %v1405 = vmul.f32 %v1326, %v1402
      %v1406 = vmul.f32 %v1331, %v1402
      %v1407 = vmul.f32 %v1336, %v1402
      %v1408 = vmul.f32 %v1341, %v1402
      %v1409 = vmul.f32 %v1346, %v1402
      %v1410 = vmul.f32 %v1351, %v1402
      %v1411 = vmul.f32 %v1356, %v1402
      %v1412 = vmul.f32 %v1361, %v1402
      %v1413 = vmul.f32 %v1366, %v1402
      %v1414 = vmul.f32 %v1371, %v1402
      %v1415 = vmul.f32 %v1376, %v1402
      %v1416 = vmul.f32 %v1381, %v1402
      %v1417 = vmul.f32 %v1386, %v1402
      %v1418 = vmul.f32 %v1391, %v1402
      %v1419 = vmul.f32 %v1396, %v1402
      %v1420 = vadd.f32 %v1239, %v1404
      %v1421 = vadd.f32 %v1242, %v1405
      %v1422 = vadd.f32 %v1247, %v1406
      %v1423 = vadd.f32 %v1250, %v1407
      %v1424 = vadd.f32 %v1255, %v1408
      %v1425 = vadd.f32 %v1258, %v1409
      %v1426 = vadd.f32 %v1263, %v1410
      %v1427 = vadd.f32 %v1266, %v1411
      %v1428 = vadd.f32 %v1271, %v1412
      %v1429 = vadd.f32 %v1274, %v1413
      %v1430 = vadd.f32 %v1279, %v1414
      %v1431 = vadd.f32 %v1282, %v1415
      %v1432 = vadd.f32 %v1287, %v1416
      %v1433 = vadd.f32 %v1290, %v1417
      %v1434 = vadd.f32 %v1295, %v1418
      %v1435 = vadd.f32 %v1298, %v1419
      %v1436 = vld [vmem:[%s7] sm:$0x1]
      %v1438 = vlaneseq
      %v1439 = vshrl.u32 %v1438, 7
      %v1440 = vsub.s32 0, %v1439
      %v1441 = vrot.slane %v1436, %v1440
      %v1443 = vadd.f32 %v1420, %v1441
      %v1444 = vadd.f32 %v1421, %v1441
      %v1445 = vadd.f32 %v1422, %v1441
      %v1446 = vadd.f32 %v1423, %v1441
      %v1447 = vadd.f32 %v1424, %v1441
      %v1448 = vadd.f32 %v1425, %v1441
      %v1449 = vadd.f32 %v1426, %v1441
      %v1450 = vadd.f32 %v1427, %v1441
      %v1451 = vadd.f32 %v1428, %v1441
      %v1452 = vadd.f32 %v1429, %v1441
      %v1453 = vadd.f32 %v1430, %v1441
      %v1454 = vadd.f32 %v1431, %v1441
      %v1455 = vadd.f32 %v1432, %v1441
      %v1456 = vadd.f32 %v1433, %v1441
      %v1457 = vadd.f32 %v1434, %v1441
      %v1458 = vadd.f32 %v1435, %v1441
      %vm1459 = vcmp.gt.f32.partialorder %v1443, 0.0
      %vm1460 = vcmp.gt.f32.partialorder %v1444, 0.0
      %vm1461 = vcmp.gt.f32.partialorder %v1445, 0.0
      %vm1462 = vcmp.gt.f32.partialorder %v1446, 0.0
      %vm1463 = vcmp.gt.f32.partialorder %v1447, 0.0
      %vm1464 = vcmp.gt.f32.partialorder %v1448, 0.0
      %vm1465 = vcmp.gt.f32.partialorder %v1449, 0.0
      %vm1466 = vcmp.gt.f32.partialorder %v1450, 0.0
      %vm1467 = vcmp.gt.f32.partialorder %v1451, 0.0
      %vm1468 = vcmp.gt.f32.partialorder %v1452, 0.0
      %vm1469 = vcmp.gt.f32.partialorder %v1453, 0.0
      %vm1470 = vcmp.gt.f32.partialorder %v1454, 0.0
      %vm1471 = vcmp.gt.f32.partialorder %v1455, 0.0
      %vm1472 = vcmp.gt.f32.partialorder %v1456, 0.0
      %vm1473 = vcmp.gt.f32.partialorder %v1457, 0.0
      %vm1474 = vcmp.gt.f32.partialorder %v1458, 0.0
      %v1475 = vmul.f32 %v1443, 0.01
      %v1476 = vmul.f32 %v1444, 0.01
      %v1477 = vmul.f32 %v1445, 0.01
      %v1478 = vmul.f32 %v1446, 0.01
      %v1479 = vmul.f32 %v1447, 0.01
      %v1480 = vmul.f32 %v1448, 0.01
      %v1481 = vmul.f32 %v1449, 0.01
      %v1482 = vmul.f32 %v1450, 0.01
      %v1483 = vmul.f32 %v1451, 0.01
      %v1484 = vmul.f32 %v1452, 0.01
      %v1485 = vmul.f32 %v1453, 0.01
      %v1486 = vmul.f32 %v1454, 0.01
      %v1487 = vmul.f32 %v1455, 0.01
      %v1488 = vmul.f32 %v1456, 0.01
      %v1489 = vmul.f32 %v1457, 0.01
      %v1490 = vmul.f32 %v1458, 0.01
      %v1491 = vsel %vm1459, %v1443, %v1475
      %v1492 = vsel %vm1460, %v1444, %v1476
      %v1493 = vsel %vm1461, %v1445, %v1477
      %v1494 = vsel %vm1462, %v1446, %v1478
      %v1495 = vsel %vm1463, %v1447, %v1479
      %v1496 = vsel %vm1464, %v1448, %v1480
      %v1497 = vsel %vm1465, %v1449, %v1481
      %v1498 = vsel %vm1466, %v1450, %v1482
      %v1499 = vsel %vm1467, %v1451, %v1483
      %v1500 = vsel %vm1468, %v1452, %v1484
      %v1501 = vsel %vm1469, %v1453, %v1485
      %v1502 = vsel %vm1470, %v1454, %v1486
      %v1503 = vsel %vm1471, %v1455, %v1487
      %v1504 = vsel %vm1472, %v1456, %v1488
      %v1505 = vsel %vm1473, %v1457, %v1489
      %v1506 = vsel %vm1474, %v1458, %v1490
      %v1507 = vld [vmem:[%s8] sm:$0x1]
      %v1509 = vlaneseq
      %v1510 = vshrl.u32 %v1509, 7
      %v1511 = vsub.s32 0, %v1510
      %v1512 = vrot.slane %v1507, %v1511
      %v1514 = vmul.f32 %v1491, %v1512
      %v1515 = vmul.f32 %v1492, %v1512
      %v1516 = vmul.f32 %v1493, %v1512
      %v1517 = vmul.f32 %v1494, %v1512
      %v1518 = vmul.f32 %v1495, %v1512
      %v1519 = vmul.f32 %v1496, %v1512
      %v1520 = vmul.f32 %v1497, %v1512
      %v1521 = vmul.f32 %v1498, %v1512
      %v1522 = vmul.f32 %v1499, %v1512
      %v1523 = vmul.f32 %v1500, %v1512
      %v1524 = vmul.f32 %v1501, %v1512
      %v1525 = vmul.f32 %v1502, %v1512
      %v1526 = vmul.f32 %v1503, %v1512
      %v1527 = vmul.f32 %v1504, %v1512
      %v1528 = vmul.f32 %v1505, %v1512
      %v1529 = vmul.f32 %v1506, %v1512
      %v1530 = vld [vmem:[%s9] sm:$0x1]
      %v1532 = vlaneseq
      %v1533 = vshrl.u32 %v1532, 7
      %v1534 = vsub.s32 0, %v1533
      %v1535 = vrot.slane %v1530, %v1534
      %v1537 = vadd.f32 %v1514, %v1535
      %v1538 = vadd.f32 %v1515, %v1535
      %v1539 = vadd.f32 %v1516, %v1535
      %v1540 = vadd.f32 %v1517, %v1535
      %v1541 = vadd.f32 %v1518, %v1535
      %v1542 = vadd.f32 %v1519, %v1535
      %v1543 = vadd.f32 %v1520, %v1535
      %v1544 = vadd.f32 %v1521, %v1535
      %v1545 = vadd.f32 %v1522, %v1535
      %v1546 = vadd.f32 %v1523, %v1535
      %v1547 = vadd.f32 %v1524, %v1535
      %v1548 = vadd.f32 %v1525, %v1535
      %v1549 = vadd.f32 %v1526, %v1535
      %v1550 = vadd.f32 %v1527, %v1535
      %v1551 = vadd.f32 %v1528, %v1535
      %v1552 = vadd.f32 %v1529, %v1535
      %v1553 = vpack.c.bf16 %v1538, %v1537
      %v1554 = vpack.c.bf16 %v1540, %v1539
      %v1555 = vpack.c.bf16 %v1542, %v1541
      %v1556 = vpack.c.bf16 %v1544, %v1543
      %v1557 = vpack.c.bf16 %v1546, %v1545
      %v1558 = vpack.c.bf16 %v1548, %v1547
      %v1559 = vpack.c.bf16 %v1550, %v1549
      %v1560 = vpack.c.bf16 %v1552, %v1551
      %v1561 = vld [vmem:[%s10] sm:$0xf]
      %v1562 = vld [vmem:[%s10 + $0x4] sm:$0xf]
      %v1563 = vld [vmem:[%s10 + $0x8] sm:$0xf]
      %v1564 = vld [vmem:[%s10 + $0xc] sm:$0xf]
      %v1565 = vld [vmem:[%s10 + $0x10] sm:$0xf]
      %v1566 = vld [vmem:[%s10 + $0x14] sm:$0xf]
      %v1567 = vld [vmem:[%s10 + $0x18] sm:$0xf]
      %v1568 = vld [vmem:[%s10 + $0x1c] sm:$0xf]
      %v1569 = vld [vmem:[%s10 + $0x20] sm:$0xf]
      %v1570 = vld [vmem:[%s10 + $0x24] sm:$0xf]
      %v1571 = vld [vmem:[%s10 + $0x28] sm:$0xf]
      %v1572 = vld [vmem:[%s10 + $0x2c] sm:$0xf]
      %v1573 = vld [vmem:[%s10 + $0x30] sm:$0xf]
      %v1574 = vld [vmem:[%s10 + $0x34] sm:$0xf]
      %v1575 = vld [vmem:[%s10 + $0x38] sm:$0xf]
      %v1576 = vld [vmem:[%s10 + $0x3c] sm:$0xf]
      %v1577 = vld [vmem:[%s11] sm:$0x1]
      %v1579 = vlaneseq
      %v1580 = vshrl.u32 %v1579, 7
      %v1581 = vsub.s32 0, %v1580
      %v1582 = vrot.slane %v1577, %v1581
      %v1600 = vunpack.c.l.b16 %v1561
      %v1601 = vunpack.c.l.b16 %v1562
      %v1602 = vunpack.c.l.b16 %v1563
      %v1603 = vunpack.c.l.b16 %v1564
      %v1604 = vunpack.c.l.b16 %v1565
      %v1605 = vunpack.c.l.b16 %v1566
      %v1606 = vunpack.c.l.b16 %v1567
      %v1607 = vunpack.c.l.b16 %v1568
      %v1608 = vunpack.c.l.b16 %v1569
      %v1609 = vunpack.c.l.b16 %v1570
      %v1610 = vunpack.c.l.b16 %v1571
      %v1611 = vunpack.c.l.b16 %v1572
      %v1612 = vunpack.c.l.b16 %v1573
      %v1613 = vunpack.c.l.b16 %v1574
      %v1614 = vunpack.c.l.b16 %v1575
      %v1615 = vunpack.c.l.b16 %v1576
      %v1616 = vpack.c.b16 %v1601, %v1600
      %v1617 = vpack.c.b16 %v1603, %v1602
      %v1618 = vpack.c.b16 %v1605, %v1604
      %v1619 = vpack.c.b16 %v1607, %v1606
      %v1620 = vpack.c.b16 %v1609, %v1608
      %v1621 = vpack.c.b16 %v1611, %v1610
      %v1622 = vpack.c.b16 %v1613, %v1612
      %v1623 = vpack.c.b16 %v1615, %v1614
      %1632 = vmatprep.subr.bf16.mxu0 0
      %1633 = vmatpush1.bf16.msra.mxu0 %v1616
      %1634 = vmatprep.subr.bf16.mxu0 0
      %1635 = vmatpush1.bf16.msra.mxu0 %v1617
      %1636 = vmatprep.subr.bf16.mxu0 0
      %1637 = vmatpush1.bf16.msra.mxu0 %v1618
      %1638 = vmatprep.subr.bf16.mxu0 0
      %1639 = vmatpush1.bf16.msra.mxu0 %v1619
      %1640 = vmatprep.subr.bf16.mxu0 0
      %1641 = vmatpush1.bf16.msra.mxu0 %v1620
      %1642 = vmatprep.subr.bf16.mxu0 0
      %1643 = vmatpush1.bf16.msra.mxu0 %v1621
      %1644 = vmatprep.subr.bf16.mxu0 0
      %1645 = vmatpush1.bf16.msra.mxu0 %v1622
      %1646 = vmatprep.subr.bf16.mxu0 0
      %1647 = vmatpush1.bf16.msra.mxu0 %v1623
      %1648 = vmatprep.subr.bf16.mxu0 0
      %1649 = vmatpush1.bf16.msra.mxu0 0
      %1650 = vmatprep.subr.bf16.mxu0 0
      %1651 = vmatpush1.bf16.msra.mxu0 0
      %1652 = vmatprep.subr.bf16.mxu0 0
      %1653 = vmatpush1.bf16.msra.mxu0 0
      %1654 = vmatprep.subr.bf16.mxu0 0
      %1655 = vmatpush1.bf16.msra.mxu0 0
      %1656 = vmatprep.subr.bf16.mxu0 0
      %1657 = vmatpush1.bf16.msra.mxu0 0
      %1658 = vmatprep.subr.bf16.mxu0 0
      %1659 = vmatpush1.bf16.msra.mxu0 0
      %1660 = vmatprep.subr.bf16.mxu0 0
      %1661 = vmatpush1.bf16.msra.mxu0 0
      %1662 = vmatprep.subr.bf16.mxu0 0
      %1663 = vmatpush1.bf16.msra.mxu0 0
      %1664 = vmatprep.mubr.bf16.mxu0 0
      %1665 = vmatmul.mubr.bf16.gmra.mrb[0].mxu0 %v1553
      %v1666 = vpop.f32.mrb[0].mxu0
      %v1667 = vadd.f32 %v1582, %v1666
      %v1668 = vpop.f32.mrb[0].mxu0
      %v1669 = vpop.f32.mrb[0].mxu0
      %v1670 = vadd.f32 %v1582, %v1669
      %v1671 = vpop.f32.mrb[0].mxu0
      %1672 = vmatprep.mubr.bf16.mxu0 0
      %1673 = vmatmul.mubr.bf16.gmra.mrb[0].mxu0 %v1554
      %v1674 = vpop.f32.mrb[0].mxu0
      %v1675 = vadd.f32 %v1582, %v1674
      %v1676 = vpop.f32.mrb[0].mxu0
      %v1677 = vpop.f32.mrb[0].mxu0
      %v1678 = vadd.f32 %v1582, %v1677
      %v1679 = vpop.f32.mrb[0].mxu0
      %1680 = vmatprep.mubr.bf16.mxu0 0
      %1681 = vmatmul.mubr.bf16.gmra.mrb[0].mxu0 %v1555
      %v1682 = vpop.f32.mrb[0].mxu0
      %v1683 = vadd.f32 %v1582, %v1682
      %v1684 = vpop.f32.mrb[0].mxu0
      %v1685 = vpop.f32.mrb[0].mxu0
      %v1686 = vadd.f32 %v1582, %v1685
      %v1687 = vpop.f32.mrb[0].mxu0
      %1688 = vmatprep.mubr.bf16.mxu0 0
      %1689 = vmatmul.mubr.bf16.gmra.mrb[0].mxu0 %v1556
      %v1690 = vpop.f32.mrb[0].mxu0
      %v1691 = vadd.f32 %v1582, %v1690
      %v1692 = vpop.f32.mrb[0].mxu0
      %v1693 = vpop.f32.mrb[0].mxu0
      %v1694 = vadd.f32 %v1582, %v1693
      %v1695 = vpop.f32.mrb[0].mxu0
      %1696 = vmatprep.mubr.bf16.mxu0 0
      %1697 = vmatmul.mubr.bf16.gmra.mrb[0].mxu0 %v1557
      %v1698 = vpop.f32.mrb[0].mxu0
      %v1699 = vadd.f32 %v1582, %v1698
      %v1700 = vpop.f32.mrb[0].mxu0
      %v1701 = vpop.f32.mrb[0].mxu0
      %v1702 = vadd.f32 %v1582, %v1701
      %v1703 = vpop.f32.mrb[0].mxu0
      %1704 = vmatprep.mubr.bf16.mxu0 0
      %1705 = vmatmul.mubr.bf16.gmra.mrb[0].mxu0 %v1558
      %v1706 = vpop.f32.mrb[0].mxu0
      %v1707 = vadd.f32 %v1582, %v1706
      %v1708 = vpop.f32.mrb[0].mxu0
      %v1709 = vpop.f32.mrb[0].mxu0
      %v1710 = vadd.f32 %v1582, %v1709
      %v1711 = vpop.f32.mrb[0].mxu0
      %1712 = vmatprep.mubr.bf16.mxu0 0
      %1713 = vmatmul.mubr.bf16.gmra.mrb[0].mxu0 %v1559
      %v1714 = vpop.f32.mrb[0].mxu0
      %v1715 = vadd.f32 %v1582, %v1714
      %v1716 = vpop.f32.mrb[0].mxu0
      %v1717 = vpop.f32.mrb[0].mxu0
      %v1718 = vadd.f32 %v1582, %v1717
      %v1719 = vpop.f32.mrb[0].mxu0
      %1720 = vmatprep.mubr.bf16.mxu0 0
      %1721 = vmatmul.mubr.bf16.gmra.mrb[0].mxu0 %v1560
      %v1722 = vpop.f32.mrb[0].mxu0
      %v1723 = vadd.f32 %v1582, %v1722
      %v1724 = vpop.f32.mrb[0].mxu0
      %v1725 = vpop.f32.mrb[0].mxu0
      %v1726 = vadd.f32 %v1582, %v1725
      %v1727 = vpop.f32.mrb[0].mxu0
      %1728 = vdwg.mxu0
      %vm1729 = vcmp.gt.f32.partialorder %v1667, 0.0
      %vm1730 = vcmp.gt.f32.partialorder %v1670, 0.0
      %vm1731 = vcmp.gt.f32.partialorder %v1675, 0.0
      %vm1732 = vcmp.gt.f32.partialorder %v1678, 0.0
      %vm1733 = vcmp.gt.f32.partialorder %v1683, 0.0
      %vm1734 = vcmp.gt.f32.partialorder %v1686, 0.0
      %vm1735 = vcmp.gt.f32.partialorder %v1691, 0.0
      %vm1736 = vcmp.gt.f32.partialorder %v1694, 0.0
      %vm1737 = vcmp.gt.f32.partialorder %v1699, 0.0
      %vm1738 = vcmp.gt.f32.partialorder %v1702, 0.0
      %vm1739 = vcmp.gt.f32.partialorder %v1707, 0.0
      %vm1740 = vcmp.gt.f32.partialorder %v1710, 0.0
      %vm1741 = vcmp.gt.f32.partialorder %v1715, 0.0
      %vm1742 = vcmp.gt.f32.partialorder %v1718, 0.0
      %vm1743 = vcmp.gt.f32.partialorder %v1723, 0.0
      %vm1744 = vcmp.gt.f32.partialorder %v1726, 0.0
      %v1745 = vmul.f32 %v1667, 0.01
      %v1746 = vmul.f32 %v1670, 0.01
      %v1747 = vmul.f32 %v1675, 0.01
      %v1748 = vmul.f32 %v1678, 0.01
      %v1749 = vmul.f32 %v1683, 0.01
      %v1750 = vmul.f32 %v1686, 0.01
      %v1751 = vmul.f32 %v1691, 0.01
      %v1752 = vmul.f32 %v1694, 0.01
      %v1753 = vmul.f32 %v1699, 0.01
      %v1754 = vmul.f32 %v1702, 0.01
      %v1755 = vmul.f32 %v1707, 0.01
      %v1756 = vmul.f32 %v1710, 0.01
      %v1757 = vmul.f32 %v1715, 0.01
      %v1758 = vmul.f32 %v1718, 0.01
      %v1759 = vmul.f32 %v1723, 0.01
      %v1760 = vmul.f32 %v1726, 0.01
      %v1761 = vsel %vm1729, %v1667, %v1745
      %v1762 = vsel %vm1730, %v1670, %v1746
      %v1763 = vsel %vm1731, %v1675, %v1747
      %v1764 = vsel %vm1732, %v1678, %v1748
      %v1765 = vsel %vm1733, %v1683, %v1749
      %v1766 = vsel %vm1734, %v1686, %v1750
      %v1767 = vsel %vm1735, %v1691, %v1751
      %v1768 = vsel %vm1736, %v1694, %v1752
      %v1769 = vsel %vm1737, %v1699, %v1753
      %v1770 = vsel %vm1738, %v1702, %v1754
      %v1771 = vsel %vm1739, %v1707, %v1755
      %v1772 = vsel %vm1740, %v1710, %v1756
      %v1773 = vsel %vm1741, %v1715, %v1757
      %v1774 = vsel %vm1742, %v1718, %v1758
      %v1775 = vsel %vm1743, %v1723, %v1759
      %v1776 = vsel %vm1744, %v1726, %v1760
      %v1777 = vld [vmem:[%s12] sm:$0x1]
      %v1779 = vlaneseq
      %v1780 = vshrl.u32 %v1779, 7
      %v1781 = vsub.s32 0, %v1780
      %v1782 = vrot.slane %v1777, %v1781
      %v1784 = vmul.f32 %v1761, %v1782
      %v1785 = vmul.f32 %v1762, %v1782
      %v1786 = vmul.f32 %v1763, %v1782
      %v1787 = vmul.f32 %v1764, %v1782
      %v1788 = vmul.f32 %v1765, %v1782
      %v1789 = vmul.f32 %v1766, %v1782
      %v1790 = vmul.f32 %v1767, %v1782
      %v1791 = vmul.f32 %v1768, %v1782
      %v1792 = vmul.f32 %v1769, %v1782
      %v1793 = vmul.f32 %v1770, %v1782
      %v1794 = vmul.f32 %v1771, %v1782
      %v1795 = vmul.f32 %v1772, %v1782
      %v1796 = vmul.f32 %v1773, %v1782
      %v1797 = vmul.f32 %v1774, %v1782
      %v1798 = vmul.f32 %v1775, %v1782
      %v1799 = vmul.f32 %v1776, %v1782
      %v1800 = vld [vmem:[%s13] sm:$0x1]
      %v1802 = vlaneseq
      %v1803 = vshrl.u32 %v1802, 7
      %v1804 = vsub.s32 0, %v1803
      %v1805 = vrot.slane %v1800, %v1804
      %v1807 = vadd.f32 %v1784, %v1805
      %v1808 = vadd.f32 %v1785, %v1805
      %v1809 = vadd.f32 %v1786, %v1805
      %v1810 = vadd.f32 %v1787, %v1805
      %v1811 = vadd.f32 %v1788, %v1805
      %v1812 = vadd.f32 %v1789, %v1805
      %v1813 = vadd.f32 %v1790, %v1805
      %v1814 = vadd.f32 %v1791, %v1805
      %v1815 = vadd.f32 %v1792, %v1805
      %v1816 = vadd.f32 %v1793, %v1805
      %v1817 = vadd.f32 %v1794, %v1805
      %v1818 = vadd.f32 %v1795, %v1805
      %v1819 = vadd.f32 %v1796, %v1805
      %v1820 = vadd.f32 %v1797, %v1805
      %v1821 = vadd.f32 %v1798, %v1805
      %v1822 = vadd.f32 %v1799, %v1805
      %v1823 = vpack.c.bf16 %v1808, %v1807
      %v1824 = vpack.c.bf16 %v1810, %v1809
      %v1825 = vpack.c.bf16 %v1812, %v1811
      %v1826 = vpack.c.bf16 %v1814, %v1813
      %v1827 = vpack.c.bf16 %v1816, %v1815
      %v1828 = vpack.c.bf16 %v1818, %v1817
      %v1829 = vpack.c.bf16 %v1820, %v1819
      %v1830 = vpack.c.bf16 %v1822, %v1821
      %v1831 = vld [vmem:[%s14] sm:$0xf]
      %v1832 = vld [vmem:[%s14 + $0x4] sm:$0xf]
      %v1833 = vld [vmem:[%s14 + $0x8] sm:$0xf]
      %v1834 = vld [vmem:[%s14 + $0xc] sm:$0xf]
      %v1835 = vld [vmem:[%s14 + $0x10] sm:$0xf]
      %v1836 = vld [vmem:[%s14 + $0x14] sm:$0xf]
      %v1837 = vld [vmem:[%s14 + $0x18] sm:$0xf]
      %v1838 = vld [vmem:[%s14 + $0x1c] sm:$0xf]
      %v1839 = vld [vmem:[%s14 + $0x20] sm:$0xf]
      %v1840 = vld [vmem:[%s14 + $0x24] sm:$0xf]
      %v1841 = vld [vmem:[%s14 + $0x28] sm:$0xf]
      %v1842 = vld [vmem:[%s14 + $0x2c] sm:$0xf]
      %v1843 = vld [vmem:[%s14 + $0x30] sm:$0xf]
      %v1844 = vld [vmem:[%s14 + $0x34] sm:$0xf]
      %v1845 = vld [vmem:[%s14 + $0x38] sm:$0xf]
      %v1846 = vld [vmem:[%s14 + $0x3c] sm:$0xf]
      %v1847 = vld [vmem:[%s15] sm:$0x1]
      %v1849 = vlaneseq
      %v1850 = vshrl.u32 %v1849, 7
      %v1851 = vsub.s32 0, %v1850
      %v1852 = vrot.slane %v1847, %v1851
      %v1870 = vunpack.c.l.b16 %v1831
      %v1871 = vunpack.c.l.b16 %v1832
      %v1872 = vunpack.c.l.b16 %v1833
      %v1873 = vunpack.c.l.b16 %v1834
      %v1874 = vunpack.c.l.b16 %v1835
      %v1875 = vunpack.c.l.b16 %v1836
      %v1876 = vunpack.c.l.b16 %v1837
      %v1877 = vunpack.c.l.b16 %v1838
      %v1878 = vunpack.c.l.b16 %v1839
      %v1879 = vunpack.c.l.b16 %v1840
      %v1880 = vunpack.c.l.b16 %v1841
      %v1881 = vunpack.c.l.b16 %v1842
      %v1882 = vunpack.c.l.b16 %v1843
      %v1883 = vunpack.c.l.b16 %v1844
      %v1884 = vunpack.c.l.b16 %v1845
      %v1885 = vunpack.c.l.b16 %v1846
      %v1886 = vpack.c.b16 %v1871, %v1870
      %v1887 = vpack.c.b16 %v1873, %v1872
      %v1888 = vpack.c.b16 %v1875, %v1874
      %v1889 = vpack.c.b16 %v1877, %v1876
      %v1890 = vpack.c.b16 %v1879, %v1878
      %v1891 = vpack.c.b16 %v1881, %v1880
      %v1892 = vpack.c.b16 %v1883, %v1882
      %v1893 = vpack.c.b16 %v1885, %v1884
      %1902 = vmatprep.subr.bf16.mxu0 0
      %1903 = vmatpush1.bf16.msra.mxu0 %v1886
      %1904 = vmatprep.subr.bf16.mxu0 0
      %1905 = vmatpush1.bf16.msra.mxu0 %v1887
      %1906 = vmatprep.subr.bf16.mxu0 0
      %1907 = vmatpush1.bf16.msra.mxu0 %v1888
      %1908 = vmatprep.subr.bf16.mxu0 0
      %1909 = vmatpush1.bf16.msra.mxu0 %v1889
      %1910 = vmatprep.subr.bf16.mxu0 0
      %1911 = vmatpush1.bf16.msra.mxu0 %v1890
      %1912 = vmatprep.subr.bf16.mxu0 0
      %1913 = vmatpush1.bf16.msra.mxu0 %v1891
      %1914 = vmatprep.subr.bf16.mxu0 0
      %1915 = vmatpush1.bf16.msra.mxu0 %v1892
      %1916 = vmatprep.subr.bf16.mxu0 0
      %1917 = vmatpush1.bf16.msra.mxu0 %v1893
      %1918 = vmatprep.subr.bf16.mxu0 0
      %1919 = vmatpush1.bf16.msra.mxu0 0
      %1920 = vmatprep.subr.bf16.mxu0 0
      %1921 = vmatpush1.bf16.msra.mxu0 0
      %1922 = vmatprep.subr.bf16.mxu0 0
      %1923 = vmatpush1.bf16.msra.mxu0 0
      %1924 = vmatprep.subr.bf16.mxu0 0
      %1925 = vmatpush1.bf16.msra.mxu0 0
      %1926 = vmatprep.subr.bf16.mxu0 0
      %1927 = vmatpush1.bf16.msra.mxu0 0
      %1928 = vmatprep.subr.bf16.mxu0 0
      %1929 = vmatpush1.bf16.msra.mxu0 0
      %1930 = vmatprep.subr.bf16.mxu0 0
      %1931 = vmatpush1.bf16.msra.mxu0 0
      %1932 = vmatprep.subr.bf16.mxu0 0
      %1933 = vmatpush1.bf16.msra.mxu0 0
      %1934 = vmatprep.mubr.bf16.mxu0 0
      %1935 = vmatmul.mubr.bf16.gmra.mrb[0].mxu0 %v1823
      %v1936 = vpop.f32.mrb[0].mxu0
      %v1937 = vadd.f32 %v1852, %v1936
      %v1938 = vpop.f32.mrb[0].mxu0
      %v1939 = vpop.f32.mrb[0].mxu0
      %v1940 = vadd.f32 %v1852, %v1939
      %v1941 = vpop.f32.mrb[0].mxu0
      %1942 = vmatprep.mubr.bf16.mxu0 0
      %1943 = vmatmul.mubr.bf16.gmra.mrb[0].mxu0 %v1824
      %v1944 = vpop.f32.mrb[0].mxu0
      %v1945 = vadd.f32 %v1852, %v1944
      %v1946 = vpop.f32.mrb[0].mxu0
      %v1947 = vpop.f32.mrb[0].mxu0
      %v1948 = vadd.f32 %v1852, %v1947
      %v1949 = vpop.f32.mrb[0].mxu0
      %1950 = vmatprep.mubr.bf16.mxu0 0
      %1951 = vmatmul.mubr.bf16.gmra.mrb[0].mxu0 %v1825
      %v1952 = vpop.f32.mrb[0].mxu0
      %v1953 = vadd.f32 %v1852, %v1952
      %v1954 = vpop.f32.mrb[0].mxu0
      %v1955 = vpop.f32.mrb[0].mxu0
      %v1956 = vadd.f32 %v1852, %v1955
      %v1957 = vpop.f32.mrb[0].mxu0
      %1958 = vmatprep.mubr.bf16.mxu0 0
      %1959 = vmatmul.mubr.bf16.gmra.mrb[0].mxu0 %v1826
      %v1960 = vpop.f32.mrb[0].mxu0
      %v1961 = vadd.f32 %v1852, %v1960
      %v1962 = vpop.f32.mrb[0].mxu0
      %v1963 = vpop.f32.mrb[0].mxu0
      %v1964 = vadd.f32 %v1852, %v1963
      %v1965 = vpop.f32.mrb[0].mxu0
      %1966 = vmatprep.mubr.bf16.mxu0 0
      %1967 = vmatmul.mubr.bf16.gmra.mrb[0].mxu0 %v1827
      %v1968 = vpop.f32.mrb[0].mxu0
      %v1969 = vadd.f32 %v1852, %v1968
      %v1970 = vpop.f32.mrb[0].mxu0
      %v1971 = vpop.f32.mrb[0].mxu0
      %v1972 = vadd.f32 %v1852, %v1971
      %v1973 = vpop.f32.mrb[0].mxu0
      %1974 = vmatprep.mubr.bf16.mxu0 0
      %1975 = vmatmul.mubr.bf16.gmra.mrb[0].mxu0 %v1828
      %v1976 = vpop.f32.mrb[0].mxu0
      %v1977 = vadd.f32 %v1852, %v1976
      %v1978 = vpop.f32.mrb[0].mxu0
      %v1979 = vpop.f32.mrb[0].mxu0
      %v1980 = vadd.f32 %v1852, %v1979
      %v1981 = vpop.f32.mrb[0].mxu0
      %1982 = vmatprep.mubr.bf16.mxu0 0
      %1983 = vmatmul.mubr.bf16.gmra.mrb[0].mxu0 %v1829
      %v1984 = vpop.f32.mrb[0].mxu0
      %v1985 = vadd.f32 %v1852, %v1984
      %v1986 = vpop.f32.mrb[0].mxu0
      %v1987 = vpop.f32.mrb[0].mxu0
      %v1988 = vadd.f32 %v1852, %v1987
      %v1989 = vpop.f32.mrb[0].mxu0
      %1990 = vmatprep.mubr.bf16.mxu0 0
      %1991 = vmatmul.mubr.bf16.gmra.mrb[0].mxu0 %v1830
      %v1992 = vpop.f32.mrb[0].mxu0
      %v1993 = vadd.f32 %v1852, %v1992
      %v1994 = vpop.f32.mrb[0].mxu0
      %v1995 = vpop.f32.mrb[0].mxu0
      %v1996 = vadd.f32 %v1852, %v1995
      %v1997 = vpop.f32.mrb[0].mxu0
      %1998 = vdwg.mxu0
      %1999 = vst [vmem:[%s905] sm:$0xff] %v1937
      %2000 = vst [vmem:[%s905 + $0x8] sm:$0xff] %v1940
      %2001 = vst [vmem:[%s905 + $0x10] sm:$0xff] %v1945
      %2002 = vst [vmem:[%s905 + $0x18] sm:$0xff] %v1948
      %2003 = vst [vmem:[%s905 + $0x20] sm:$0xff] %v1953
      %2004 = vst [vmem:[%s905 + $0x28] sm:$0xff] %v1956
      %2005 = vst [vmem:[%s905 + $0x30] sm:$0xff] %v1961
      %2006 = vst [vmem:[%s905 + $0x38] sm:$0xff] %v1964
      %2007 = vst [vmem:[%s905 + $0x40] sm:$0xff] %v1969
      %2008 = vst [vmem:[%s905 + $0x48] sm:$0xff] %v1972
      %2009 = vst [vmem:[%s905 + $0x50] sm:$0xff] %v1977
      %2010 = vst [vmem:[%s905 + $0x58] sm:$0xff] %v1980
      %2011 = vst [vmem:[%s905 + $0x60] sm:$0xff] %v1985
      %2012 = vst [vmem:[%s905 + $0x68] sm:$0xff] %v1988
      %2013 = vst [vmem:[%s905 + $0x70] sm:$0xff] %v1993
      %2014 = vst [vmem:[%s905 + $0x78] sm:$0xff] %v1996
      %v2015 = vld [vmem:[%s892] sm:$0xff]
      %v2016 = vld [vmem:[%s892 + $0x8] sm:$0xff]
      %v2017 = vld [vmem:[%s892 + $0x10] sm:$0xff]
      %v2018 = vld [vmem:[%s892 + $0x18] sm:$0xff]
      %v2019 = vld [vmem:[%s892 + $0x20] sm:$0xff]
      %v2020 = vld [vmem:[%s892 + $0x28] sm:$0xff]
      %v2021 = vld [vmem:[%s892 + $0x30] sm:$0xff]
      %v2022 = vld [vmem:[%s892 + $0x38] sm:$0xff]
      %v2023 = vld [vmem:[%s892 + $0x40] sm:$0xff]
      %v2024 = vld [vmem:[%s892 + $0x48] sm:$0xff]
      %v2025 = vld [vmem:[%s892 + $0x50] sm:$0xff]
      %v2026 = vld [vmem:[%s892 + $0x58] sm:$0xff]
      %v2027 = vld [vmem:[%s892 + $0x60] sm:$0xff]
      %v2028 = vld [vmem:[%s892 + $0x68] sm:$0xff]
      %v2029 = vld [vmem:[%s892 + $0x70] sm:$0xff]
      %v2030 = vld [vmem:[%s892 + $0x78] sm:$0xff]
      %v2031 = vadd.f32 %v1937, %v2015
      %v2032 = vadd.f32 %v1940, %v2016
      %v2033 = vadd.f32 %v1945, %v2017
      %v2034 = vadd.f32 %v1948, %v2018
      %v2035 = vadd.f32 %v1953, %v2019
      %v2036 = vadd.f32 %v1956, %v2020
      %v2037 = vadd.f32 %v1961, %v2021
      %v2038 = vadd.f32 %v1964, %v2022
      %v2039 = vadd.f32 %v1969, %v2023
      %v2040 = vadd.f32 %v1972, %v2024
      %v2041 = vadd.f32 %v1977, %v2025
      %v2042 = vadd.f32 %v1980, %v2026
      %v2043 = vadd.f32 %v1985, %v2027
      %v2044 = vadd.f32 %v1988, %v2028
      %v2045 = vadd.f32 %v1993, %v2029
      %v2046 = vadd.f32 %v1996, %v2030
      %v2047 = vpack.c.bf16 %v2032, %v2031
      %v2048 = vpack.c.bf16 %v2034, %v2033
      %v2049 = vpack.c.bf16 %v2036, %v2035
      %v2050 = vpack.c.bf16 %v2038, %v2037
      %v2051 = vpack.c.bf16 %v2040, %v2039
      %v2052 = vpack.c.bf16 %v2042, %v2041
      %v2053 = vpack.c.bf16 %v2044, %v2043
      %v2054 = vpack.c.bf16 %v2046, %v2045
      %v2055 = vld [vmem:[%s16] sm:$0xf]
      %v2056 = vld [vmem:[%s16 + $0x4] sm:$0xf]
      %v2057 = vld [vmem:[%s16 + $0x8] sm:$0xf]
      %v2058 = vld [vmem:[%s16 + $0xc] sm:$0xf]
      %v2059 = vld [vmem:[%s17] sm:$0x1]
      %v2061 = vlaneseq
      %v2062 = vshrl.u32 %v2061, 7
      %v2063 = vsub.s32 0, %v2062
      %v2064 = vrot.slane %v2059, %v2063
      %v2070 = vunpack.c.l.b16 %v2055
      %v2071 = vunpack.c.l.b16 %v2056
      %v2072 = vunpack.c.l.b16 %v2057
      %v2073 = vunpack.c.l.b16 %v2058
      %v2074 = vpack.c.b16 %v2071, %v2070
      %v2075 = vpack.c.b16 %v2073, %v2072
      %vm2078 = vcmask 261120
      %v2080 = vsel %vm2078, %v2047, 0
      %v2083 = vsel %vm2078, %v2048, 0
      %v2086 = vsel %vm2078, %v2049, 0
      %v2089 = vsel %vm2078, %v2050, 0
      %v2092 = vsel %vm2078, %v2051, 0
      %v2095 = vsel %vm2078, %v2052, 0
      %v2098 = vsel %vm2078, %v2053, 0
      %v2101 = vsel %vm2078, %v2054, 0
      %2103 = vmatprep.subr.bf16.mxu0 0
      %2104 = vmatpush1.bf16.msra.mxu0 %v2074
      %2105 = vmatprep.subr.bf16.mxu0 0
      %2106 = vmatpush1.bf16.msra.mxu0 %v2075
      %2107 = vmatprep.subr.bf16.mxu0 0
      %2108 = vmatpush1.bf16.msra.mxu0 0
      %2109 = vmatprep.subr.bf16.mxu0 0
      %2110 = vmatpush1.bf16.msra.mxu0 0
      %2111 = vmatprep.subr.bf16.mxu0 0
      %2112 = vmatpush1.bf16.msra.mxu0 0
      %2113 = vmatprep.subr.bf16.mxu0 0
      %2114 = vmatpush1.bf16.msra.mxu0 0
      %2115 = vmatprep.subr.bf16.mxu0 0
      %2116 = vmatpush1.bf16.msra.mxu0 0
      %2117 = vmatprep.subr.bf16.mxu0 0
      %2118 = vmatpush1.bf16.msra.mxu0 0
      %2119 = vmatprep.subr.bf16.mxu0 0
      %2120 = vmatpush1.bf16.msra.mxu0 0
      %2121 = vmatprep.subr.bf16.mxu0 0
      %2122 = vmatpush1.bf16.msra.mxu0 0
      %2123 = vmatprep.subr.bf16.mxu0 0
      %2124 = vmatpush1.bf16.msra.mxu0 0
      %2125 = vmatprep.subr.bf16.mxu0 0
      %2126 = vmatpush1.bf16.msra.mxu0 0
      %2127 = vmatprep.subr.bf16.mxu0 0
      %2128 = vmatpush1.bf16.msra.mxu0 0
      %2129 = vmatprep.subr.bf16.mxu0 0
      %2130 = vmatpush1.bf16.msra.mxu0 0
      %2131 = vmatprep.subr.bf16.mxu0 0
      %2132 = vmatpush1.bf16.msra.mxu0 0
      %2133 = vmatprep.subr.bf16.mxu0 0
      %2134 = vmatpush1.bf16.msra.mxu0 0
      %2135 = vmatprep.mubr.bf16.mxu0 0
      %2136 = vmatmul.mubr.bf16.gmra.mrb[0].mxu0 %v2080
      %v2137 = vpop.f32.mrb[0].mxu0
      %v2138 = vadd.f32 %v2064, %v2137
      %v2139 = vpop.f32.mrb[0].mxu0
      %v2140 = vpop.f32.mrb[0].mxu0
      %v2141 = vadd.f32 %v2064, %v2140
      %v2142 = vpop.f32.mrb[0].mxu0
      %2143 = vmatprep.mubr.bf16.mxu0 0
      %2144 = vmatmul.mubr.bf16.gmra.mrb[0].mxu0 %v2083
      %v2145 = vpop.f32.mrb[0].mxu0
      %v2146 = vadd.f32 %v2064, %v2145
      %v2147 = vpop.f32.mrb[0].mxu0
      %v2148 = vpop.f32.mrb[0].mxu0
      %v2149 = vadd.f32 %v2064, %v2148
      %v2150 = vpop.f32.mrb[0].mxu0
      %2151 = vmatprep.mubr.bf16.mxu0 0
      %2152 = vmatmul.mubr.bf16.gmra.mrb[0].mxu0 %v2086
      %v2153 = vpop.f32.mrb[0].mxu0
      %v2154 = vadd.f32 %v2064, %v2153
      %v2155 = vpop.f32.mrb[0].mxu0
      %v2156 = vpop.f32.mrb[0].mxu0
      %v2157 = vadd.f32 %v2064, %v2156
      %v2158 = vpop.f32.mrb[0].mxu0
      %2159 = vmatprep.mubr.bf16.mxu0 0
      %2160 = vmatmul.mubr.bf16.gmra.mrb[0].mxu0 %v2089
      %v2161 = vpop.f32.mrb[0].mxu0
      %v2162 = vadd.f32 %v2064, %v2161
      %v2163 = vpop.f32.mrb[0].mxu0
      %v2164 = vpop.f32.mrb[0].mxu0
      %v2165 = vadd.f32 %v2064, %v2164
      %v2166 = vpop.f32.mrb[0].mxu0
      %2167 = vmatprep.mubr.bf16.mxu0 0
      %2168 = vmatmul.mubr.bf16.gmra.mrb[0].mxu0 %v2092
      %v2169 = vpop.f32.mrb[0].mxu0
      %v2170 = vadd.f32 %v2064, %v2169
      %v2171 = vpop.f32.mrb[0].mxu0
      %v2172 = vpop.f32.mrb[0].mxu0
      %v2173 = vadd.f32 %v2064, %v2172
      %v2174 = vpop.f32.mrb[0].mxu0
      %2175 = vmatprep.mubr.bf16.mxu0 0
      %2176 = vmatmul.mubr.bf16.gmra.mrb[0].mxu0 %v2095
      %v2177 = vpop.f32.mrb[0].mxu0
      %v2178 = vadd.f32 %v2064, %v2177
      %v2179 = vpop.f32.mrb[0].mxu0
      %v2180 = vpop.f32.mrb[0].mxu0
      %v2181 = vadd.f32 %v2064, %v2180
      %v2182 = vpop.f32.mrb[0].mxu0
      %2183 = vmatprep.mubr.bf16.mxu0 0
      %2184 = vmatmul.mubr.bf16.gmra.mrb[0].mxu0 %v2098
      %v2185 = vpop.f32.mrb[0].mxu0
      %v2186 = vadd.f32 %v2064, %v2185
      %v2187 = vpop.f32.mrb[0].mxu0
      %v2188 = vpop.f32.mrb[0].mxu0
      %v2189 = vadd.f32 %v2064, %v2188
      %v2190 = vpop.f32.mrb[0].mxu0
      %2191 = vmatprep.mubr.bf16.mxu0 0
      %2192 = vmatmul.mubr.bf16.gmra.mrb[0].mxu0 %v2101
      %v2193 = vpop.f32.mrb[0].mxu0
      %v2194 = vadd.f32 %v2064, %v2193
      %v2195 = vpop.f32.mrb[0].mxu0
      %v2196 = vpop.f32.mrb[0].mxu0
      %v2197 = vadd.f32 %v2064, %v2196
      %v2198 = vpop.f32.mrb[0].mxu0
      %2199 = vdwg.mxu0
      %vm2200 = vcmp.gt.f32.partialorder %v2138, 0.0
      %vm2201 = vcmp.gt.f32.partialorder %v2141, 0.0
      %vm2202 = vcmp.gt.f32.partialorder %v2146, 0.0
      %vm2203 = vcmp.gt.f32.partialorder %v2149, 0.0
      %vm2204 = vcmp.gt.f32.partialorder %v2154, 0.0
      %vm2205 = vcmp.gt.f32.partialorder %v2157, 0.0
      %vm2206 = vcmp.gt.f32.partialorder %v2162, 0.0
      %vm2207 = vcmp.gt.f32.partialorder %v2165, 0.0
      %vm2208 = vcmp.gt.f32.partialorder %v2170, 0.0
      %vm2209 = vcmp.gt.f32.partialorder %v2173, 0.0
      %vm2210 = vcmp.gt.f32.partialorder %v2178, 0.0
      %vm2211 = vcmp.gt.f32.partialorder %v2181, 0.0
      %vm2212 = vcmp.gt.f32.partialorder %v2186, 0.0
      %vm2213 = vcmp.gt.f32.partialorder %v2189, 0.0
      %vm2214 = vcmp.gt.f32.partialorder %v2194, 0.0
      %vm2215 = vcmp.gt.f32.partialorder %v2197, 0.0
      %v2216 = vmul.f32 %v2138, 0.01
      %v2217 = vmul.f32 %v2141, 0.01
      %v2218 = vmul.f32 %v2146, 0.01
      %v2219 = vmul.f32 %v2149, 0.01
      %v2220 = vmul.f32 %v2154, 0.01
      %v2221 = vmul.f32 %v2157, 0.01
      %v2222 = vmul.f32 %v2162, 0.01
      %v2223 = vmul.f32 %v2165, 0.01
      %v2224 = vmul.f32 %v2170, 0.01
      %v2225 = vmul.f32 %v2173, 0.01
      %v2226 = vmul.f32 %v2178, 0.01
      %v2227 = vmul.f32 %v2181, 0.01
      %v2228 = vmul.f32 %v2186, 0.01
      %v2229 = vmul.f32 %v2189, 0.01
      %v2230 = vmul.f32 %v2194, 0.01
      %v2231 = vmul.f32 %v2197, 0.01
      %v2232 = vsel %vm2200, %v2138, %v2216
      %v2233 = vsel %vm2201, %v2141, %v2217
      %v2234 = vsel %vm2202, %v2146, %v2218
      %v2235 = vsel %vm2203, %v2149, %v2219
      %v2236 = vsel %vm2204, %v2154, %v2220
      %v2237 = vsel %vm2205, %v2157, %v2221
      %v2238 = vsel %vm2206, %v2162, %v2222
      %v2239 = vsel %vm2207, %v2165, %v2223
      %v2240 = vsel %vm2208, %v2170, %v2224
      %v2241 = vsel %vm2209, %v2173, %v2225
      %v2242 = vsel %vm2210, %v2178, %v2226
      %v2243 = vsel %vm2211, %v2181, %v2227
      %v2244 = vsel %vm2212, %v2186, %v2228
      %v2245 = vsel %vm2213, %v2189, %v2229
      %v2246 = vsel %vm2214, %v2194, %v2230
      %v2247 = vsel %vm2215, %v2197, %v2231
      %v2248 = vld [vmem:[%s18] sm:$0x1]
      %v2250 = vlaneseq
      %v2251 = vshrl.u32 %v2250, 7
      %v2252 = vsub.s32 0, %v2251
      %v2253 = vrot.slane %v2248, %v2252
      %v2255 = vmul.f32 %v2232, %v2253
      %v2256 = vmul.f32 %v2233, %v2253
      %v2257 = vmul.f32 %v2234, %v2253
      %v2258 = vmul.f32 %v2235, %v2253
      %v2259 = vmul.f32 %v2236, %v2253
      %v2260 = vmul.f32 %v2237, %v2253
      %v2261 = vmul.f32 %v2238, %v2253
      %v2262 = vmul.f32 %v2239, %v2253
      %v2263 = vmul.f32 %v2240, %v2253
      %v2264 = vmul.f32 %v2241, %v2253
      %v2265 = vmul.f32 %v2242, %v2253
      %v2266 = vmul.f32 %v2243, %v2253
      %v2267 = vmul.f32 %v2244, %v2253
      %v2268 = vmul.f32 %v2245, %v2253
      %v2269 = vmul.f32 %v2246, %v2253
      %v2270 = vmul.f32 %v2247, %v2253
      %v2271 = vld [vmem:[%s19] sm:$0x1]
      %v2273 = vlaneseq
      %v2274 = vshrl.u32 %v2273, 7
      %v2275 = vsub.s32 0, %v2274
      %v2276 = vrot.slane %v2271, %v2275
      %v2278 = vadd.f32 %v2255, %v2276
      %v2279 = vadd.f32 %v2256, %v2276
      %v2280 = vadd.f32 %v2257, %v2276
      %v2281 = vadd.f32 %v2258, %v2276
      %v2282 = vadd.f32 %v2259, %v2276
      %v2283 = vadd.f32 %v2260, %v2276
      %v2284 = vadd.f32 %v2261, %v2276
      %v2285 = vadd.f32 %v2262, %v2276
      %v2286 = vadd.f32 %v2263, %v2276
      %v2287 = vadd.f32 %v2264, %v2276
      %v2288 = vadd.f32 %v2265, %v2276
      %v2289 = vadd.f32 %v2266, %v2276
      %v2290 = vadd.f32 %v2267, %v2276
      %v2291 = vadd.f32 %v2268, %v2276
      %v2292 = vadd.f32 %v2269, %v2276
      %v2293 = vadd.f32 %v2270, %v2276
      %v2294 = vpack.c.bf16 %v2279, %v2278
      %v2295 = vpack.c.bf16 %v2281, %v2280
      %v2296 = vpack.c.bf16 %v2283, %v2282
      %v2297 = vpack.c.bf16 %v2285, %v2284
      %v2298 = vpack.c.bf16 %v2287, %v2286
      %v2299 = vpack.c.bf16 %v2289, %v2288
      %v2300 = vpack.c.bf16 %v2291, %v2290
      %v2301 = vpack.c.bf16 %v2293, %v2292
      %v2302 = vld [vmem:[%s20] sm:$0xf]
      %v2303 = vld [vmem:[%s20 + $0x4] sm:$0xf]
      %v2304 = vld [vmem:[%s20 + $0x8] sm:$0xf]
      %v2305 = vld [vmem:[%s20 + $0xc] sm:$0xf]
      %v2306 = vld [vmem:[%s20 + $0x10] sm:$0xf]
      %v2307 = vld [vmem:[%s20 + $0x14] sm:$0xf]
      %v2308 = vld [vmem:[%s20 + $0x18] sm:$0xf]
      %v2309 = vld [vmem:[%s20 + $0x1c] sm:$0xf]
      %v2310 = vld [vmem:[%s20 + $0x20] sm:$0xf]
      %v2311 = vld [vmem:[%s20 + $0x24] sm:$0xf]
      %v2312 = vld [vmem:[%s20 + $0x28] sm:$0xf]
      %v2313 = vld [vmem:[%s20 + $0x2c] sm:$0xf]
      %v2314 = vld [vmem:[%s20 + $0x30] sm:$0xf]
      %v2315 = vld [vmem:[%s20 + $0x34] sm:$0xf]
      %v2316 = vld [vmem:[%s20 + $0x38] sm:$0xf]
      %v2317 = vld [vmem:[%s20 + $0x3c] sm:$0xf]
      %v2318 = vld [vmem:[%s21] sm:$0x1]
      %v2320 = vlaneseq
      %v2321 = vshrl.u32 %v2320, 7
      %v2322 = vsub.s32 0, %v2321
      %v2323 = vrot.slane %v2318, %v2322
      %v2341 = vunpack.c.l.b16 %v2302
      %v2342 = vunpack.c.l.b16 %v2303
      %v2343 = vunpack.c.l.b16 %v2304
      %v2344 = vunpack.c.l.b16 %v2305
      %v2345 = vunpack.c.l.b16 %v2306
      %v2346 = vunpack.c.l.b16 %v2307
      %v2347 = vunpack.c.l.b16 %v2308
      %v2348 = vunpack.c.l.b16 %v2309
      %v2349 = vunpack.c.l.b16 %v2310
      %v2350 = vunpack.c.l.b16 %v2311
      %v2351 = vunpack.c.l.b16 %v2312
      %v2352 = vunpack.c.l.b16 %v2313
      %v2353 = vunpack.c.l.b16 %v2314
      %v2354 = vunpack.c.l.b16 %v2315
      %v2355 = vunpack.c.l.b16 %v2316
      %v2356 = vunpack.c.l.b16 %v2317
      %v2357 = vpack.c.b16 %v2342, %v2341
      %v2358 = vpack.c.b16 %v2344, %v2343
      %v2359 = vpack.c.b16 %v2346, %v2345
      %v2360 = vpack.c.b16 %v2348, %v2347
      %v2361 = vpack.c.b16 %v2350, %v2349
      %v2362 = vpack.c.b16 %v2352, %v2351
      %v2363 = vpack.c.b16 %v2354, %v2353
      %v2364 = vpack.c.b16 %v2356, %v2355
      %2373 = vmatprep.subr.bf16.mxu0 0
      %2374 = vmatpush1.bf16.msra.mxu0 %v2357
      %2375 = vmatprep.subr.bf16.mxu0 0
      %2376 = vmatpush1.bf16.msra.mxu0 %v2358
      %2377 = vmatprep.subr.bf16.mxu0 0
      %2378 = vmatpush1.bf16.msra.mxu0 %v2359
      %2379 = vmatprep.subr.bf16.mxu0 0
      %2380 = vmatpush1.bf16.msra.mxu0 %v2360
      %2381 = vmatprep.subr.bf16.mxu0 0
      %2382 = vmatpush1.bf16.msra.mxu0 %v2361
      %2383 = vmatprep.subr.bf16.mxu0 0
      %2384 = vmatpush1.bf16.msra.mxu0 %v2362
      %2385 = vmatprep.subr.bf16.mxu0 0
      %2386 = vmatpush1.bf16.msra.mxu0 %v2363
      %2387 = vmatprep.subr.bf16.mxu0 0
      %2388 = vmatpush1.bf16.msra.mxu0 %v2364
      %2389 = vmatprep.subr.bf16.mxu0 0
      %2390 = vmatpush1.bf16.msra.mxu0 0
      %2391 = vmatprep.subr.bf16.mxu0 0
      %2392 = vmatpush1.bf16.msra.mxu0 0
      %2393 = vmatprep.subr.bf16.mxu0 0
      %2394 = vmatpush1.bf16.msra.mxu0 0
      %2395 = vmatprep.subr.bf16.mxu0 0
      %2396 = vmatpush1.bf16.msra.mxu0 0
      %2397 = vmatprep.subr.bf16.mxu0 0
      %2398 = vmatpush1.bf16.msra.mxu0 0
      %2399 = vmatprep.subr.bf16.mxu0 0
      %2400 = vmatpush1.bf16.msra.mxu0 0
      %2401 = vmatprep.subr.bf16.mxu0 0
      %2402 = vmatpush1.bf16.msra.mxu0 0
      %2403 = vmatprep.subr.bf16.mxu0 0
      %2404 = vmatpush1.bf16.msra.mxu0 0
      %2405 = vmatprep.mubr.bf16.mxu0 0
      %2406 = vmatmul.mubr.bf16.gmra.mrb[0].mxu0 %v2294
      %v2407 = vpop.f32.mrb[0].mxu0
      %v2408 = vadd.f32 %v2323, %v2407
      %v2409 = vpop.f32.mrb[0].mxu0
      %v2410 = vpop.f32.mrb[0].mxu0
      %v2411 = vadd.f32 %v2323, %v2410
      %v2412 = vpop.f32.mrb[0].mxu0
      %2413 = vmatprep.mubr.bf16.mxu0 0
      %2414 = vmatmul.mubr.bf16.gmra.mrb[0].mxu0 %v2295
      %v2415 = vpop.f32.mrb[0].mxu0
      %v2416 = vadd.f32 %v2323, %v2415
      %v2417 = vpop.f32.mrb[0].mxu0
      %v2418 = vpop.f32.mrb[0].mxu0
      %v2419 = vadd.f32 %v2323, %v2418
      %v2420 = vpop.f32.mrb[0].mxu0
      %2421 = vmatprep.mubr.bf16.mxu0 0
      %2422 = vmatmul.mubr.bf16.gmra.mrb[0].mxu0 %v2296
      %v2423 = vpop.f32.mrb[0].mxu0
      %v2424 = vadd.f32 %v2323, %v2423
      %v2425 = vpop.f32.mrb[0].mxu0
      %v2426 = vpop.f32.mrb[0].mxu0
      %v2427 = vadd.f32 %v2323, %v2426
      %v2428 = vpop.f32.mrb[0].mxu0
      %2429 = vmatprep.mubr.bf16.mxu0 0
      %2430 = vmatmul.mubr.bf16.gmra.mrb[0].mxu0 %v2297
      %v2431 = vpop.f32.mrb[0].mxu0
      %v2432 = vadd.f32 %v2323, %v2431
      %v2433 = vpop.f32.mrb[0].mxu0
      %v2434 = vpop.f32.mrb[0].mxu0
      %v2435 = vadd.f32 %v2323, %v2434
      %v2436 = vpop.f32.mrb[0].mxu0
      %2437 = vmatprep.mubr.bf16.mxu0 0
      %2438 = vmatmul.mubr.bf16.gmra.mrb[0].mxu0 %v2298
      %v2439 = vpop.f32.mrb[0].mxu0
      %v2440 = vadd.f32 %v2323, %v2439
      %v2441 = vpop.f32.mrb[0].mxu0
      %v2442 = vpop.f32.mrb[0].mxu0
      %v2443 = vadd.f32 %v2323, %v2442
      %v2444 = vpop.f32.mrb[0].mxu0
      %2445 = vmatprep.mubr.bf16.mxu0 0
      %2446 = vmatmul.mubr.bf16.gmra.mrb[0].mxu0 %v2299
      %v2447 = vpop.f32.mrb[0].mxu0
      %v2448 = vadd.f32 %v2323, %v2447
      %v2449 = vpop.f32.mrb[0].mxu0
      %v2450 = vpop.f32.mrb[0].mxu0
      %v2451 = vadd.f32 %v2323, %v2450
      %v2452 = vpop.f32.mrb[0].mxu0
      %2453 = vmatprep.mubr.bf16.mxu0 0
      %2454 = vmatmul.mubr.bf16.gmra.mrb[0].mxu0 %v2300
      %v2455 = vpop.f32.mrb[0].mxu0
      %v2456 = vadd.f32 %v2323, %v2455
      %v2457 = vpop.f32.mrb[0].mxu0
      %v2458 = vpop.f32.mrb[0].mxu0
      %v2459 = vadd.f32 %v2323, %v2458
      %v2460 = vpop.f32.mrb[0].mxu0
      %2461 = vmatprep.mubr.bf16.mxu0 0
      %2462 = vmatmul.mubr.bf16.gmra.mrb[0].mxu0 %v2301
      %v2463 = vpop.f32.mrb[0].mxu0
      %v2464 = vadd.f32 %v2323, %v2463
      %v2465 = vpop.f32.mrb[0].mxu0
      %v2466 = vpop.f32.mrb[0].mxu0
      %v2467 = vadd.f32 %v2323, %v2466
      %v2468 = vpop.f32.mrb[0].mxu0
      %2469 = vdwg.mxu0
      %vm2470 = vcmp.gt.f32.partialorder %v2408, 0.0
      %vm2471 = vcmp.gt.f32.partialorder %v2411, 0.0
      %vm2472 = vcmp.gt.f32.partialorder %v2416, 0.0
      %vm2473 = vcmp.gt.f32.partialorder %v2419, 0.0
      %vm2474 = vcmp.gt.f32.partialorder %v2424, 0.0
      %vm2475 = vcmp.gt.f32.partialorder %v2427, 0.0
      %vm2476 = vcmp.gt.f32.partialorder %v2432, 0.0
      %vm2477 = vcmp.gt.f32.partialorder %v2435, 0.0
      %vm2478 = vcmp.gt.f32.partialorder %v2440, 0.0
      %vm2479 = vcmp.gt.f32.partialorder %v2443, 0.0
      %vm2480 = vcmp.gt.f32.partialorder %v2448, 0.0
      %vm2481 = vcmp.gt.f32.partialorder %v2451, 0.0
      %vm2482 = vcmp.gt.f32.partialorder %v2456, 0.0
      %vm2483 = vcmp.gt.f32.partialorder %v2459, 0.0
      %vm2484 = vcmp.gt.f32.partialorder %v2464, 0.0
      %vm2485 = vcmp.gt.f32.partialorder %v2467, 0.0
      %v2486 = vmul.f32 %v2408, 0.01
      %v2487 = vmul.f32 %v2411, 0.01
      %v2488 = vmul.f32 %v2416, 0.01
      %v2489 = vmul.f32 %v2419, 0.01
      %v2490 = vmul.f32 %v2424, 0.01
      %v2491 = vmul.f32 %v2427, 0.01
      %v2492 = vmul.f32 %v2432, 0.01
      %v2493 = vmul.f32 %v2435, 0.01
      %v2494 = vmul.f32 %v2440, 0.01
      %v2495 = vmul.f32 %v2443, 0.01
      %v2496 = vmul.f32 %v2448, 0.01
      %v2497 = vmul.f32 %v2451, 0.01
      %v2498 = vmul.f32 %v2456, 0.01
      %v2499 = vmul.f32 %v2459, 0.01
      %v2500 = vmul.f32 %v2464, 0.01
      %v2501 = vmul.f32 %v2467, 0.01
      %v2502 = vsel %vm2470, %v2408, %v2486
      %v2503 = vsel %vm2471, %v2411, %v2487
      %v2504 = vsel %vm2472, %v2416, %v2488
      %v2505 = vsel %vm2473, %v2419, %v2489
      %v2506 = vsel %vm2474, %v2424, %v2490
      %v2507 = vsel %vm2475, %v2427, %v2491
      %v2508 = vsel %vm2476, %v2432, %v2492
      %v2509 = vsel %vm2477, %v2435, %v2493
      %v2510 = vsel %vm2478, %v2440, %v2494
      %v2511 = vsel %vm2479, %v2443, %v2495
      %v2512 = vsel %vm2480, %v2448, %v2496
      %v2513 = vsel %vm2481, %v2451, %v2497
      %v2514 = vsel %vm2482, %v2456, %v2498
      %v2515 = vsel %vm2483, %v2459, %v2499
      %v2516 = vsel %vm2484, %v2464, %v2500
      %v2517 = vsel %vm2485, %v2467, %v2501
      %v2518 = vld [vmem:[%s22] sm:$0x1]
      %v2520 = vlaneseq
      %v2521 = vshrl.u32 %v2520, 7
      %v2522 = vsub.s32 0, %v2521
      %v2523 = vrot.slane %v2518, %v2522
      %v2525 = vmul.f32 %v2502, %v2523
      %v2526 = vmul.f32 %v2503, %v2523
      %v2527 = vmul.f32 %v2504, %v2523
      %v2528 = vmul.f32 %v2505, %v2523
      %v2529 = vmul.f32 %v2506, %v2523
      %v2530 = vmul.f32 %v2507, %v2523
      %v2531 = vmul.f32 %v2508, %v2523
      %v2532 = vmul.f32 %v2509, %v2523
      %v2533 = vmul.f32 %v2510, %v2523
      %v2534 = vmul.f32 %v2511, %v2523
      %v2535 = vmul.f32 %v2512, %v2523
      %v2536 = vmul.f32 %v2513, %v2523
      %v2537 = vmul.f32 %v2514, %v2523
      %v2538 = vmul.f32 %v2515, %v2523
      %v2539 = vmul.f32 %v2516, %v2523
      %v2540 = vmul.f32 %v2517, %v2523
      %v2541 = vld [vmem:[%s23] sm:$0x1]
      %v2543 = vlaneseq
      %v2544 = vshrl.u32 %v2543, 7
      %v2545 = vsub.s32 0, %v2544
      %v2546 = vrot.slane %v2541, %v2545
      %v2548 = vadd.f32 %v2525, %v2546
      %v2549 = vadd.f32 %v2526, %v2546
      %v2550 = vadd.f32 %v2527, %v2546
      %v2551 = vadd.f32 %v2528, %v2546
      %v2552 = vadd.f32 %v2529, %v2546
      %v2553 = vadd.f32 %v2530, %v2546
      %v2554 = vadd.f32 %v2531, %v2546
      %v2555 = vadd.f32 %v2532, %v2546
      %v2556 = vadd.f32 %v2533, %v2546
      %v2557 = vadd.f32 %v2534, %v2546
      %v2558 = vadd.f32 %v2535, %v2546
      %v2559 = vadd.f32 %v2536, %v2546
      %v2560 = vadd.f32 %v2537, %v2546
      %v2561 = vadd.f32 %v2538, %v2546
      %v2562 = vadd.f32 %v2539, %v2546
      %v2563 = vadd.f32 %v2540, %v2546
      %v2564 = vpack.c.bf16 %v2549, %v2548
      %v2565 = vpack.c.bf16 %v2551, %v2550
      %v2566 = vpack.c.bf16 %v2553, %v2552
      %v2567 = vpack.c.bf16 %v2555, %v2554
      %v2568 = vpack.c.bf16 %v2557, %v2556
      %v2569 = vpack.c.bf16 %v2559, %v2558
      %v2570 = vpack.c.bf16 %v2561, %v2560
      %v2571 = vpack.c.bf16 %v2563, %v2562
      %v2572 = vld [vmem:[%s24] sm:$0xff]
      %v2573 = vld [vmem:[%s24 + $0x8] sm:$0xff]
      %v2574 = vld [vmem:[%s24 + $0x10] sm:$0xff]
      %v2575 = vld [vmem:[%s24 + $0x18] sm:$0xff]
      %v2576 = vld [vmem:[%s24 + $0x20] sm:$0xff]
      %v2577 = vld [vmem:[%s24 + $0x28] sm:$0xff]
      %v2578 = vld [vmem:[%s24 + $0x30] sm:$0xff]
      %v2579 = vld [vmem:[%s24 + $0x38] sm:$0xff]
      %v2580 = vld [vmem:[%s24 + $0x40] sm:$0xff]
      %v2581 = vld [vmem:[%s24 + $0x48] sm:$0xff]
      %v2582 = vld [vmem:[%s24 + $0x50] sm:$0xff]
      %v2583 = vld [vmem:[%s24 + $0x58] sm:$0xff]
      %v2584 = vld [vmem:[%s24 + $0x60] sm:$0xff]
      %v2585 = vld [vmem:[%s24 + $0x68] sm:$0xff]
      %v2586 = vld [vmem:[%s24 + $0x70] sm:$0xff]
      %v2587 = vld [vmem:[%s24 + $0x78] sm:$0xff]
      %v2588 = vld [vmem:[%s25] sm:$0x3]
      %v2590 = vlaneseq
      %v2591 = vshrl.u32 %v2590, 7
      %v2592 = vsub.s32 0, %v2591
      %v2593 = vrot.slane %v2588, %v2592
      %v2594 = vlaneseq
      %v2595 = vshrl.u32 %v2594, 7
      %v2596 = vsub.s32 1, %v2595
      %v2597 = vrot.slane %v2588, %v2596
      %v2616 = vunpack.c.l.b16 %v2572
      %v2617 = vunpack.c.h.b16 %v2572
      %v2618 = vunpack.c.l.b16 %v2573
      %v2619 = vunpack.c.h.b16 %v2573
      %v2620 = vunpack.c.l.b16 %v2574
      %v2621 = vunpack.c.h.b16 %v2574
      %v2622 = vunpack.c.l.b16 %v2575
      %v2623 = vunpack.c.h.b16 %v2575
      %v2624 = vunpack.c.l.b16 %v2576
      %v2625 = vunpack.c.h.b16 %v2576
      %v2626 = vunpack.c.l.b16 %v2577
      %v2627 = vunpack.c.h.b16 %v2577
      %v2628 = vunpack.c.l.b16 %v2578
      %v2629 = vunpack.c.h.b16 %v2578
      %v2630 = vunpack.c.l.b16 %v2579
      %v2631 = vunpack.c.h.b16 %v2579
      %v2632 = vunpack.c.l.b16 %v2580
      %v2633 = vunpack.c.h.b16 %v2580
      %v2634 = vunpack.c.l.b16 %v2581
      %v2635 = vunpack.c.h.b16 %v2581
      %v2636 = vunpack.c.l.b16 %v2582
      %v2637 = vunpack.c.h.b16 %v2582
      %v2638 = vunpack.c.l.b16 %v2583
      %v2639 = vunpack.c.h.b16 %v2583
      %v2640 = vunpack.c.l.b16 %v2584
      %v2641 = vunpack.c.h.b16 %v2584
      %v2642 = vunpack.c.l.b16 %v2585
      %v2643 = vunpack.c.h.b16 %v2585
      %v2644 = vunpack.c.l.b16 %v2586
      %v2645 = vunpack.c.h.b16 %v2586
      %v2646 = vunpack.c.l.b16 %v2587
      %v2647 = vunpack.c.h.b16 %v2587
      %v2648 = vpack.c.b16 %v2618, %v2616
      %v2649 = vpack.c.b16 %v2619, %v2617
      %v2650 = vpack.c.b16 %v2622, %v2620
      %v2651 = vpack.c.b16 %v2623, %v2621
      %v2652 = vpack.c.b16 %v2626, %v2624
      %v2653 = vpack.c.b16 %v2627, %v2625
      %v2654 = vpack.c.b16 %v2630, %v2628
      %v2655 = vpack.c.b16 %v2631, %v2629
      %v2656 = vpack.c.b16 %v2634, %v2632
      %v2657 = vpack.c.b16 %v2635, %v2633
      %v2658 = vpack.c.b16 %v2638, %v2636
      %v2659 = vpack.c.b16 %v2639, %v2637
      %v2660 = vpack.c.b16 %v2642, %v2640
      %v2661 = vpack.c.b16 %v2643, %v2641
      %v2662 = vpack.c.b16 %v2646, %v2644
      %v2663 = vpack.c.b16 %v2647, %v2645
      %2680 = vmatprep.subr.bf16.mxu0 %v2649
      %2681 = vmatpush1.bf16.msra.mxu0 %v2648
      %2682 = vmatprep.subr.bf16.mxu0 %v2651
      %2683 = vmatpush1.bf16.msra.mxu0 %v2650
      %2684 = vmatprep.subr.bf16.mxu0 %v2653
      %2685 = vmatpush1.bf16.msra.mxu0 %v2652
      %2686 = vmatprep.subr.bf16.mxu0 %v2655
      %2687 = vmatpush1.bf16.msra.mxu0 %v2654
      %2688 = vmatprep.subr.bf16.mxu0 %v2657
      %2689 = vmatpush1.bf16.msra.mxu0 %v2656
      %2690 = vmatprep.subr.bf16.mxu0 %v2659
      %2691 = vmatpush1.bf16.msra.mxu0 %v2658
      %2692 = vmatprep.subr.bf16.mxu0 %v2661
      %2693 = vmatpush1.bf16.msra.mxu0 %v2660
      %2694 = vmatprep.subr.bf16.mxu0 %v2663
      %2695 = vmatpush1.bf16.msra.mxu0 %v2662
      %2696 = vmatprep.subr.bf16.mxu0 0
      %2697 = vmatpush1.bf16.msra.mxu0 0
      %2698 = vmatprep.subr.bf16.mxu0 0
      %2699 = vmatpush1.bf16.msra.mxu0 0
      %2700 = vmatprep.subr.bf16.mxu0 0
      %2701 = vmatpush1.bf16.msra.mxu0 0
      %2702 = vmatprep.subr.bf16.mxu0 0
      %2703 = vmatpush1.bf16.msra.mxu0 0
      %2704 = vmatprep.subr.bf16.mxu0 0
      %2705 = vmatpush1.bf16.msra.mxu0 0
      %2706 = vmatprep.subr.bf16.mxu0 0
      %2707 = vmatpush1.bf16.msra.mxu0 0
      %2708 = vmatprep.subr.bf16.mxu0 0
      %2709 = vmatpush1.bf16.msra.mxu0 0
      %2710 = vmatprep.subr.bf16.mxu0 0
      %2711 = vmatpush1.bf16.msra.mxu0 0
      %2712 = vmatprep.mubr.bf16.mxu0 0
      %2713 = vmatmul.mubr.bf16.gmra.mrb[0].mxu0 %v2564
      %v2714 = vpop.f32.mrb[0].mxu0
      %v2715 = vadd.f32 %v2593, %v2714
      %v2716 = vpop.f32.mrb[0].mxu0
      %v2717 = vadd.f32 %v2597, %v2716
      %v2718 = vpop.f32.mrb[0].mxu0
      %v2719 = vadd.f32 %v2593, %v2718
      %v2720 = vpop.f32.mrb[0].mxu0
      %v2721 = vadd.f32 %v2597, %v2720
      %2722 = vmatprep.mubr.bf16.mxu0 0
      %2723 = vmatmul.mubr.bf16.gmra.mrb[0].mxu0 %v2565
      %v2724 = vpop.f32.mrb[0].mxu0
      %v2725 = vadd.f32 %v2593, %v2724
      %v2726 = vpop.f32.mrb[0].mxu0
      %v2727 = vadd.f32 %v2597, %v2726
      %v2728 = vpop.f32.mrb[0].mxu0
      %v2729 = vadd.f32 %v2593, %v2728
      %v2730 = vpop.f32.mrb[0].mxu0
      %v2731 = vadd.f32 %v2597, %v2730
      %2732 = vmatprep.mubr.bf16.mxu0 0
      %2733 = vmatmul.mubr.bf16.gmra.mrb[0].mxu0 %v2566
      %v2734 = vpop.f32.mrb[0].mxu0
      %v2735 = vadd.f32 %v2593, %v2734
      %v2736 = vpop.f32.mrb[0].mxu0
      %v2737 = vadd.f32 %v2597, %v2736
      %v2738 = vpop.f32.mrb[0].mxu0
      %v2739 = vadd.f32 %v2593, %v2738
      %v2740 = vpop.f32.mrb[0].mxu0
      %v2741 = vadd.f32 %v2597, %v2740
      %2742 = vmatprep.mubr.bf16.mxu0 0
      %2743 = vmatmul.mubr.bf16.gmra.mrb[0].mxu0 %v2567
      %v2744 = vpop.f32.mrb[0].mxu0
      %v2745 = vadd.f32 %v2593, %v2744
      %v2746 = vpop.f32.mrb[0].mxu0
      %v2747 = vadd.f32 %v2597, %v2746
      %v2748 = vpop.f32.mrb[0].mxu0
      %v2749 = vadd.f32 %v2593, %v2748
      %v2750 = vpop.f32.mrb[0].mxu0
      %v2751 = vadd.f32 %v2597, %v2750
      %2752 = vmatprep.mubr.bf16.mxu0 0
      %2753 = vmatmul.mubr.bf16.gmra.mrb[0].mxu0 %v2568
      %v2754 = vpop.f32.mrb[0].mxu0
      %v2755 = vadd.f32 %v2593, %v2754
      %v2756 = vpop.f32.mrb[0].mxu0
      %v2757 = vadd.f32 %v2597, %v2756
      %v2758 = vpop.f32.mrb[0].mxu0
      %v2759 = vadd.f32 %v2593, %v2758
      %v2760 = vpop.f32.mrb[0].mxu0
      %v2761 = vadd.f32 %v2597, %v2760
      %2762 = vmatprep.mubr.bf16.mxu0 0
      %2763 = vmatmul.mubr.bf16.gmra.mrb[0].mxu0 %v2569
      %v2764 = vpop.f32.mrb[0].mxu0
      %v2765 = vadd.f32 %v2593, %v2764
      %v2766 = vpop.f32.mrb[0].mxu0
      %v2767 = vadd.f32 %v2597, %v2766
      %v2768 = vpop.f32.mrb[0].mxu0
      %v2769 = vadd.f32 %v2593, %v2768
      %v2770 = vpop.f32.mrb[0].mxu0
      %v2771 = vadd.f32 %v2597, %v2770
      %2772 = vmatprep.mubr.bf16.mxu0 0
      %2773 = vmatmul.mubr.bf16.gmra.mrb[0].mxu0 %v2570
      %v2774 = vpop.f32.mrb[0].mxu0
      %v2775 = vadd.f32 %v2593, %v2774
      %v2776 = vpop.f32.mrb[0].mxu0
      %v2777 = vadd.f32 %v2597, %v2776
      %v2778 = vpop.f32.mrb[0].mxu0
      %v2779 = vadd.f32 %v2593, %v2778
      %v2780 = vpop.f32.mrb[0].mxu0
      %v2781 = vadd.f32 %v2597, %v2780
      %2782 = vmatprep.mubr.bf16.mxu0 0
      %2783 = vmatmul.mubr.bf16.gmra.mrb[0].mxu0 %v2571
      %v2784 = vpop.f32.mrb[0].mxu0
      %v2785 = vadd.f32 %v2593, %v2784
      %v2786 = vpop.f32.mrb[0].mxu0
      %v2787 = vadd.f32 %v2597, %v2786
      %v2788 = vpop.f32.mrb[0].mxu0
      %v2789 = vadd.f32 %v2593, %v2788
      %v2790 = vpop.f32.mrb[0].mxu0
      %v2791 = vadd.f32 %v2597, %v2790
      %2792 = vdwg.mxu0
      %2793 = vst [vmem:[%s899] sm:$0xff] %v2715
      %2794 = vst [vmem:[%s899 + $0x8] sm:$0xff] %v2717
      %2795 = vst [vmem:[%s899 + $0x10] sm:$0xff] %v2719
      %2796 = vst [vmem:[%s899 + $0x18] sm:$0xff] %v2721
      %2797 = vst [vmem:[%s899 + $0x20] sm:$0xff] %v2725
      %2798 = vst [vmem:[%s899 + $0x28] sm:$0xff] %v2727
      %2799 = vst [vmem:[%s899 + $0x30] sm:$0xff] %v2729
      %2800 = vst [vmem:[%s899 + $0x38] sm:$0xff] %v2731
      %2801 = vst [vmem:[%s899 + $0x40] sm:$0xff] %v2735
      %2802 = vst [vmem:[%s899 + $0x48] sm:$0xff] %v2737
      %2803 = vst [vmem:[%s899 + $0x50] sm:$0xff] %v2739
      %2804 = vst [vmem:[%s899 + $0x58] sm:$0xff] %v2741
      %2805 = vst [vmem:[%s899 + $0x60] sm:$0xff] %v2745
      %2806 = vst [vmem:[%s899 + $0x68] sm:$0xff] %v2747
      %2807 = vst [vmem:[%s899 + $0x70] sm:$0xff] %v2749
      %2808 = vst [vmem:[%s899 + $0x78] sm:$0xff] %v2751
      %2809 = vst [vmem:[%s899 + $0x80] sm:$0xff] %v2755
      %2810 = vst [vmem:[%s899 + $0x88] sm:$0xff] %v2757
      %2811 = vst [vmem:[%s899 + $0x90] sm:$0xff] %v2759
      %2812 = vst [vmem:[%s899 + $0x98] sm:$0xff] %v2761
      %2813 = vst [vmem:[%s899 + $0xa0] sm:$0xff] %v2765
      %2814 = vst [vmem:[%s899 + $0xa8] sm:$0xff] %v2767
      %2815 = vst [vmem:[%s899 + $0xb0] sm:$0xff] %v2769
      %2816 = vst [vmem:[%s899 + $0xb8] sm:$0xff] %v2771
      %2817 = vst [vmem:[%s899 + $0xc0] sm:$0xff] %v2775
      %2818 = vst [vmem:[%s899 + $0xc8] sm:$0xff] %v2777
      %2819 = vst [vmem:[%s899 + $0xd0] sm:$0xff] %v2779
      %2820 = vst [vmem:[%s899 + $0xd8] sm:$0xff] %v2781
      %2821 = vst [vmem:[%s899 + $0xe0] sm:$0xff] %v2785
      %2822 = vst [vmem:[%s899 + $0xe8] sm:$0xff] %v2787
      %2823 = vst [vmem:[%s899 + $0xf0] sm:$0xff] %v2789
      %2824 = vst [vmem:[%s899 + $0xf8] sm:$0xff] %v2791
      %s2825 = smul.u32 16, %s39
      %p2826 = scmp.lt.s32.totalorder %s2825, 31
      %s2827 = scalar_select %p2826, %s2825, 31
      %s2828 = smul.addr %s2827, 2
      %s2829 = smul.addr %s2828, 8
      %s2830 = scalar_lea.vmem %s26, %s2829
      %s2831 = smul.u32 16, %s39
      %p2832 = scmp.lt.s32.totalorder %s2831, 31
      %s2833 = scalar_select %p2832, %s2831, 31
      %s2834 = smul.addr %s2833, 8
      %s2835 = scalar_lea.vmem %s27, %s2834
      // Predicated region
      $region125: #{vae_forward.1} parent=123 // pred_check
        %p2836 = pneg %p623
      $region126: #{vae_forward.1} parent=123 // pred_check_branch
        %2838 = sbr.rel (%p2836) target = $region128
      $region127: #{vae_forward.1} parent=123 // pred_region
        %s2839 = smul.u32 16, %s39
      $region128: #{vae_forward.1} parent=123 // pred_fallthru
        _
      // Predicated region
      $region129: #{vae_forward.1} parent=123 // pred_check
        %p2840 = pneg %p649
      $region130: #{vae_forward.1} parent=123 // pred_check_branch
        %2842 = sbr.rel (%p2840) target = $region132
      $region131: #{vae_forward.1} parent=123 // pred_region
        %s2843 = smul.u32 16, %s39
      $region132: #{vae_forward.1} parent=123 // pred_fallthru
        _
    $region124: #{vae_forward.1} parent=5 // pred_fallthru
      _
    %p2844 = scmp.le.s32.totalorder 2, %s34
    // Predicated region
    $region133: #{vae_forward.1} parent=5 // pred_check
      %p2845 = pneg %p2844
    $region134: #{vae_forward.1} parent=5 // pred_check_branch
      %2847 = sbr.rel (%p2845) target = $region136
    $region135: #{vae_forward.1} parent=5 // pred_region
      %s2848 = ssub.s32 %s34, 2
      // Predicated region
      $region137: #{vae_forward.1} parent=135 // pred_check
        %p2849 = pneg %p629
      $region138: #{vae_forward.1} parent=135 // pred_check_branch
        %2851 = sbr.rel (%p2849) target = $region140
      $region139: #{vae_forward.1} parent=135 // pred_region
        %s2852 = smul.u32 16, %s40
        %p2853 = scmp.lt.s32.totalorder %s2852, 31
        %s2854 = scalar_select %p2853, %s2852, 31
        %s2855 = smul.addr %s2854, 2
        %s2856 = smul.addr %s2855, 8
        %s2857 = scalar_lea.vmem %s26, %s2856
      $region140: #{vae_forward.1} parent=135 // pred_fallthru
        _
      // Predicated region
      $region141: #{vae_forward.1} parent=135 // pred_check
        %p2858 = pneg %p655
      $region142: #{vae_forward.1} parent=135 // pred_check_branch
        %2860 = sbr.rel (%p2858) target = $region144
      $region143: #{vae_forward.1} parent=135 // pred_region
        %s2861 = smul.u32 16, %s40
        %p2862 = scmp.lt.s32.totalorder %s2861, 31
        %s2863 = scalar_select %p2862, %s2861, 31
        %s2864 = smul.addr %s2863, 8
        %s2865 = scalar_lea.vmem %s27, %s2864
      $region144: #{vae_forward.1} parent=135 // pred_fallthru
        _
    $region136: #{vae_forward.1} parent=5 // pred_fallthru
      _
  $region6: #{vae_forward.1} parent=0 // loop_footer
    %s38 = sadd.s32 1, %s34
  $region7: #{vae_forward.1} parent=0 // loop_footer_branch
    %33 = sbr.rel target = $region3
  $region8: #{vae_forward.1} parent=0 // loop_exit
    _

</llo_original>
